<compile_context>
chip_gen: v6e
topology: v6e:2x2x1
jax: 0.10.0
libtpu: 0.0.40
codegen_flags: <defaults>
</compile_context>

<pallas_src>
import functools

import jax
import jax.numpy as jnp
from jax import lax
from jax.experimental import pallas as pl
from jax.experimental.pallas import tpu as pltpu


def _round_up(n, m):
    return ((n + m - 1) // m) * m


def _elu(x):
    return jnp.where(x > 0, x, jnp.exp(jnp.minimum(x, 0.0)) - 1.0)


def _pick_tile_b(B):
    """Batch tile: lanes of every array. Small B -> one tile; large B ->
    128-multiple tiles (lane dense), capped at 512, aiming for >=8 steps."""
    B8 = _round_up(max(B, 1), 8)
    if B8 <= 256:
        return B8
    tgt = _round_up((B8 + 7) // 8, 128)
    return int(max(128, min(512, tgt)))


# --------------------------------------------------------------------------
# Fused kernel: one grid step = one tile of tile_b samples (batch in lanes).
# --------------------------------------------------------------------------
def _eegnet_kernel(x_ref, a1_ref, b1_ref, a2_ref, b2_ref, a3_ref, b3_ref,
                   cw_ref, lab_ref, probs_ref, loss_ref, *,
                   F2, T1, p1, num_classes, label_smoothing):
    n = x_ref.shape[1]                                   # lanes = batch tile

    # ---- block 1: freq conv + BN1 + spatial depthwise conv + BN2 folded into
    #      one Toeplitz matrix -> a single lane-dense MXU matmul, then ELU.
    h1 = jnp.dot(a1_ref[...], x_ref[...],
                 preferred_element_type=jnp.float32)     # (T1*p1*F2, n) f32
    h1 = _elu(h1 + b1_ref[...])

    # ---- AvgPool(p1): rows are time-major (t, o), so pooling is a sum of
    #      layout-preserving leading-dim slices (no lane shuffles, no stores).
    h1r = h1.reshape(T1, p1, F2, n)
    g1 = h1r[:, 0]
    for j in range(1, p1):
        g1 = g1 + h1r[:, j]
    g1 = (g1 * (1.0 / p1)).reshape(T1 * F2, n)

    # ---- block 2: separable conv (depthwise-time x pointwise) + BN3 folded
    #      into one matrix -> single matmul, then ELU.
    h2 = jnp.dot(a2_ref[...], g1.astype(a2_ref.dtype),
                 preferred_element_type=jnp.float32)     # (T1*F2, n)
    h2 = _elu(h2 + b2_ref[...])

    # ---- head: AvgPool(p2) + channel-major flatten + Linear folded into A3.
    logits = jnp.dot(a3_ref[...], h2.astype(a3_ref.dtype),
                     preferred_element_type=jnp.float32) + b3_ref[...]  # (8,n)

    # ---- softmax over the (sublane) class axis; padded class rows masked.
    ncp = logits.shape[0]
    row = lax.broadcasted_iota(jnp.int32, (ncp, n), 0)
    valid = row < num_classes
    neg = jnp.where(valid, 0.0, -1e30)
    z = logits + neg
    m = jnp.max(z, axis=0, keepdims=True)
    e = jnp.exp(z - m)
    probs = e * pl.reciprocal(jnp.sum(e, axis=0, keepdims=True), approx=True)
    probs_ref[...] = probs                               # 32 B / sample

    # ---- CrossEntropyLoss applied to the softmax output (PyTorch parity:
    #      double softmax); reduced over the whole tile in-kernel.
    z2 = probs + neg
    m2 = jnp.max(z2, axis=0, keepdims=True)
    lse = jnp.log(jnp.sum(jnp.exp(z2 - m2), axis=0, keepdims=True)) + m2
    logp = z2 - lse
    oh = (row == lab_ref[...]).astype(jnp.float32)       # label -1 -> all zero
    per_w = jnp.sum(oh * cw_ref[...], axis=0, keepdims=True)
    nll = -jnp.sum(oh * logp, axis=0, keepdims=True)
    smooth = -jnp.sum(jnp.where(valid, logp, 0.0), axis=0,
                      keepdims=True) / num_classes
    per_loss = (1.0 - label_smoothing) * nll + label_smoothing * smooth
    numer = jnp.sum(per_w * per_loss, keepdims=True)     # (1, 1)
    denom = jnp.sum(per_w, keepdims=True)                # (1, 1)

    ri = lax.broadcasted_iota(jnp.int32, (8, 128), 0)
    ci = lax.broadcasted_iota(jnp.int32, (8, 128), 1)
    loss_ref[...] = (jnp.where((ri == 0) & (ci == 0), numer, 0.0)
                     + jnp.where((ri == 0) & (ci == 1), denom, 0.0))


def _run_fused(x2d, a1, b1f, a2, b2f, a3, b3, cwp, lab, *,
               F2, T1, p1, num_classes, label_smoothing, tile_b):
    CT, B_pad = x2d.shape
    G = B_pad // tile_b
    ncp = a3.shape[0]
    kern = functools.partial(
        _eegnet_kernel, F2=F2, T1=T1, p1=p1, num_classes=num_classes,
        label_smoothing=label_smoothing)
    return pl.pallas_call(
        kern,
        out_shape=(jax.ShapeDtypeStruct((ncp, B_pad), jnp.float32),
                   jax.ShapeDtypeStruct((G * 8, 128), jnp.float32)),
        grid=(G,),
        in_specs=[
            pl.BlockSpec((CT, tile_b), lambda g: (0, g)),    # x (batch lanes)
            pl.BlockSpec(a1.shape, lambda g: (0, 0)),        # block1 matrix
            pl.BlockSpec(b1f.shape, lambda g: (0, 0)),       # block1 bias
            pl.BlockSpec(a2.shape, lambda g: (0, 0)),        # block2 matrix
            pl.BlockSpec(b2f.shape, lambda g: (0, 0)),       # block2 bias
            pl.BlockSpec(a3.shape, lambda g: (0, 0)),        # head matrix
            pl.BlockSpec(b3.shape, lambda g: (0, 0)),        # fc bias (padded)
            pl.BlockSpec(cwp.shape, lambda g: (0, 0)),       # class weights
            pl.BlockSpec((1, tile_b), lambda g: (0, g)),     # labels
        ],
        out_specs=(pl.BlockSpec((ncp, tile_b), lambda g: (0, g)),
                   pl.BlockSpec((8, 128), lambda g: (g, 0))),
        compiler_params=pltpu.CompilerParams(
            dimension_semantics=("parallel",),
            vmem_limit_bytes=32 * 1024 * 1024),
    )(x2d, a1, b1f, a2, b2f, a3, b3, cwp, lab)


# --------------------------------------------------------------------------
# Host-side glue: BN folding, Toeplitz weight construction, batch layout.
# --------------------------------------------------------------------------
def eegnet_forward(x, labels, params, cfg):
    F1, D, p1, p2 = cfg["num_kernels"], cfg["D"], cfg["p1"], cfg["p2"]
    C, T, NC = cfg["node_size"], cfg["time_series_size"], cfg["num_classes"]
    K1 = cfg["frequency"] // 2
    K2 = cfg["sep_kernel"]
    F2 = F1 * D
    T1 = T // p1
    T2 = T1 // p2
    Tc = T1 * p1                      # time steps actually consumed by pool1
    NCP = _round_up(max(NC, 1), 8)
    eps = 1e-5
    pad1 = (K1 - 1) // 2
    pad2 = (K2 - 1) // 2
    mm_dtype = jnp.bfloat16           # matmul operands only; accum/elwise f32

    def bn_fold(gamma, beta, rm, rv):                 # eval-mode BN fold
        s = gamma / jnp.sqrt(rv + eps)
        return s, beta - rm * s

    bn1s, bn1b = bn_fold(*params["bn1"])              # (F1,)
    bn2s, bn2b = bn_fold(*params["bn2"])              # (F2,)
    bn3s, bn3b = bn_fold(*params["bn3"])              # (F2,)

    # ---- block 1: Toeplitz matrix A1[(t,o),(c,ti)] with BN1/BN2 folded.
    # TODO(synk): convs are assumed bias=False; add conv biases here if not.
    f_of_o = jnp.arange(F2) // D
    wf = params["w_freq"][f_of_o]                     # (F2, K1)
    ws = params["w_spat"]                             # (F2, C)
    w1 = (bn2s * bn1s[f_of_o])[:, None, None] * wf[:, :, None] * ws[:, None, :]
    t_out = jnp.arange(Tc)
    t_in = jnp.arange(T)
    k = t_in[None, :] - t_out[:, None] + pad1                    # (Tc, T)
    valid_k = (k >= 0) & (k < K1)
    kc = jnp.clip(k, 0, K1 - 1)
    w1_k = jnp.transpose(w1, (1, 0, 2))                          # (K1, F2, C)
    a1_4d = jnp.where(valid_k[:, :, None, None], w1_k[kc], 0.0)  # (Tc,T,F2,C)
    A1 = jnp.transpose(a1_4d, (0, 2, 3, 1)).reshape(Tc * F2, C * T)
    b1_vec = bn2s * bn1b[f_of_o] * jnp.sum(ws, axis=1) + bn2b    # (F2,)
    b1f = jnp.tile(b1_vec, (Tc,)).reshape(Tc * F2, 1)

    # ---- block 2: separable conv (depthwise-time x pointwise) + BN3 folded.
    wd = params["w_sep_dw"]                           # (F2, K2)
    wp = params["w_sep_pw"]                           # (F2_out, F2_in)
    m_out = jnp.arange(T1)
    m_in = jnp.arange(T1)
    k2 = m_in[None, :] - m_out[:, None] + pad2
    valid_k2 = (k2 >= 0) & (k2 < K2)
    k2c = jnp.clip(k2, 0, K2 - 1)
    wd_g = jnp.where(valid_k2[:, :, None], wd.T[k2c], 0.0)       # (T1,T1,F2i)
    core = bn3s[:, None] * wp                                    # (F2o, F2i)
    a2_4d = core[None, None, :, :] * wd_g[:, :, None, :]         # (T1,T1,F2o,F2i)
    A2 = jnp.transpose(a2_4d, (0, 2, 1, 3)).reshape(T1 * F2, T1 * F2)
    b2f = jnp.tile(bn3b, (T1,)).reshape(T1 * F2, 1)

    # ---- head: AvgPool(p2) + channel-major flatten + Linear folded into A3.
    fc_w = params["fc_w"]                             # (NC, F2*T2)
    m_idx = jnp.arange(T1)
    o_idx = jnp.arange(F2)
    feat_col = o_idx[None, :] * T2 + jnp.minimum(m_idx[:, None] // p2, T2 - 1)
    a3_nc = fc_w[:, feat_col] / p2                                # (NC,T1,F2)
    a3_nc = jnp.where((m_idx[:, None] < T2 * p2)[None, :, :], a3_nc, 0.0)
    A3 = jnp.zeros((NCP, T1 * F2), jnp.float32).at[:NC].set(
        a3_nc.reshape(NC, T1 * F2))
    b3 = jnp.zeros((NCP, 1), jnp.float32).at[:NC, 0].set(params["fc_b"])
    cwp = jnp.zeros((NCP, 1), jnp.float32).at[:NC, 0].set(
        params["class_weight"])

    # ---- inputs: batch goes to the lane dim; rows are (c, t).
    B = x.shape[0]
    tile_b = _pick_tile_b(B)
    B_pad = _round_up(B, tile_b)
    x2d = jnp.transpose(x.astype(jnp.float32), (1, 2, 0)).reshape(C * T, B)
    if B_pad != B:
        x2d = jnp.pad(x2d, ((0, 0), (0, B_pad - B)))
    lab = jnp.full((1, B_pad), -1, jnp.int32).at[0, :B].set(
        labels.astype(jnp.int32))                     # -1 lanes contribute 0

    # TODO(synk): nn.Dropout (in the conv blocks and before the Linear) is
    # eval-mode identity here; train-mode stochastic masking is not implemented.
    probs, loss_parts = _run_fused(
        x2d.astype(mm_dtype), A1.astype(mm_dtype), b1f,
        A2.astype(mm_dtype), b2f, A3.astype(mm_dtype), b3, cwp, lab,
        F2=F2, T1=T1, p1=p1, num_classes=NC,
        label_smoothing=cfg["label_smoothing"], tile_b=tile_b)

    logits = probs[:NC, :B].T                         # (B, NC) softmax output
    loss = jnp.sum(loss_parts[:, 0]) / jnp.sum(loss_parts[:, 1])
    return logits, loss


def init_params(key, cfg):
    F1, D = cfg["num_kernels"], cfg["D"]
    C, T, NC = cfg["node_size"], cfg["time_series_size"], cfg["num_classes"]
    K1 = cfg["frequency"] // 2
    K2 = cfg["sep_kernel"]
    F2 = F1 * D
    hidden = F2 * (T // cfg["p1"] // cfg["p2"])
    ks = jax.random.split(key, 6)
    p = {
        "w_freq": 0.1 * jax.random.normal(ks[0], (F1, K1), jnp.float32),
        "w_spat": 0.1 * jax.random.normal(ks[1], (F2, C), jnp.float32),
        "w_sep_dw": 0.1 * jax.random.normal(ks[2], (F2, K2), jnp.float32),
        "w_sep_pw": 0.1 * jax.random.normal(ks[3], (F2, F2), jnp.float32),
        "fc_w": 0.1 * jax.random.normal(ks[4], (NC, hidden), jnp.float32),
        "fc_b": 0.1 * jax.random.normal(ks[5], (NC,), jnp.float32),
        "class_weight": jnp.ones((NC,), jnp.float32),
    }
    # BatchNorm at PyTorch init: gamma=1, beta=0, running_mean=0, running_var=1
    for name, n in (("bn1", F1), ("bn2", F2), ("bn3", F2)):
        p[name] = (jnp.ones((n,), jnp.float32), jnp.zeros((n,), jnp.float32),
                   jnp.zeros((n,), jnp.float32), jnp.ones((n,), jnp.float32))
    return p


if __name__ == "__main__":
    cfg = dict(node_size=4, time_series_size=64, num_classes=3, frequency=8,
               num_kernels=8, D=2, p1=4, p2=8, sep_kernel=8,
               label_smoothing=0.0, dropout=0.5)   # dropout: eval => identity
    key = jax.random.PRNGKey(0)
    kx, kl, kp = jax.random.split(key, 3)
    x = jax.random.normal(
        kx, (2, cfg["node_size"], cfg["time_series_size"]), jnp.float32)
    labels = jax.random.randint(kl, (2,), 0, cfg["num_classes"])
    params = init_params(kp, cfg)

    fwd = jax.jit(lambda xx, yy, pp: eegnet_forward(xx, yy, pp, cfg))
    logits, loss = fwd(x, labels, params)
    jax.block_until_ready((logits, loss))
    print("KERNEL_OK")
</pallas_src>

<mosaic_0001>
module attributes {stable_mosaic.version = 11 : i64} {
  func.func @_eegnet_kernel(%arg0: i32, %arg1: memref<256x8xbf16, #tpu.memory_space<vmem>>, %arg2: memref<1024x256xbf16, #tpu.memory_space<vmem>>, %arg3: memref<1024x1xf32, #tpu.memory_space<vmem>>, %arg4: memref<256x256xbf16, #tpu.memory_space<vmem>>, %arg5: memref<256x1xf32, #tpu.memory_space<vmem>>, %arg6: memref<8x256xbf16, #tpu.memory_space<vmem>>, %arg7: memref<8x1xf32, #tpu.memory_space<vmem>>, %arg8: memref<8x1xf32, #tpu.memory_space<vmem>>, %arg9: memref<1x8xi32, #tpu.memory_space<vmem>>, %arg10: memref<8x8xf32, #tpu.memory_space<vmem>>, %arg11: memref<8x128xf32, #tpu.memory_space<vmem>>) attributes {dimension_semantics = [#tpu.dimension_semantics<parallel>], iteration_bounds = array<i64: 1>, scalar_prefetch = 0 : i64, scratch_operands = 0 : i64, tpu.core_type = #tpu.core_type<tc>, window_params = [{transform_indices = @transform_0, window_bounds = array<i64: 256, 8>}, {pipeline_mode = #tpu.pipeline_mode<synchronous>, transform_indices = @transform_1, window_bounds = array<i64: 1024, 256>}, {pipeline_mode = #tpu.pipeline_mode<synchronous>, transform_indices = @transform_2, window_bounds = array<i64: 1024, 1>}, {pipeline_mode = #tpu.pipeline_mode<synchronous>, transform_indices = @transform_3, window_bounds = array<i64: 256, 256>}, {pipeline_mode = #tpu.pipeline_mode<synchronous>, transform_indices = @transform_4, window_bounds = array<i64: 256, 1>}, {pipeline_mode = #tpu.pipeline_mode<synchronous>, transform_indices = @transform_5, window_bounds = array<i64: 8, 256>}, {pipeline_mode = #tpu.pipeline_mode<synchronous>, transform_indices = @transform_6, window_bounds = array<i64: 8, 1>}, {pipeline_mode = #tpu.pipeline_mode<synchronous>, transform_indices = @transform_7, window_bounds = array<i64: 8, 1>}, {transform_indices = @transform_8, window_bounds = array<i64: 1, 8>}, {transform_indices = @transform_9, window_bounds = array<i64: 8, 8>}, {transform_indices = @transform_10, window_bounds = array<i64: 8, 128>}]} {
    %c0 = arith.constant 0 : index
    %c0_0 = arith.constant 0 : index
    %0 = vector.load %arg2[%c0, %c0_0] : memref<1024x256xbf16, #tpu.memory_space<vmem>>, vector<1024x256xbf16>
    %c0_1 = arith.constant 0 : index
    %c0_2 = arith.constant 0 : index
    %1 = vector.load %arg1[%c0_1, %c0_2] : memref<256x8xbf16, #tpu.memory_space<vmem>>, vector<256x8xbf16>
    %cst = arith.constant dense<0.000000e+00> : vector<1024x8xf32>
    %2 = tpu.matmul %0, %1, %cst {dimension_numbers = #tpu.dot_dimension_numbers<[1], [0], [0], [1], [0, 0, 1, 1], [], []>} : vector<1024x256xbf16>, vector<256x8xbf16>, vector<1024x8xf32> -> vector<1024x8xf32>
    %c0_3 = arith.constant 0 : index
    %c0_4 = arith.constant 0 : index
    %3 = vector.load %arg3[%c0_3, %c0_4] : memref<1024x1xf32, #tpu.memory_space<vmem>>, vector<1024x1xf32>
    %4 = vector.broadcast %3 : vector<1024x1xf32> to vector<1024x8xf32>
    %5 = arith.addf %2, %4 : vector<1024x8xf32>
    %cst_5 = arith.constant 0.000000e+00 : f32
    %6 = vector.broadcast %cst_5 : f32 to vector<1024x8xf32>
    %7 = arith.cmpf ogt, %5, %6 : vector<1024x8xf32>
    %cst_6 = arith.constant 0.000000e+00 : f32
    %8 = vector.broadcast %cst_6 : f32 to vector<1024x8xf32>
    %9 = arith.minimumf %5, %8 : vector<1024x8xf32>
    %10 = math.exp %9 : vector<1024x8xf32>
    %cst_7 = arith.constant 1.000000e+00 : f32
    %11 = vector.broadcast %cst_7 : f32 to vector<1024x8xf32>
    %12 = arith.subf %10, %11 : vector<1024x8xf32>
    %13 = arith.select %7, %5, %12 : vector<1024x8xi1>, vector<1024x8xf32>
    %14 = vector.shape_cast %13 : vector<1024x8xf32> to vector<16x4x16x8xf32>
    %15 = vector.extract_strided_slice %14 {offsets = [0, 0, 0, 0], sizes = [16, 1, 16, 8], strides = [1, 1, 1, 1]} : vector<16x4x16x8xf32> to vector<16x1x16x8xf32>
    %16 = vector.shape_cast %15 : vector<16x1x16x8xf32> to vector<16x16x8xf32>
    %17 = vector.extract_strided_slice %14 {offsets = [0, 1, 0, 0], sizes = [16, 1, 16, 8], strides = [1, 1, 1, 1]} : vector<16x4x16x8xf32> to vector<16x1x16x8xf32>
    %18 = vector.shape_cast %17 : vector<16x1x16x8xf32> to vector<16x16x8xf32>
    %19 = arith.addf %16, %18 : vector<16x16x8xf32>
    %20 = vector.extract_strided_slice %14 {offsets = [0, 2, 0, 0], sizes = [16, 1, 16, 8], strides = [1, 1, 1, 1]} : vector<16x4x16x8xf32> to vector<16x1x16x8xf32>
    %21 = vector.shape_cast %20 : vector<16x1x16x8xf32> to vector<16x16x8xf32>
    %22 = arith.addf %19, %21 : vector<16x16x8xf32>
    %23 = vector.extract_strided_slice %14 {offsets = [0, 3, 0, 0], sizes = [16, 1, 16, 8], strides = [1, 1, 1, 1]} : vector<16x4x16x8xf32> to vector<16x1x16x8xf32>
    %24 = vector.shape_cast %23 : vector<16x1x16x8xf32> to vector<16x16x8xf32>
    %25 = arith.addf %22, %24 : vector<16x16x8xf32>
    %cst_8 = arith.constant 2.500000e-01 : f32
    %26 = vector.broadcast %cst_8 : f32 to vector<16x16x8xf32>
    %27 = arith.mulf %25, %26 : vector<16x16x8xf32>
    %28 = vector.shape_cast %27 : vector<16x16x8xf32> to vector<256x8xf32>
    %c0_9 = arith.constant 0 : index
    %c0_10 = arith.constant 0 : index
    %29 = vector.load %arg4[%c0_9, %c0_10] : memref<256x256xbf16, #tpu.memory_space<vmem>>, vector<256x256xbf16>
    %30 = arith.truncf %28 : vector<256x8xf32> to vector<256x8xbf16>
    %cst_11 = arith.constant dense<0.000000e+00> : vector<256x8xf32>
    %31 = tpu.matmul %29, %30, %cst_11 {dimension_numbers = #tpu.dot_dimension_numbers<[1], [0], [0], [1], [0, 0, 1, 1], [], []>} : vector<256x256xbf16>, vector<256x8xbf16>, vector<256x8xf32> -> vector<256x8xf32>
    %c0_12 = arith.constant 0 : index
    %c0_13 = arith.constant 0 : index
    %32 = vector.load %arg5[%c0_12, %c0_13] : memref<256x1xf32, #tpu.memory_space<vmem>>, vector<256x1xf32>
    %33 = vector.broadcast %32 : vector<256x1xf32> to vector<256x8xf32>
    %34 = arith.addf %31, %33 : vector<256x8xf32>
    %cst_14 = arith.constant 0.000000e+00 : f32
    %35 = vector.broadcast %cst_14 : f32 to vector<256x8xf32>
    %36 = arith.cmpf ogt, %34, %35 : vector<256x8xf32>
    %cst_15 = arith.constant 0.000000e+00 : f32
    %37 = vector.broadcast %cst_15 : f32 to vector<256x8xf32>
    %38 = arith.minimumf %34, %37 : vector<256x8xf32>
    %39 = math.exp %38 : vector<256x8xf32>
    %cst_16 = arith.constant 1.000000e+00 : f32
    %40 = vector.broadcast %cst_16 : f32 to vector<256x8xf32>
    %41 = arith.subf %39, %40 : vector<256x8xf32>
    %42 = arith.select %36, %34, %41 : vector<256x8xi1>, vector<256x8xf32>
    %c0_17 = arith.constant 0 : index
    %c0_18 = arith.constant 0 : index
    %43 = vector.load %arg6[%c0_17, %c0_18] : memref<8x256xbf16, #tpu.memory_space<vmem>>, vector<8x256xbf16>
    %44 = arith.truncf %42 : vector<256x8xf32> to vector<256x8xbf16>
    %cst_19 = arith.constant dense<0.000000e+00> : vector<8x8xf32>
    %45 = tpu.matmul %43, %44, %cst_19 {dimension_numbers = #tpu.dot_dimension_numbers<[1], [0], [0], [1], [0, 0, 1, 1], [], []>} : vector<8x256xbf16>, vector<256x8xbf16>, vector<8x8xf32> -> vector<8x8xf32>
    %c0_20 = arith.constant 0 : index
    %c0_21 = arith.constant 0 : index
    %46 = vector.load %arg7[%c0_20, %c0_21] : memref<8x1xf32, #tpu.memory_space<vmem>>, vector<8x1xf32>
    %47 = vector.broadcast %46 : vector<8x1xf32> to vector<8x8xf32>
    %48 = arith.addf %45, %47 : vector<8x8xf32>
    %49 = tpu.iota {dimensions = array<i32: 0>} : vector<8x8xi32>
    %c3_i32 = arith.constant 3 : i32
    %50 = vector.broadcast %c3_i32 : i32 to vector<8x8xi32>
    %51 = arith.cmpi slt, %49, %50 : vector<8x8xi32>
    %cst_22 = arith.constant 0.000000e+00 : f32
    %cst_23 = arith.constant -1.000000e+30 : f32
    %52 = vector.broadcast %cst_22 : f32 to vector<8x8xf32>
    %53 = vector.broadcast %cst_23 : f32 to vector<8x8xf32>
    %54 = arith.select %51, %52, %53 : vector<8x8xi1>, vector<8x8xf32>
    %55 = arith.addf %48, %54 : vector<8x8xf32>
    %cst_24 = arith.constant dense<0xFF800000> : vector<8xf32>
    %56 = vector.multi_reduction <maximumf>, %55, %cst_24 [0] : vector<8x8xf32> to vector<8xf32>
    %57 = vector.shape_cast %56 : vector<8xf32> to vector<1x8xf32>
    %58 = vector.broadcast %57 : vector<1x8xf32> to vector<8x8xf32>
    %59 = arith.subf %55, %58 : vector<8x8xf32>
    %60 = math.exp %59 : vector<8x8xf32>
    %cst_25 = arith.constant dense<0.000000e+00> : vector<8xf32>
    %61 = vector.multi_reduction <add>, %60, %cst_25 [0] : vector<8x8xf32> to vector<8xf32>
    %62 = vector.shape_cast %61 : vector<8xf32> to vector<1x8xf32>
    %63 = tpu.reciprocal %62 {approx = true} : vector<1x8xf32> -> vector<1x8xf32>
    %64 = vector.broadcast %63 : vector<1x8xf32> to vector<8x8xf32>
    %65 = arith.mulf %60, %64 : vector<8x8xf32>
    %c0_26 = arith.constant 0 : index
    %c0_27 = arith.constant 0 : index
    %66 = vector.load %arg10[%c0_26, %c0_27] : memref<8x8xf32, #tpu.memory_space<vmem>>, vector<8x8xf32>
    tpu.vector_store %arg10[%c0_26, %c0_27], %65 {strides = array<i32>} : memref<8x8xf32, #tpu.memory_space<vmem>>, vector<8x8xf32>,
    %67 = arith.addf %65, %54 : vector<8x8xf32>
    %cst_28 = arith.constant dense<0xFF800000> : vector<8xf32>
    %68 = vector.multi_reduction <maximumf>, %67, %cst_28 [0] : vector<8x8xf32> to vector<8xf32>
    %69 = vector.shape_cast %68 : vector<8xf32> to vector<1x8xf32>
    %70 = vector.broadcast %69 : vector<1x8xf32> to vector<8x8xf32>
    %71 = arith.subf %67, %70 : vector<8x8xf32>
    %72 = math.exp %71 : vector<8x8xf32>
    %cst_29 = arith.constant dense<0.000000e+00> : vector<8xf32>
    %73 = vector.multi_reduction <add>, %72, %cst_29 [0] : vector<8x8xf32> to vector<8xf32>
    %74 = vector.shape_cast %73 : vector<8xf32> to vector<1x8xf32>
    %75 = math.log %74 : vector<1x8xf32>
    %76 = arith.addf %75, %69 : vector<1x8xf32>
    %77 = vector.broadcast %76 : vector<1x8xf32> to vector<8x8xf32>
    %78 = arith.subf %67, %77 : vector<8x8xf32>
    %c0_30 = arith.constant 0 : index
    %c0_31 = arith.constant 0 : index
    %79 = vector.load %arg9[%c0_30, %c0_31] : memref<1x8xi32, #tpu.memory_space<vmem>>, vector<1x8xi32>
    %80 = vector.broadcast %79 : vector<1x8xi32> to vector<8x8xi32>
    %81 = arith.cmpi eq, %49, %80 : vector<8x8xi32>
    %82 = arith.extui %81 : vector<8x8xi1> to vector<8x8xi32>
    %83 = arith.sitofp %82 : vector<8x8xi32> to vector<8x8xf32>
    %c0_32 = arith.constant 0 : index
    %c0_33 = arith.constant 0 : index
    %84 = vector.load %arg8[%c0_32, %c0_33] : memref<8x1xf32, #tpu.memory_space<vmem>>, vector<8x1xf32>
    %85 = vector.broadcast %84 : vector<8x1xf32> to vector<8x8xf32>
    %86 = arith.mulf %83, %85 : vector<8x8xf32>
    %cst_34 = arith.constant dense<0.000000e+00> : vector<8xf32>
    %87 = vector.multi_reduction <add>, %86, %cst_34 [0] : vector<8x8xf32> to vector<8xf32>
    %88 = vector.shape_cast %87 : vector<8xf32> to vector<1x8xf32>
    %89 = arith.mulf %83, %78 : vector<8x8xf32>
    %cst_35 = arith.constant dense<0.000000e+00> : vector<8xf32>
    %90 = vector.multi_reduction <add>, %89, %cst_35 [0] : vector<8x8xf32> to vector<8xf32>
    %91 = vector.shape_cast %90 : vector<8xf32> to vector<1x8xf32>
    %cst_36 = arith.constant 0.000000e+00 : f32
    %92 = vector.broadcast %cst_36 : f32 to vector<1x8xf32>
    %93 = arith.subf %92, %91 : vector<1x8xf32>
    %cst_37 = arith.constant 0.000000e+00 : f32
    %94 = vector.broadcast %cst_37 : f32 to vector<8x8xf32>
    %95 = arith.select %51, %78, %94 : vector<8x8xi1>, vector<8x8xf32>
    %cst_38 = arith.constant dense<0.000000e+00> : vector<8xf32>
    %96 = vector.multi_reduction <add>, %95, %cst_38 [0] : vector<8x8xf32> to vector<8xf32>
    %97 = vector.shape_cast %96 : vector<8xf32> to vector<1x8xf32>
    %cst_39 = arith.constant 0.000000e+00 : f32
    %98 = vector.broadcast %cst_39 : f32 to vector<1x8xf32>
    %99 = arith.subf %98, %97 : vector<1x8xf32>
    %cst_40 = arith.constant 3.000000e+00 : f32
    %100 = vector.broadcast %cst_40 : f32 to vector<1x8xf32>
    %101 = arith.divf %99, %100 : vector<1x8xf32>
    %cst_41 = arith.constant 1.000000e+00 : f32
    %102 = vector.broadcast %cst_41 : f32 to vector<1x8xf32>
    %103 = arith.mulf %102, %93 : vector<1x8xf32>
    %cst_42 = arith.constant 0.000000e+00 : f32
    %104 = vector.broadcast %cst_42 : f32 to vector<1x8xf32>
    %105 = arith.mulf %104, %101 : vector<1x8xf32>
    %106 = arith.addf %103, %105 : vector<1x8xf32>
    %107 = arith.mulf %88, %106 : vector<1x8xf32>
    %108 = vector.shape_cast %107 : vector<1x8xf32> to vector<1x1x8xf32>
    %cst_43 = arith.constant dense<0.000000e+00> : vector<1xf32>
    %109 = vector.multi_reduction <add>, %108, %cst_43 [1, 2] : vector<1x1x8xf32> to vector<1xf32>
    %110 = vector.shape_cast %109 : vector<1xf32> to vector<1x1x1xf32>
    %111 = vector.extract %110[0, 0, 0] : f32 from vector<1x1x1xf32>
    %112 = vector.broadcast %111 : f32 to vector<1x1xf32>
    %113 = vector.shape_cast %88 : vector<1x8xf32> to vector<1x1x8xf32>
    %cst_44 = arith.constant dense<0.000000e+00> : vector<1xf32>
    %114 = vector.multi_reduction <add>, %113, %cst_44 [1, 2] : vector<1x1x8xf32> to vector<1xf32>
    %115 = vector.shape_cast %114 : vector<1xf32> to vector<1x1x1xf32>
    %116 = vector.extract %115[0, 0, 0] : f32 from vector<1x1x1xf32>
    %117 = vector.broadcast %116 : f32 to vector<1x1xf32>
    %118 = tpu.iota {dimensions = array<i32: 0>} : vector<8x128xi32>
    %119 = tpu.iota {dimensions = array<i32: 1>} : vector<8x128xi32>
    %c0_i32 = arith.constant 0 : i32
    %120 = vector.broadcast %c0_i32 : i32 to vector<8x128xi32>
    %121 = arith.cmpi eq, %118, %120 : vector<8x128xi32>
    %c0_i32_45 = arith.constant 0 : i32
    %122 = vector.broadcast %c0_i32_45 : i32 to vector<8x128xi32>
    %123 = arith.cmpi eq, %119, %122 : vector<8x128xi32>
    %124 = arith.andi %121, %123 : vector<8x128xi1>
    %cst_46 = arith.constant 0.000000e+00 : f32
    %125 = vector.shape_cast %112 : vector<1x1xf32> to vector<1x1xf32>
    %126 = vector.broadcast %125 : vector<1x1xf32> to vector<8x128xf32>
    %127 = vector.broadcast %cst_46 : f32 to vector<8x128xf32>
    %128 = arith.select %124, %126, %127 : vector<8x128xi1>, vector<8x128xf32>
    %c0_i32_47 = arith.constant 0 : i32
    %129 = vector.broadcast %c0_i32_47 : i32 to vector<8x128xi32>
    %130 = arith.cmpi eq, %118, %129 : vector<8x128xi32>
    %c1_i32 = arith.constant 1 : i32
    %131 = vector.broadcast %c1_i32 : i32 to vector<8x128xi32>
    %132 = arith.cmpi eq, %119, %131 : vector<8x128xi32>
    %133 = arith.andi %130, %132 : vector<8x128xi1>
    %cst_48 = arith.constant 0.000000e+00 : f32
    %134 = vector.shape_cast %117 : vector<1x1xf32> to vector<1x1xf32>
    %135 = vector.broadcast %134 : vector<1x1xf32> to vector<8x128xf32>
    %136 = vector.broadcast %cst_48 : f32 to vector<8x128xf32>
    %137 = arith.select %133, %135, %136 : vector<8x128xi1>, vector<8x128xf32>
    %138 = arith.addf %128, %137 : vector<8x128xf32>
    %c0_49 = arith.constant 0 : index
    %c0_50 = arith.constant 0 : index
    %139 = vector.load %arg11[%c0_49, %c0_50] : memref<8x128xf32, #tpu.memory_space<vmem>>, vector<8x128xf32>
    tpu.vector_store %arg11[%c0_49, %c0_50], %138 {strides = array<i32>} : memref<8x128xf32, #tpu.memory_space<vmem>>, vector<8x128xf32>,
    return
  }
  func.func @transform_0(%arg0: i32) -> (i32, i32) {
    %c0_i32 = arith.constant 0 : i32
    %c0_i32_0 = arith.constant 0 : i32
    return %c0_i32, %arg0 : i32, i32
  }
  func.func @transform_1(%arg0: i32) -> (i32, i32) {
    %c0_i32 = arith.constant 0 : i32
    %c0_i32_0 = arith.constant 0 : i32
    %c0_i32_1 = arith.constant 0 : i32
    return %c0_i32, %c0_i32_0 : i32, i32
  }
  func.func @transform_2(%arg0: i32) -> (i32, i32) {
    %c0_i32 = arith.constant 0 : i32
    %c0_i32_0 = arith.constant 0 : i32
    %c0_i32_1 = arith.constant 0 : i32
    return %c0_i32, %c0_i32_0 : i32, i32
  }
  func.func @transform_3(%arg0: i32) -> (i32, i32) {
    %c0_i32 = arith.constant 0 : i32
    %c0_i32_0 = arith.constant 0 : i32
    %c0_i32_1 = arith.constant 0 : i32
    return %c0_i32, %c0_i32_0 : i32, i32
  }
  func.func @transform_4(%arg0: i32) -> (i32, i32) {
    %c0_i32 = arith.constant 0 : i32
    %c0_i32_0 = arith.constant 0 : i32
    %c0_i32_1 = arith.constant 0 : i32
    return %c0_i32, %c0_i32_0 : i32, i32
  }
  func.func @transform_5(%arg0: i32) -> (i32, i32) {
    %c0_i32 = arith.constant 0 : i32
    %c0_i32_0 = arith.constant 0 : i32
    %c0_i32_1 = arith.constant 0 : i32
    return %c0_i32, %c0_i32_0 : i32, i32
  }
  func.func @transform_6(%arg0: i32) -> (i32, i32) {
    %c0_i32 = arith.constant 0 : i32
    %c0_i32_0 = arith.constant 0 : i32
    %c0_i32_1 = arith.constant 0 : i32
    return %c0_i32, %c0_i32_0 : i32, i32
  }
  func.func @transform_7(%arg0: i32) -> (i32, i32) {
    %c0_i32 = arith.constant 0 : i32
    %c0_i32_0 = arith.constant 0 : i32
    %c0_i32_1 = arith.constant 0 : i32
    return %c0_i32, %c0_i32_0 : i32, i32
  }
  func.func @transform_8(%arg0: i32) -> (i32, i32) {
    %c0_i32 = arith.constant 0 : i32
    %c0_i32_0 = arith.constant 0 : i32
    return %c0_i32, %arg0 : i32, i32
  }
  func.func @transform_9(%arg0: i32) -> (i32, i32) {
    %c0_i32 = arith.constant 0 : i32
    %c0_i32_0 = arith.constant 0 : i32
    return %c0_i32, %arg0 : i32, i32
  }
  func.func @transform_10(%arg0: i32) -> (i32, i32) {
    %c0_i32 = arith.constant 0 : i32
    %c0_i32_0 = arith.constant 0 : i32
    return %arg0, %c0_i32 : i32, i32
  }
}

</mosaic_0001>

<llo_original>
// kernel: tile.13
$region0: #{tile.13}
  #allocation0 [shape = 's32[1]{0}', space=sflag, size = 0x4, scoped, tag = 'scoped memory for tile.13']
  %s0 = inlined_call_operand.vmem [shape: f32[16], index: 0, kind: input, shape index: {}]
  %s1 = inlined_call_operand.vmem [shape: f32[64,16], index: 1, kind: output, shape index: {}]
  // Predicated region
  $region2: #{tile.13} parent=0 // pred_check
    _
  $region3: #{tile.13} parent=0 // pred_check_branch
    %3 = sbr.rel (0) target = $region5
  $region4: #{tile.13} parent=0 // pred_region
    _
  $region5: #{tile.13} parent=0 // pred_fallthru
    _
  %v4 = vld [vmem:[%s0] ss:$0 sm:$0xff]
  %5 = vst [vmem:[%s1] sm:$0xff] %v4
  %s6 = scalar_lea.vmem %s1, 8
  %7 = vst [vmem:[%s6] sm:$0xff] %v4
  %s8 = scalar_lea.vmem %s1, 16
  %9 = vst [vmem:[%s8] sm:$0xff] %v4
  %s10 = scalar_lea.vmem %s1, 24
  %11 = vst [vmem:[%s10] sm:$0xff] %v4
  %s12 = scalar_lea.vmem %s1, 32
  %13 = vst [vmem:[%s12] sm:$0xff] %v4
  %s14 = scalar_lea.vmem %s1, 40
  %15 = vst [vmem:[%s14] sm:$0xff] %v4
  %s16 = scalar_lea.vmem %s1, 48
  %17 = vst [vmem:[%s16] sm:$0xff] %v4
  %s18 = scalar_lea.vmem %s1, 56
  %19 = vst [vmem:[%s18] sm:$0xff] %v4

// kernel: tile.0
$region0: #{tile.0}
  %s0 = inlined_call_operand.vmem [shape: f32[64,16], index: 0, kind: input, shape index: {}]
  %s1 = inlined_call_operand.vmem [shape: f32[1024,1], index: 1, kind: output, shape index: {}]
  %v2 = vld [vmem:[%s0] sm:$0xff]
  %vm3 = vcmask 7168
  %4 = vst.msk [vmem:[%s1] ss:$16 sm:$0x3] %vm3, %v2
  %5 = vst.msk [vmem:[%s1] ss:$16 sm:$0xc] %vm3, %v2
  %6 = vst.msk [vmem:[%s1] ss:$16 sm:$0x30] %vm3, %v2
  %7 = vst.msk [vmem:[%s1] ss:$16 sm:$0xc0] %vm3, %v2
  %s8 = scalar_lea.vmem %s0, 8
  %v9 = vld [vmem:[%s8] sm:$0xff]
  %vm10 = vcmask 7168
  %s11 = scalar_lea.vmem %s1, 128
  %12 = vst.msk [vmem:[%s11] ss:$16 sm:$0x3] %vm10, %v9
  %s13 = scalar_lea.vmem %s1, 128
  %14 = vst.msk [vmem:[%s13] ss:$16 sm:$0xc] %vm10, %v9
  %s15 = scalar_lea.vmem %s1, 128
  %16 = vst.msk [vmem:[%s15] ss:$16 sm:$0x30] %vm10, %v9
  %s17 = scalar_lea.vmem %s1, 128
  %18 = vst.msk [vmem:[%s17] ss:$16 sm:$0xc0] %vm10, %v9
  %s19 = scalar_lea.vmem %s0, 16
  %v20 = vld [vmem:[%s19] sm:$0xff]
  %vm21 = vcmask 7168
  %s22 = scalar_lea.vmem %s1, 256
  %23 = vst.msk [vmem:[%s22] ss:$16 sm:$0x3] %vm21, %v20
  %s24 = scalar_lea.vmem %s1, 256
  %25 = vst.msk [vmem:[%s24] ss:$16 sm:$0xc] %vm21, %v20
  %s26 = scalar_lea.vmem %s1, 256
  %27 = vst.msk [vmem:[%s26] ss:$16 sm:$0x30] %vm21, %v20
  %s28 = scalar_lea.vmem %s1, 256
  %29 = vst.msk [vmem:[%s28] ss:$16 sm:$0xc0] %vm21, %v20
  %s30 = scalar_lea.vmem %s0, 24
  %v31 = vld [vmem:[%s30] sm:$0xff]
  %vm32 = vcmask 7168
  %s33 = scalar_lea.vmem %s1, 384
  %34 = vst.msk [vmem:[%s33] ss:$16 sm:$0x3] %vm32, %v31
  %s35 = scalar_lea.vmem %s1, 384
  %36 = vst.msk [vmem:[%s35] ss:$16 sm:$0xc] %vm32, %v31
  %s37 = scalar_lea.vmem %s1, 384
  %38 = vst.msk [vmem:[%s37] ss:$16 sm:$0x30] %vm32, %v31
  %s39 = scalar_lea.vmem %s1, 384
  %40 = vst.msk [vmem:[%s39] ss:$16 sm:$0xc0] %vm32, %v31
  %s41 = scalar_lea.vmem %s0, 32
  %v42 = vld [vmem:[%s41] sm:$0xff]
  %vm43 = vcmask 7168
  %s44 = scalar_lea.vmem %s1, 512
  %45 = vst.msk [vmem:[%s44] ss:$16 sm:$0x3] %vm43, %v42
  %s46 = scalar_lea.vmem %s1, 512
  %47 = vst.msk [vmem:[%s46] ss:$16 sm:$0xc] %vm43, %v42
  %s48 = scalar_lea.vmem %s1, 512
  %49 = vst.msk [vmem:[%s48] ss:$16 sm:$0x30] %vm43, %v42
  %s50 = scalar_lea.vmem %s1, 512
  %51 = vst.msk [vmem:[%s50] ss:$16 sm:$0xc0] %vm43, %v42
  %s52 = scalar_lea.vmem %s0, 40
  %v53 = vld [vmem:[%s52] sm:$0xff]
  %vm54 = vcmask 7168
  %s55 = scalar_lea.vmem %s1, 640
  %56 = vst.msk [vmem:[%s55] ss:$16 sm:$0x3] %vm54, %v53
  %s57 = scalar_lea.vmem %s1, 640
  %58 = vst.msk [vmem:[%s57] ss:$16 sm:$0xc] %vm54, %v53
  %s59 = scalar_lea.vmem %s1, 640
  %60 = vst.msk [vmem:[%s59] ss:$16 sm:$0x30] %vm54, %v53
  %s61 = scalar_lea.vmem %s1, 640
  %62 = vst.msk [vmem:[%s61] ss:$16 sm:$0xc0] %vm54, %v53
  %s63 = scalar_lea.vmem %s0, 48
  %v64 = vld [vmem:[%s63] sm:$0xff]
  %vm65 = vcmask 7168
  %s66 = scalar_lea.vmem %s1, 768
  %67 = vst.msk [vmem:[%s66] ss:$16 sm:$0x3] %vm65, %v64
  %s68 = scalar_lea.vmem %s1, 768
  %69 = vst.msk [vmem:[%s68] ss:$16 sm:$0xc] %vm65, %v64
  %s70 = scalar_lea.vmem %s1, 768
  %71 = vst.msk [vmem:[%s70] ss:$16 sm:$0x30] %vm65, %v64
  %s72 = scalar_lea.vmem %s1, 768
  %73 = vst.msk [vmem:[%s72] ss:$16 sm:$0xc0] %vm65, %v64
  %s74 = scalar_lea.vmem %s0, 56
  %v75 = vld [vmem:[%s74] sm:$0xff]
  %vm76 = vcmask 7168
  %s77 = scalar_lea.vmem %s1, 896
  %78 = vst.msk [vmem:[%s77] ss:$16 sm:$0x3] %vm76, %v75
  %s79 = scalar_lea.vmem %s1, 896
  %80 = vst.msk [vmem:[%s79] ss:$16 sm:$0xc] %vm76, %v75
  %s81 = scalar_lea.vmem %s1, 896
  %82 = vst.msk [vmem:[%s81] ss:$16 sm:$0x30] %vm76, %v75
  %s83 = scalar_lea.vmem %s1, 896
  %84 = vst.msk [vmem:[%s83] ss:$16 sm:$0xc0] %vm76, %v75
  %v85 = vld [vmem:[%s0] sm:$0xff]
  %86 = vrot.lane.b32.xlu0 %v85, 127
  %v87 = vpop.permute.xlu0 %86
  %vm88 = vcmask 7168
  %s89 = scalar_lea.vmem %s1, 1
  %90 = vst.msk [vmem:[%s89] ss:$16 sm:$0x3] %vm88, %v87
  %s91 = scalar_lea.vmem %s1, 1
  %92 = vst.msk [vmem:[%s91] ss:$16 sm:$0xc] %vm88, %v87
  %s93 = scalar_lea.vmem %s1, 1
  %94 = vst.msk [vmem:[%s93] ss:$16 sm:$0x30] %vm88, %v87
  %s95 = scalar_lea.vmem %s1, 1
  %96 = vst.msk [vmem:[%s95] ss:$16 sm:$0xc0] %vm88, %v87
  %s97 = scalar_lea.vmem %s0, 8
  %v98 = vld [vmem:[%s97] sm:$0xff]
  %99 = vrot.lane.b32.xlu0 %v98, 127
  %v100 = vpop.permute.xlu0 %99
  %vm101 = vcmask 7168
  %s102 = scalar_lea.vmem %s1, 129
  %103 = vst.msk [vmem:[%s102] ss:$16 sm:$0x3] %vm101, %v100
  %s104 = scalar_lea.vmem %s1, 129
  %105 = vst.msk [vmem:[%s104] ss:$16 sm:$0xc] %vm101, %v100
  %s106 = scalar_lea.vmem %s1, 129
  %107 = vst.msk [vmem:[%s106] ss:$16 sm:$0x30] %vm101, %v100
  %s108 = scalar_lea.vmem %s1, 129
  %109 = vst.msk [vmem:[%s108] ss:$16 sm:$0xc0] %vm101, %v100
  %s110 = scalar_lea.vmem %s0, 16
  %v111 = vld [vmem:[%s110] sm:$0xff]
  %112 = vrot.lane.b32.xlu0 %v111, 127
  %v113 = vpop.permute.xlu0 %112
  %vm114 = vcmask 7168
  %s115 = scalar_lea.vmem %s1, 257
  %116 = vst.msk [vmem:[%s115] ss:$16 sm:$0x3] %vm114, %v113
  %s117 = scalar_lea.vmem %s1, 257
  %118 = vst.msk [vmem:[%s117] ss:$16 sm:$0xc] %vm114, %v113
  %s119 = scalar_lea.vmem %s1, 257
  %120 = vst.msk [vmem:[%s119] ss:$16 sm:$0x30] %vm114, %v113
  %s121 = scalar_lea.vmem %s1, 257
  %122 = vst.msk [vmem:[%s121] ss:$16 sm:$0xc0] %vm114, %v113
  %s123 = scalar_lea.vmem %s0, 24
  %v124 = vld [vmem:[%s123] sm:$0xff]
  %125 = vrot.lane.b32.xlu0 %v124, 127
  %v126 = vpop.permute.xlu0 %125
  %vm127 = vcmask 7168
  %s128 = scalar_lea.vmem %s1, 385
  %129 = vst.msk [vmem:[%s128] ss:$16 sm:$0x3] %vm127, %v126
  %s130 = scalar_lea.vmem %s1, 385
  %131 = vst.msk [vmem:[%s130] ss:$16 sm:$0xc] %vm127, %v126
  %s132 = scalar_lea.vmem %s1, 385
  %133 = vst.msk [vmem:[%s132] ss:$16 sm:$0x30] %vm127, %v126
  %s134 = scalar_lea.vmem %s1, 385
  %135 = vst.msk [vmem:[%s134] ss:$16 sm:$0xc0] %vm127, %v126
  %s136 = scalar_lea.vmem %s0, 32
  %v137 = vld [vmem:[%s136] sm:$0xff]
  %138 = vrot.lane.b32.xlu0 %v137, 127
  %v139 = vpop.permute.xlu0 %138
  %vm140 = vcmask 7168
  %s141 = scalar_lea.vmem %s1, 513
  %142 = vst.msk [vmem:[%s141] ss:$16 sm:$0x3] %vm140, %v139
  %s143 = scalar_lea.vmem %s1, 513
  %144 = vst.msk [vmem:[%s143] ss:$16 sm:$0xc] %vm140, %v139
  %s145 = scalar_lea.vmem %s1, 513
  %146 = vst.msk [vmem:[%s145] ss:$16 sm:$0x30] %vm140, %v139
  %s147 = scalar_lea.vmem %s1, 513
  %148 = vst.msk [vmem:[%s147] ss:$16 sm:$0xc0] %vm140, %v139
  %s149 = scalar_lea.vmem %s0, 40
  %v150 = vld [vmem:[%s149] sm:$0xff]
  %151 = vrot.lane.b32.xlu0 %v150, 127
  %v152 = vpop.permute.xlu0 %151
  %vm153 = vcmask 7168
  %s154 = scalar_lea.vmem %s1, 641
  %155 = vst.msk [vmem:[%s154] ss:$16 sm:$0x3] %vm153, %v152
  %s156 = scalar_lea.vmem %s1, 641
  %157 = vst.msk [vmem:[%s156] ss:$16 sm:$0xc] %vm153, %v152
  %s158 = scalar_lea.vmem %s1, 641
  %159 = vst.msk [vmem:[%s158] ss:$16 sm:$0x30] %vm153, %v152
  %s160 = scalar_lea.vmem %s1, 641
  %161 = vst.msk [vmem:[%s160] ss:$16 sm:$0xc0] %vm153, %v152
  %s162 = scalar_lea.vmem %s0, 48
  %v163 = vld [vmem:[%s162] sm:$0xff]
  %164 = vrot.lane.b32.xlu0 %v163, 127
  %v165 = vpop.permute.xlu0 %164
  %vm166 = vcmask 7168
  %s167 = scalar_lea.vmem %s1, 769
  %168 = vst.msk [vmem:[%s167] ss:$16 sm:$0x3] %vm166, %v165
  %s169 = scalar_lea.vmem %s1, 769
  %170 = vst.msk [vmem:[%s169] ss:$16 sm:$0xc] %vm166, %v165
  %s171 = scalar_lea.vmem %s1, 769
  %172 = vst.msk [vmem:[%s171] ss:$16 sm:$0x30] %vm166, %v165
  %s173 = scalar_lea.vmem %s1, 769
  %174 = vst.msk [vmem:[%s173] ss:$16 sm:$0xc0] %vm166, %v165
  %s175 = scalar_lea.vmem %s0, 56
  %v176 = vld [vmem:[%s175] sm:$0xff]
  %177 = vrot.lane.b32.xlu0 %v176, 127
  %v178 = vpop.permute.xlu0 %177
  %vm179 = vcmask 7168
  %s180 = scalar_lea.vmem %s1, 897
  %181 = vst.msk [vmem:[%s180] ss:$16 sm:$0x3] %vm179, %v178
  %s182 = scalar_lea.vmem %s1, 897
  %183 = vst.msk [vmem:[%s182] ss:$16 sm:$0xc] %vm179, %v178
  %s184 = scalar_lea.vmem %s1, 897
  %185 = vst.msk [vmem:[%s184] ss:$16 sm:$0x30] %vm179, %v178
  %s186 = scalar_lea.vmem %s1, 897
  %187 = vst.msk [vmem:[%s186] ss:$16 sm:$0xc0] %vm179, %v178
  %v188 = vld [vmem:[%s0] sm:$0xff]
  %189 = vrot.lane.b32.xlu0 %v188, 126
  %v190 = vpop.permute.xlu0 %189
  %vm191 = vcmask 7168
  %s192 = scalar_lea.vmem %s1, 2
  %193 = vst.msk [vmem:[%s192] ss:$16 sm:$0x3] %vm191, %v190
  %s194 = scalar_lea.vmem %s1, 2
  %195 = vst.msk [vmem:[%s194] ss:$16 sm:$0xc] %vm191, %v190
  %s196 = scalar_lea.vmem %s1, 2
  %197 = vst.msk [vmem:[%s196] ss:$16 sm:$0x30] %vm191, %v190
  %s198 = scalar_lea.vmem %s1, 2
  %199 = vst.msk [vmem:[%s198] ss:$16 sm:$0xc0] %vm191, %v190
  %s200 = scalar_lea.vmem %s0, 8
  %v201 = vld [vmem:[%s200] sm:$0xff]
  %202 = vrot.lane.b32.xlu0 %v201, 126
  %v203 = vpop.permute.xlu0 %202
  %vm204 = vcmask 7168
  %s205 = scalar_lea.vmem %s1, 130
  %206 = vst.msk [vmem:[%s205] ss:$16 sm:$0x3] %vm204, %v203
  %s207 = scalar_lea.vmem %s1, 130
  %208 = vst.msk [vmem:[%s207] ss:$16 sm:$0xc] %vm204, %v203
  %s209 = scalar_lea.vmem %s1, 130
  %210 = vst.msk [vmem:[%s209] ss:$16 sm:$0x30] %vm204, %v203
  %s211 = scalar_lea.vmem %s1, 130
  %212 = vst.msk [vmem:[%s211] ss:$16 sm:$0xc0] %vm204, %v203
  %s213 = scalar_lea.vmem %s0, 16
  %v214 = vld [vmem:[%s213] sm:$0xff]
  %215 = vrot.lane.b32.xlu0 %v214, 126
  %v216 = vpop.permute.xlu0 %215
  %vm217 = vcmask 7168
  %s218 = scalar_lea.vmem %s1, 258
  %219 = vst.msk [vmem:[%s218] ss:$16 sm:$0x3] %vm217, %v216
  %s220 = scalar_lea.vmem %s1, 258
  %221 = vst.msk [vmem:[%s220] ss:$16 sm:$0xc] %vm217, %v216
  %s222 = scalar_lea.vmem %s1, 258
  %223 = vst.msk [vmem:[%s222] ss:$16 sm:$0x30] %vm217, %v216
  %s224 = scalar_lea.vmem %s1, 258
  %225 = vst.msk [vmem:[%s224] ss:$16 sm:$0xc0] %vm217, %v216
  %s226 = scalar_lea.vmem %s0, 24
  %v227 = vld [vmem:[%s226] sm:$0xff]
  %228 = vrot.lane.b32.xlu0 %v227, 126
  %v229 = vpop.permute.xlu0 %228
  %vm230 = vcmask 7168
  %s231 = scalar_lea.vmem %s1, 386
  %232 = vst.msk [vmem:[%s231] ss:$16 sm:$0x3] %vm230, %v229
  %s233 = scalar_lea.vmem %s1, 386
  %234 = vst.msk [vmem:[%s233] ss:$16 sm:$0xc] %vm230, %v229
  %s235 = scalar_lea.vmem %s1, 386
  %236 = vst.msk [vmem:[%s235] ss:$16 sm:$0x30] %vm230, %v229
  %s237 = scalar_lea.vmem %s1, 386
  %238 = vst.msk [vmem:[%s237] ss:$16 sm:$0xc0] %vm230, %v229
  %s239 = scalar_lea.vmem %s0, 32
  %v240 = vld [vmem:[%s239] sm:$0xff]
  %241 = vrot.lane.b32.xlu0 %v240, 126
  %v242 = vpop.permute.xlu0 %241
  %vm243 = vcmask 7168
  %s244 = scalar_lea.vmem %s1, 514
  %245 = vst.msk [vmem:[%s244] ss:$16 sm:$0x3] %vm243, %v242
  %s246 = scalar_lea.vmem %s1, 514
  %247 = vst.msk [vmem:[%s246] ss:$16 sm:$0xc] %vm243, %v242
  %s248 = scalar_lea.vmem %s1, 514
  %249 = vst.msk [vmem:[%s248] ss:$16 sm:$0x30] %vm243, %v242
  %s250 = scalar_lea.vmem %s1, 514
  %251 = vst.msk [vmem:[%s250] ss:$16 sm:$0xc0] %vm243, %v242
  %s252 = scalar_lea.vmem %s0, 40
  %v253 = vld [vmem:[%s252] sm:$0xff]
  %254 = vrot.lane.b32.xlu0 %v253, 126
  %v255 = vpop.permute.xlu0 %254
  %vm256 = vcmask 7168
  %s257 = scalar_lea.vmem %s1, 642
  %258 = vst.msk [vmem:[%s257] ss:$16 sm:$0x3] %vm256, %v255
  %s259 = scalar_lea.vmem %s1, 642
  %260 = vst.msk [vmem:[%s259] ss:$16 sm:$0xc] %vm256, %v255
  %s261 = scalar_lea.vmem %s1, 642
  %262 = vst.msk [vmem:[%s261] ss:$16 sm:$0x30] %vm256, %v255
  %s263 = scalar_lea.vmem %s1, 642
  %264 = vst.msk [vmem:[%s263] ss:$16 sm:$0xc0] %vm256, %v255
  %s265 = scalar_lea.vmem %s0, 48
  %v266 = vld [vmem:[%s265] sm:$0xff]
  %267 = vrot.lane.b32.xlu0 %v266, 126
  %v268 = vpop.permute.xlu0 %267
  %vm269 = vcmask 7168
  %s270 = scalar_lea.vmem %s1, 770
  %271 = vst.msk [vmem:[%s270] ss:$16 sm:$0x3] %vm269, %v268
  %s272 = scalar_lea.vmem %s1, 770
  %273 = vst.msk [vmem:[%s272] ss:$16 sm:$0xc] %vm269, %v268
  %s274 = scalar_lea.vmem %s1, 770
  %275 = vst.msk [vmem:[%s274] ss:$16 sm:$0x30] %vm269, %v268
  %s276 = scalar_lea.vmem %s1, 770
  %277 = vst.msk [vmem:[%s276] ss:$16 sm:$0xc0] %vm269, %v268
  %s278 = scalar_lea.vmem %s0, 56
  %v279 = vld [vmem:[%s278] sm:$0xff]
  %280 = vrot.lane.b32.xlu0 %v279, 126
  %v281 = vpop.permute.xlu0 %280
  %vm282 = vcmask 7168
  %s283 = scalar_lea.vmem %s1, 898
  %284 = vst.msk [vmem:[%s283] ss:$16 sm:$0x3] %vm282, %v281
  %s285 = scalar_lea.vmem %s1, 898
  %286 = vst.msk [vmem:[%s285] ss:$16 sm:$0xc] %vm282, %v281
  %s287 = scalar_lea.vmem %s1, 898
  %288 = vst.msk [vmem:[%s287] ss:$16 sm:$0x30] %vm282, %v281
  %s289 = scalar_lea.vmem %s1, 898
  %290 = vst.msk [vmem:[%s289] ss:$16 sm:$0xc0] %vm282, %v281
  %v291 = vld [vmem:[%s0] sm:$0xff]
  %292 = vrot.lane.b32.xlu0 %v291, 125
  %v293 = vpop.permute.xlu0 %292
  %vm294 = vcmask 7168
  %s295 = scalar_lea.vmem %s1, 3
  %296 = vst.msk [vmem:[%s295] ss:$16 sm:$0x3] %vm294, %v293
  %s297 = scalar_lea.vmem %s1, 3
  %298 = vst.msk [vmem:[%s297] ss:$16 sm:$0xc] %vm294, %v293
  %s299 = scalar_lea.vmem %s1, 3
  %300 = vst.msk [vmem:[%s299] ss:$16 sm:$0x30] %vm294, %v293
  %s301 = scalar_lea.vmem %s1, 3
  %302 = vst.msk [vmem:[%s301] ss:$16 sm:$0xc0] %vm294, %v293
  %s303 = scalar_lea.vmem %s0, 8
  %v304 = vld [vmem:[%s303] sm:$0xff]
  %305 = vrot.lane.b32.xlu0 %v304, 125
  %v306 = vpop.permute.xlu0 %305
  %vm307 = vcmask 7168
  %s308 = scalar_lea.vmem %s1, 131
  %309 = vst.msk [vmem:[%s308] ss:$16 sm:$0x3] %vm307, %v306
  %s310 = scalar_lea.vmem %s1, 131
  %311 = vst.msk [vmem:[%s310] ss:$16 sm:$0xc] %vm307, %v306
  %s312 = scalar_lea.vmem %s1, 131
  %313 = vst.msk [vmem:[%s312] ss:$16 sm:$0x30] %vm307, %v306
  %s314 = scalar_lea.vmem %s1, 131
  %315 = vst.msk [vmem:[%s314] ss:$16 sm:$0xc0] %vm307, %v306
  %s316 = scalar_lea.vmem %s0, 16
  %v317 = vld [vmem:[%s316] sm:$0xff]
  %318 = vrot.lane.b32.xlu0 %v317, 125
  %v319 = vpop.permute.xlu0 %318
  %vm320 = vcmask 7168
  %s321 = scalar_lea.vmem %s1, 259
  %322 = vst.msk [vmem:[%s321] ss:$16 sm:$0x3] %vm320, %v319
  %s323 = scalar_lea.vmem %s1, 259
  %324 = vst.msk [vmem:[%s323] ss:$16 sm:$0xc] %vm320, %v319
  %s325 = scalar_lea.vmem %s1, 259
  %326 = vst.msk [vmem:[%s325] ss:$16 sm:$0x30] %vm320, %v319
  %s327 = scalar_lea.vmem %s1, 259
  %328 = vst.msk [vmem:[%s327] ss:$16 sm:$0xc0] %vm320, %v319
  %s329 = scalar_lea.vmem %s0, 24
  %v330 = vld [vmem:[%s329] sm:$0xff]
  %331 = vrot.lane.b32.xlu0 %v330, 125
  %v332 = vpop.permute.xlu0 %331
  %vm333 = vcmask 7168
  %s334 = scalar_lea.vmem %s1, 387
  %335 = vst.msk [vmem:[%s334] ss:$16 sm:$0x3] %vm333, %v332
  %s336 = scalar_lea.vmem %s1, 387
  %337 = vst.msk [vmem:[%s336] ss:$16 sm:$0xc] %vm333, %v332
  %s338 = scalar_lea.vmem %s1, 387
  %339 = vst.msk [vmem:[%s338] ss:$16 sm:$0x30] %vm333, %v332
  %s340 = scalar_lea.vmem %s1, 387
  %341 = vst.msk [vmem:[%s340] ss:$16 sm:$0xc0] %vm333, %v332
  %s342 = scalar_lea.vmem %s0, 32
  %v343 = vld [vmem:[%s342] sm:$0xff]
  %344 = vrot.lane.b32.xlu0 %v343, 125
  %v345 = vpop.permute.xlu0 %344
  %vm346 = vcmask 7168
  %s347 = scalar_lea.vmem %s1, 515
  %348 = vst.msk [vmem:[%s347] ss:$16 sm:$0x3] %vm346, %v345
  %s349 = scalar_lea.vmem %s1, 515
  %350 = vst.msk [vmem:[%s349] ss:$16 sm:$0xc] %vm346, %v345
  %s351 = scalar_lea.vmem %s1, 515
  %352 = vst.msk [vmem:[%s351] ss:$16 sm:$0x30] %vm346, %v345
  %s353 = scalar_lea.vmem %s1, 515
  %354 = vst.msk [vmem:[%s353] ss:$16 sm:$0xc0] %vm346, %v345
  %s355 = scalar_lea.vmem %s0, 40
  %v356 = vld [vmem:[%s355] sm:$0xff]
  %357 = vrot.lane.b32.xlu0 %v356, 125
  %v358 = vpop.permute.xlu0 %357
  %vm359 = vcmask 7168
  %s360 = scalar_lea.vmem %s1, 643
  %361 = vst.msk [vmem:[%s360] ss:$16 sm:$0x3] %vm359, %v358
  %s362 = scalar_lea.vmem %s1, 643
  %363 = vst.msk [vmem:[%s362] ss:$16 sm:$0xc] %vm359, %v358
  %s364 = scalar_lea.vmem %s1, 643
  %365 = vst.msk [vmem:[%s364] ss:$16 sm:$0x30] %vm359, %v358
  %s366 = scalar_lea.vmem %s1, 643
  %367 = vst.msk [vmem:[%s366] ss:$16 sm:$0xc0] %vm359, %v358
  %s368 = scalar_lea.vmem %s0, 48
  %v369 = vld [vmem:[%s368] sm:$0xff]
  %370 = vrot.lane.b32.xlu0 %v369, 125
  %v371 = vpop.permute.xlu0 %370
  %vm372 = vcmask 7168
  %s373 = scalar_lea.vmem %s1, 771
  %374 = vst.msk [vmem:[%s373] ss:$16 sm:$0x3] %vm372, %v371
  %s375 = scalar_lea.vmem %s1, 771
  %376 = vst.msk [vmem:[%s375] ss:$16 sm:$0xc] %vm372, %v371
  %s377 = scalar_lea.vmem %s1, 771
  %378 = vst.msk [vmem:[%s377] ss:$16 sm:$0x30] %vm372, %v371
  %s379 = scalar_lea.vmem %s1, 771
  %380 = vst.msk [vmem:[%s379] ss:$16 sm:$0xc0] %vm372, %v371
  %s381 = scalar_lea.vmem %s0, 56
  %v382 = vld [vmem:[%s381] sm:$0xff]
  %383 = vrot.lane.b32.xlu0 %v382, 125
  %v384 = vpop.permute.xlu0 %383
  %vm385 = vcmask 7168
  %s386 = scalar_lea.vmem %s1, 899
  %387 = vst.msk [vmem:[%s386] ss:$16 sm:$0x3] %vm385, %v384
  %s388 = scalar_lea.vmem %s1, 899
  %389 = vst.msk [vmem:[%s388] ss:$16 sm:$0xc] %vm385, %v384
  %s390 = scalar_lea.vmem %s1, 899
  %391 = vst.msk [vmem:[%s390] ss:$16 sm:$0x30] %vm385, %v384
  %s392 = scalar_lea.vmem %s1, 899
  %393 = vst.msk [vmem:[%s392] ss:$16 sm:$0xc0] %vm385, %v384
  %v394 = vld [vmem:[%s0] sm:$0xff]
  %395 = vrot.lane.b32.xlu0 %v394, 124
  %v396 = vpop.permute.xlu0 %395
  %vm397 = vcmask 7168
  %s398 = scalar_lea.vmem %s1, 4
  %399 = vst.msk [vmem:[%s398] ss:$16 sm:$0x3] %vm397, %v396
  %s400 = scalar_lea.vmem %s1, 4
  %401 = vst.msk [vmem:[%s400] ss:$16 sm:$0xc] %vm397, %v396
  %s402 = scalar_lea.vmem %s1, 4
  %403 = vst.msk [vmem:[%s402] ss:$16 sm:$0x30] %vm397, %v396
  %s404 = scalar_lea.vmem %s1, 4
  %405 = vst.msk [vmem:[%s404] ss:$16 sm:$0xc0] %vm397, %v396
  %s406 = scalar_lea.vmem %s0, 8
  %v407 = vld [vmem:[%s406] sm:$0xff]
  %408 = vrot.lane.b32.xlu0 %v407, 124
  %v409 = vpop.permute.xlu0 %408
  %vm410 = vcmask 7168
  %s411 = scalar_lea.vmem %s1, 132
  %412 = vst.msk [vmem:[%s411] ss:$16 sm:$0x3] %vm410, %v409
  %s413 = scalar_lea.vmem %s1, 132
  %414 = vst.msk [vmem:[%s413] ss:$16 sm:$0xc] %vm410, %v409
  %s415 = scalar_lea.vmem %s1, 132
  %416 = vst.msk [vmem:[%s415] ss:$16 sm:$0x30] %vm410, %v409
  %s417 = scalar_lea.vmem %s1, 132
  %418 = vst.msk [vmem:[%s417] ss:$16 sm:$0xc0] %vm410, %v409
  %s419 = scalar_lea.vmem %s0, 16
  %v420 = vld [vmem:[%s419] sm:$0xff]
  %421 = vrot.lane.b32.xlu0 %v420, 124
  %v422 = vpop.permute.xlu0 %421
  %vm423 = vcmask 7168
  %s424 = scalar_lea.vmem %s1, 260
  %425 = vst.msk [vmem:[%s424] ss:$16 sm:$0x3] %vm423, %v422
  %s426 = scalar_lea.vmem %s1, 260
  %427 = vst.msk [vmem:[%s426] ss:$16 sm:$0xc] %vm423, %v422
  %s428 = scalar_lea.vmem %s1, 260
  %429 = vst.msk [vmem:[%s428] ss:$16 sm:$0x30] %vm423, %v422
  %s430 = scalar_lea.vmem %s1, 260
  %431 = vst.msk [vmem:[%s430] ss:$16 sm:$0xc0] %vm423, %v422
  %s432 = scalar_lea.vmem %s0, 24
  %v433 = vld [vmem:[%s432] sm:$0xff]
  %434 = vrot.lane.b32.xlu0 %v433, 124
  %v435 = vpop.permute.xlu0 %434
  %vm436 = vcmask 7168
  %s437 = scalar_lea.vmem %s1, 388
  %438 = vst.msk [vmem:[%s437] ss:$16 sm:$0x3] %vm436, %v435
  %s439 = scalar_lea.vmem %s1, 388
  %440 = vst.msk [vmem:[%s439] ss:$16 sm:$0xc] %vm436, %v435
  %s441 = scalar_lea.vmem %s1, 388
  %442 = vst.msk [vmem:[%s441] ss:$16 sm:$0x30] %vm436, %v435
  %s443 = scalar_lea.vmem %s1, 388
  %444 = vst.msk [vmem:[%s443] ss:$16 sm:$0xc0] %vm436, %v435
  %s445 = scalar_lea.vmem %s0, 32
  %v446 = vld [vmem:[%s445] sm:$0xff]
  %447 = vrot.lane.b32.xlu0 %v446, 124
  %v448 = vpop.permute.xlu0 %447
  %vm449 = vcmask 7168
  %s450 = scalar_lea.vmem %s1, 516
  %451 = vst.msk [vmem:[%s450] ss:$16 sm:$0x3] %vm449, %v448
  %s452 = scalar_lea.vmem %s1, 516
  %453 = vst.msk [vmem:[%s452] ss:$16 sm:$0xc] %vm449, %v448
  %s454 = scalar_lea.vmem %s1, 516
  %455 = vst.msk [vmem:[%s454] ss:$16 sm:$0x30] %vm449, %v448
  %s456 = scalar_lea.vmem %s1, 516
  %457 = vst.msk [vmem:[%s456] ss:$16 sm:$0xc0] %vm449, %v448
  %s458 = scalar_lea.vmem %s0, 40
  %v459 = vld [vmem:[%s458] sm:$0xff]
  %460 = vrot.lane.b32.xlu0 %v459, 124
  %v461 = vpop.permute.xlu0 %460
  %vm462 = vcmask 7168
  %s463 = scalar_lea.vmem %s1, 644
  %464 = vst.msk [vmem:[%s463] ss:$16 sm:$0x3] %vm462, %v461
  %s465 = scalar_lea.vmem %s1, 644
  %466 = vst.msk [vmem:[%s465] ss:$16 sm:$0xc] %vm462, %v461
  %s467 = scalar_lea.vmem %s1, 644
  %468 = vst.msk [vmem:[%s467] ss:$16 sm:$0x30] %vm462, %v461
  %s469 = scalar_lea.vmem %s1, 644
  %470 = vst.msk [vmem:[%s469] ss:$16 sm:$0xc0] %vm462, %v461
  %s471 = scalar_lea.vmem %s0, 48
  %v472 = vld [vmem:[%s471] sm:$0xff]
  %473 = vrot.lane.b32.xlu0 %v472, 124
  %v474 = vpop.permute.xlu0 %473
  %vm475 = vcmask 7168
  %s476 = scalar_lea.vmem %s1, 772
  %477 = vst.msk [vmem:[%s476] ss:$16 sm:$0x3] %vm475, %v474
  %s478 = scalar_lea.vmem %s1, 772
  %479 = vst.msk [vmem:[%s478] ss:$16 sm:$0xc] %vm475, %v474
  %s480 = scalar_lea.vmem %s1, 772
  %481 = vst.msk [vmem:[%s480] ss:$16 sm:$0x30] %vm475, %v474
  %s482 = scalar_lea.vmem %s1, 772
  %483 = vst.msk [vmem:[%s482] ss:$16 sm:$0xc0] %vm475, %v474
  %s484 = scalar_lea.vmem %s0, 56
  %v485 = vld [vmem:[%s484] sm:$0xff]
  %486 = vrot.lane.b32.xlu0 %v485, 124
  %v487 = vpop.permute.xlu0 %486
  %vm488 = vcmask 7168
  %s489 = scalar_lea.vmem %s1, 900
  %490 = vst.msk [vmem:[%s489] ss:$16 sm:$0x3] %vm488, %v487
  %s491 = scalar_lea.vmem %s1, 900
  %492 = vst.msk [vmem:[%s491] ss:$16 sm:$0xc] %vm488, %v487
  %s493 = scalar_lea.vmem %s1, 900
  %494 = vst.msk [vmem:[%s493] ss:$16 sm:$0x30] %vm488, %v487
  %s495 = scalar_lea.vmem %s1, 900
  %496 = vst.msk [vmem:[%s495] ss:$16 sm:$0xc0] %vm488, %v487
  %v497 = vld [vmem:[%s0] sm:$0xff]
  %498 = vrot.lane.b32.xlu0 %v497, 123
  %v499 = vpop.permute.xlu0 %498
  %vm500 = vcmask 7168
  %s501 = scalar_lea.vmem %s1, 5
  %502 = vst.msk [vmem:[%s501] ss:$16 sm:$0x3] %vm500, %v499
  %s503 = scalar_lea.vmem %s1, 5
  %504 = vst.msk [vmem:[%s503] ss:$16 sm:$0xc] %vm500, %v499
  %s505 = scalar_lea.vmem %s1, 5
  %506 = vst.msk [vmem:[%s505] ss:$16 sm:$0x30] %vm500, %v499
  %s507 = scalar_lea.vmem %s1, 5
  %508 = vst.msk [vmem:[%s507] ss:$16 sm:$0xc0] %vm500, %v499
  %s509 = scalar_lea.vmem %s0, 8
  %v510 = vld [vmem:[%s509] sm:$0xff]
  %511 = vrot.lane.b32.xlu0 %v510, 123
  %v512 = vpop.permute.xlu0 %511
  %vm513 = vcmask 7168
  %s514 = scalar_lea.vmem %s1, 133
  %515 = vst.msk [vmem:[%s514] ss:$16 sm:$0x3] %vm513, %v512
  %s516 = scalar_lea.vmem %s1, 133
  %517 = vst.msk [vmem:[%s516] ss:$16 sm:$0xc] %vm513, %v512
  %s518 = scalar_lea.vmem %s1, 133
  %519 = vst.msk [vmem:[%s518] ss:$16 sm:$0x30] %vm513, %v512
  %s520 = scalar_lea.vmem %s1, 133
  %521 = vst.msk [vmem:[%s520] ss:$16 sm:$0xc0] %vm513, %v512
  %s522 = scalar_lea.vmem %s0, 16
  %v523 = vld [vmem:[%s522] sm:$0xff]
  %524 = vrot.lane.b32.xlu0 %v523, 123
  %v525 = vpop.permute.xlu0 %524
  %vm526 = vcmask 7168
  %s527 = scalar_lea.vmem %s1, 261
  %528 = vst.msk [vmem:[%s527] ss:$16 sm:$0x3] %vm526, %v525
  %s529 = scalar_lea.vmem %s1, 261
  %530 = vst.msk [vmem:[%s529] ss:$16 sm:$0xc] %vm526, %v525
  %s531 = scalar_lea.vmem %s1, 261
  %532 = vst.msk [vmem:[%s531] ss:$16 sm:$0x30] %vm526, %v525
  %s533 = scalar_lea.vmem %s1, 261
  %534 = vst.msk [vmem:[%s533] ss:$16 sm:$0xc0] %vm526, %v525
  %s535 = scalar_lea.vmem %s0, 24
  %v536 = vld [vmem:[%s535] sm:$0xff]
  %537 = vrot.lane.b32.xlu0 %v536, 123
  %v538 = vpop.permute.xlu0 %537
  %vm539 = vcmask 7168
  %s540 = scalar_lea.vmem %s1, 389
  %541 = vst.msk [vmem:[%s540] ss:$16 sm:$0x3] %vm539, %v538
  %s542 = scalar_lea.vmem %s1, 389
  %543 = vst.msk [vmem:[%s542] ss:$16 sm:$0xc] %vm539, %v538
  %s544 = scalar_lea.vmem %s1, 389
  %545 = vst.msk [vmem:[%s544] ss:$16 sm:$0x30] %vm539, %v538
  %s546 = scalar_lea.vmem %s1, 389
  %547 = vst.msk [vmem:[%s546] ss:$16 sm:$0xc0] %vm539, %v538
  %s548 = scalar_lea.vmem %s0, 32
  %v549 = vld [vmem:[%s548] sm:$0xff]
  %550 = vrot.lane.b32.xlu0 %v549, 123
  %v551 = vpop.permute.xlu0 %550
  %vm552 = vcmask 7168
  %s553 = scalar_lea.vmem %s1, 517
  %554 = vst.msk [vmem:[%s553] ss:$16 sm:$0x3] %vm552, %v551
  %s555 = scalar_lea.vmem %s1, 517
  %556 = vst.msk [vmem:[%s555] ss:$16 sm:$0xc] %vm552, %v551
  %s557 = scalar_lea.vmem %s1, 517
  %558 = vst.msk [vmem:[%s557] ss:$16 sm:$0x30] %vm552, %v551
  %s559 = scalar_lea.vmem %s1, 517
  %560 = vst.msk [vmem:[%s559] ss:$16 sm:$0xc0] %vm552, %v551
  %s561 = scalar_lea.vmem %s0, 40
  %v562 = vld [vmem:[%s561] sm:$0xff]
  %563 = vrot.lane.b32.xlu0 %v562, 123
  %v564 = vpop.permute.xlu0 %563
  %vm565 = vcmask 7168
  %s566 = scalar_lea.vmem %s1, 645
  %567 = vst.msk [vmem:[%s566] ss:$16 sm:$0x3] %vm565, %v564
  %s568 = scalar_lea.vmem %s1, 645
  %569 = vst.msk [vmem:[%s568] ss:$16 sm:$0xc] %vm565, %v564
  %s570 = scalar_lea.vmem %s1, 645
  %571 = vst.msk [vmem:[%s570] ss:$16 sm:$0x30] %vm565, %v564
  %s572 = scalar_lea.vmem %s1, 645
  %573 = vst.msk [vmem:[%s572] ss:$16 sm:$0xc0] %vm565, %v564
  %s574 = scalar_lea.vmem %s0, 48
  %v575 = vld [vmem:[%s574] sm:$0xff]
  %576 = vrot.lane.b32.xlu0 %v575, 123
  %v577 = vpop.permute.xlu0 %576
  %vm578 = vcmask 7168
  %s579 = scalar_lea.vmem %s1, 773
  %580 = vst.msk [vmem:[%s579] ss:$16 sm:$0x3] %vm578, %v577
  %s581 = scalar_lea.vmem %s1, 773
  %582 = vst.msk [vmem:[%s581] ss:$16 sm:$0xc] %vm578, %v577
  %s583 = scalar_lea.vmem %s1, 773
  %584 = vst.msk [vmem:[%s583] ss:$16 sm:$0x30] %vm578, %v577
  %s585 = scalar_lea.vmem %s1, 773
  %586 = vst.msk [vmem:[%s585] ss:$16 sm:$0xc0] %vm578, %v577
  %s587 = scalar_lea.vmem %s0, 56
  %v588 = vld [vmem:[%s587] sm:$0xff]
  %589 = vrot.lane.b32.xlu0 %v588, 123
  %v590 = vpop.permute.xlu0 %589
  %vm591 = vcmask 7168
  %s592 = scalar_lea.vmem %s1, 901
  %593 = vst.msk [vmem:[%s592] ss:$16 sm:$0x3] %vm591, %v590
  %s594 = scalar_lea.vmem %s1, 901
  %595 = vst.msk [vmem:[%s594] ss:$16 sm:$0xc] %vm591, %v590
  %s596 = scalar_lea.vmem %s1, 901
  %597 = vst.msk [vmem:[%s596] ss:$16 sm:$0x30] %vm591, %v590
  %s598 = scalar_lea.vmem %s1, 901
  %599 = vst.msk [vmem:[%s598] ss:$16 sm:$0xc0] %vm591, %v590
  %v600 = vld [vmem:[%s0] sm:$0xff]
  %601 = vrot.lane.b32.xlu0 %v600, 122
  %v602 = vpop.permute.xlu0 %601
  %vm603 = vcmask 7168
  %s604 = scalar_lea.vmem %s1, 6
  %605 = vst.msk [vmem:[%s604] ss:$16 sm:$0x3] %vm603, %v602
  %s606 = scalar_lea.vmem %s1, 6
  %607 = vst.msk [vmem:[%s606] ss:$16 sm:$0xc] %vm603, %v602
  %s608 = scalar_lea.vmem %s1, 6
  %609 = vst.msk [vmem:[%s608] ss:$16 sm:$0x30] %vm603, %v602
  %s610 = scalar_lea.vmem %s1, 6
  %611 = vst.msk [vmem:[%s610] ss:$16 sm:$0xc0] %vm603, %v602
  %s612 = scalar_lea.vmem %s0, 8
  %v613 = vld [vmem:[%s612] sm:$0xff]
  %614 = vrot.lane.b32.xlu0 %v613, 122
  %v615 = vpop.permute.xlu0 %614
  %vm616 = vcmask 7168
  %s617 = scalar_lea.vmem %s1, 134
  %618 = vst.msk [vmem:[%s617] ss:$16 sm:$0x3] %vm616, %v615
  %s619 = scalar_lea.vmem %s1, 134
  %620 = vst.msk [vmem:[%s619] ss:$16 sm:$0xc] %vm616, %v615
  %s621 = scalar_lea.vmem %s1, 134
  %622 = vst.msk [vmem:[%s621] ss:$16 sm:$0x30] %vm616, %v615
  %s623 = scalar_lea.vmem %s1, 134
  %624 = vst.msk [vmem:[%s623] ss:$16 sm:$0xc0] %vm616, %v615
  %s625 = scalar_lea.vmem %s0, 16
  %v626 = vld [vmem:[%s625] sm:$0xff]
  %627 = vrot.lane.b32.xlu0 %v626, 122
  %v628 = vpop.permute.xlu0 %627
  %vm629 = vcmask 7168
  %s630 = scalar_lea.vmem %s1, 262
  %631 = vst.msk [vmem:[%s630] ss:$16 sm:$0x3] %vm629, %v628
  %s632 = scalar_lea.vmem %s1, 262
  %633 = vst.msk [vmem:[%s632] ss:$16 sm:$0xc] %vm629, %v628
  %s634 = scalar_lea.vmem %s1, 262
  %635 = vst.msk [vmem:[%s634] ss:$16 sm:$0x30] %vm629, %v628
  %s636 = scalar_lea.vmem %s1, 262
  %637 = vst.msk [vmem:[%s636] ss:$16 sm:$0xc0] %vm629, %v628
  %s638 = scalar_lea.vmem %s0, 24
  %v639 = vld [vmem:[%s638] sm:$0xff]
  %640 = vrot.lane.b32.xlu0 %v639, 122
  %v641 = vpop.permute.xlu0 %640
  %vm642 = vcmask 7168
  %s643 = scalar_lea.vmem %s1, 390
  %644 = vst.msk [vmem:[%s643] ss:$16 sm:$0x3] %vm642, %v641
  %s645 = scalar_lea.vmem %s1, 390
  %646 = vst.msk [vmem:[%s645] ss:$16 sm:$0xc] %vm642, %v641
  %s647 = scalar_lea.vmem %s1, 390
  %648 = vst.msk [vmem:[%s647] ss:$16 sm:$0x30] %vm642, %v641
  %s649 = scalar_lea.vmem %s1, 390
  %650 = vst.msk [vmem:[%s649] ss:$16 sm:$0xc0] %vm642, %v641
  %s651 = scalar_lea.vmem %s0, 32
  %v652 = vld [vmem:[%s651] sm:$0xff]
  %653 = vrot.lane.b32.xlu0 %v652, 122
  %v654 = vpop.permute.xlu0 %653
  %vm655 = vcmask 7168
  %s656 = scalar_lea.vmem %s1, 518
  %657 = vst.msk [vmem:[%s656] ss:$16 sm:$0x3] %vm655, %v654
  %s658 = scalar_lea.vmem %s1, 518
  %659 = vst.msk [vmem:[%s658] ss:$16 sm:$0xc] %vm655, %v654
  %s660 = scalar_lea.vmem %s1, 518
  %661 = vst.msk [vmem:[%s660] ss:$16 sm:$0x30] %vm655, %v654
  %s662 = scalar_lea.vmem %s1, 518
  %663 = vst.msk [vmem:[%s662] ss:$16 sm:$0xc0] %vm655, %v654
  %s664 = scalar_lea.vmem %s0, 40
  %v665 = vld [vmem:[%s664] sm:$0xff]
  %666 = vrot.lane.b32.xlu0 %v665, 122
  %v667 = vpop.permute.xlu0 %666
  %vm668 = vcmask 7168
  %s669 = scalar_lea.vmem %s1, 646
  %670 = vst.msk [vmem:[%s669] ss:$16 sm:$0x3] %vm668, %v667
  %s671 = scalar_lea.vmem %s1, 646
  %672 = vst.msk [vmem:[%s671] ss:$16 sm:$0xc] %vm668, %v667
  %s673 = scalar_lea.vmem %s1, 646
  %674 = vst.msk [vmem:[%s673] ss:$16 sm:$0x30] %vm668, %v667
  %s675 = scalar_lea.vmem %s1, 646
  %676 = vst.msk [vmem:[%s675] ss:$16 sm:$0xc0] %vm668, %v667
  %s677 = scalar_lea.vmem %s0, 48
  %v678 = vld [vmem:[%s677] sm:$0xff]
  %679 = vrot.lane.b32.xlu0 %v678, 122
  %v680 = vpop.permute.xlu0 %679
  %vm681 = vcmask 7168
  %s682 = scalar_lea.vmem %s1, 774
  %683 = vst.msk [vmem:[%s682] ss:$16 sm:$0x3] %vm681, %v680
  %s684 = scalar_lea.vmem %s1, 774
  %685 = vst.msk [vmem:[%s684] ss:$16 sm:$0xc] %vm681, %v680
  %s686 = scalar_lea.vmem %s1, 774
  %687 = vst.msk [vmem:[%s686] ss:$16 sm:$0x30] %vm681, %v680
  %s688 = scalar_lea.vmem %s1, 774
  %689 = vst.msk [vmem:[%s688] ss:$16 sm:$0xc0] %vm681, %v680
  %s690 = scalar_lea.vmem %s0, 56
  %v691 = vld [vmem:[%s690] sm:$0xff]
  %692 = vrot.lane.b32.xlu0 %v691, 122
  %v693 = vpop.permute.xlu0 %692
  %vm694 = vcmask 7168
  %s695 = scalar_lea.vmem %s1, 902
  %696 = vst.msk [vmem:[%s695] ss:$16 sm:$0x3] %vm694, %v693
  %s697 = scalar_lea.vmem %s1, 902
  %698 = vst.msk [vmem:[%s697] ss:$16 sm:$0xc] %vm694, %v693
  %s699 = scalar_lea.vmem %s1, 902
  %700 = vst.msk [vmem:[%s699] ss:$16 sm:$0x30] %vm694, %v693
  %s701 = scalar_lea.vmem %s1, 902
  %702 = vst.msk [vmem:[%s701] ss:$16 sm:$0xc0] %vm694, %v693
  %v703 = vld [vmem:[%s0] sm:$0xff]
  %704 = vrot.lane.b32.xlu0 %v703, 121
  %v705 = vpop.permute.xlu0 %704
  %vm706 = vcmask 7168
  %s707 = scalar_lea.vmem %s1, 7
  %708 = vst.msk [vmem:[%s707] ss:$16 sm:$0x3] %vm706, %v705
  %s709 = scalar_lea.vmem %s1, 7
  %710 = vst.msk [vmem:[%s709] ss:$16 sm:$0xc] %vm706, %v705
  %s711 = scalar_lea.vmem %s1, 7
  %712 = vst.msk [vmem:[%s711] ss:$16 sm:$0x30] %vm706, %v705
  %s713 = scalar_lea.vmem %s1, 7
  %714 = vst.msk [vmem:[%s713] ss:$16 sm:$0xc0] %vm706, %v705
  %s715 = scalar_lea.vmem %s0, 8
  %v716 = vld [vmem:[%s715] sm:$0xff]
  %717 = vrot.lane.b32.xlu0 %v716, 121
  %v718 = vpop.permute.xlu0 %717
  %vm719 = vcmask 7168
  %s720 = scalar_lea.vmem %s1, 135
  %721 = vst.msk [vmem:[%s720] ss:$16 sm:$0x3] %vm719, %v718
  %s722 = scalar_lea.vmem %s1, 135
  %723 = vst.msk [vmem:[%s722] ss:$16 sm:$0xc] %vm719, %v718
  %s724 = scalar_lea.vmem %s1, 135
  %725 = vst.msk [vmem:[%s724] ss:$16 sm:$0x30] %vm719, %v718
  %s726 = scalar_lea.vmem %s1, 135
  %727 = vst.msk [vmem:[%s726] ss:$16 sm:$0xc0] %vm719, %v718
  %s728 = scalar_lea.vmem %s0, 16
  %v729 = vld [vmem:[%s728] sm:$0xff]
  %730 = vrot.lane.b32.xlu0 %v729, 121
  %v731 = vpop.permute.xlu0 %730
  %vm732 = vcmask 7168
  %s733 = scalar_lea.vmem %s1, 263
  %734 = vst.msk [vmem:[%s733] ss:$16 sm:$0x3] %vm732, %v731
  %s735 = scalar_lea.vmem %s1, 263
  %736 = vst.msk [vmem:[%s735] ss:$16 sm:$0xc] %vm732, %v731
  %s737 = scalar_lea.vmem %s1, 263
  %738 = vst.msk [vmem:[%s737] ss:$16 sm:$0x30] %vm732, %v731
  %s739 = scalar_lea.vmem %s1, 263
  %740 = vst.msk [vmem:[%s739] ss:$16 sm:$0xc0] %vm732, %v731
  %s741 = scalar_lea.vmem %s0, 24
  %v742 = vld [vmem:[%s741] sm:$0xff]
  %743 = vrot.lane.b32.xlu0 %v742, 121
  %v744 = vpop.permute.xlu0 %743
  %vm745 = vcmask 7168
  %s746 = scalar_lea.vmem %s1, 391
  %747 = vst.msk [vmem:[%s746] ss:$16 sm:$0x3] %vm745, %v744
  %s748 = scalar_lea.vmem %s1, 391
  %749 = vst.msk [vmem:[%s748] ss:$16 sm:$0xc] %vm745, %v744
  %s750 = scalar_lea.vmem %s1, 391
  %751 = vst.msk [vmem:[%s750] ss:$16 sm:$0x30] %vm745, %v744
  %s752 = scalar_lea.vmem %s1, 391
  %753 = vst.msk [vmem:[%s752] ss:$16 sm:$0xc0] %vm745, %v744
  %s754 = scalar_lea.vmem %s0, 32
  %v755 = vld [vmem:[%s754] sm:$0xff]
  %756 = vrot.lane.b32.xlu0 %v755, 121
  %v757 = vpop.permute.xlu0 %756
  %vm758 = vcmask 7168
  %s759 = scalar_lea.vmem %s1, 519
  %760 = vst.msk [vmem:[%s759] ss:$16 sm:$0x3] %vm758, %v757
  %s761 = scalar_lea.vmem %s1, 519
  %762 = vst.msk [vmem:[%s761] ss:$16 sm:$0xc] %vm758, %v757
  %s763 = scalar_lea.vmem %s1, 519
  %764 = vst.msk [vmem:[%s763] ss:$16 sm:$0x30] %vm758, %v757
  %s765 = scalar_lea.vmem %s1, 519
  %766 = vst.msk [vmem:[%s765] ss:$16 sm:$0xc0] %vm758, %v757
  %s767 = scalar_lea.vmem %s0, 40
  %v768 = vld [vmem:[%s767] sm:$0xff]
  %769 = vrot.lane.b32.xlu0 %v768, 121
  %v770 = vpop.permute.xlu0 %769
  %vm771 = vcmask 7168
  %s772 = scalar_lea.vmem %s1, 647
  %773 = vst.msk [vmem:[%s772] ss:$16 sm:$0x3] %vm771, %v770
  %s774 = scalar_lea.vmem %s1, 647
  %775 = vst.msk [vmem:[%s774] ss:$16 sm:$0xc] %vm771, %v770
  %s776 = scalar_lea.vmem %s1, 647
  %777 = vst.msk [vmem:[%s776] ss:$16 sm:$0x30] %vm771, %v770
  %s778 = scalar_lea.vmem %s1, 647
  %779 = vst.msk [vmem:[%s778] ss:$16 sm:$0xc0] %vm771, %v770
  %s780 = scalar_lea.vmem %s0, 48
  %v781 = vld [vmem:[%s780] sm:$0xff]
  %782 = vrot.lane.b32.xlu0 %v781, 121
  %v783 = vpop.permute.xlu0 %782
  %vm784 = vcmask 7168
  %s785 = scalar_lea.vmem %s1, 775
  %786 = vst.msk [vmem:[%s785] ss:$16 sm:$0x3] %vm784, %v783
  %s787 = scalar_lea.vmem %s1, 775
  %788 = vst.msk [vmem:[%s787] ss:$16 sm:$0xc] %vm784, %v783
  %s789 = scalar_lea.vmem %s1, 775
  %790 = vst.msk [vmem:[%s789] ss:$16 sm:$0x30] %vm784, %v783
  %s791 = scalar_lea.vmem %s1, 775
  %792 = vst.msk [vmem:[%s791] ss:$16 sm:$0xc0] %vm784, %v783
  %s793 = scalar_lea.vmem %s0, 56
  %v794 = vld [vmem:[%s793] sm:$0xff]
  %795 = vrot.lane.b32.xlu0 %v794, 121
  %v796 = vpop.permute.xlu0 %795
  %vm797 = vcmask 7168
  %s798 = scalar_lea.vmem %s1, 903
  %799 = vst.msk [vmem:[%s798] ss:$16 sm:$0x3] %vm797, %v796
  %s800 = scalar_lea.vmem %s1, 903
  %801 = vst.msk [vmem:[%s800] ss:$16 sm:$0xc] %vm797, %v796
  %s802 = scalar_lea.vmem %s1, 903
  %803 = vst.msk [vmem:[%s802] ss:$16 sm:$0x30] %vm797, %v796
  %s804 = scalar_lea.vmem %s1, 903
  %805 = vst.msk [vmem:[%s804] ss:$16 sm:$0xc0] %vm797, %v796
  %v806 = vld [vmem:[%s0] sm:$0xff]
  %807 = vrot.lane.b32.xlu0 %v806, 120
  %v808 = vpop.permute.xlu0 %807
  %vm809 = vcmask 7168
  %s810 = scalar_lea.vmem %s1, 8
  %811 = vst.msk [vmem:[%s810] ss:$16 sm:$0x3] %vm809, %v808
  %s812 = scalar_lea.vmem %s1, 8
  %813 = vst.msk [vmem:[%s812] ss:$16 sm:$0xc] %vm809, %v808
  %s814 = scalar_lea.vmem %s1, 8
  %815 = vst.msk [vmem:[%s814] ss:$16 sm:$0x30] %vm809, %v808
  %s816 = scalar_lea.vmem %s1, 8
  %817 = vst.msk [vmem:[%s816] ss:$16 sm:$0xc0] %vm809, %v808
  %s818 = scalar_lea.vmem %s0, 8
  %v819 = vld [vmem:[%s818] sm:$0xff]
  %820 = vrot.lane.b32.xlu0 %v819, 120
  %v821 = vpop.permute.xlu0 %820
  %vm822 = vcmask 7168
  %s823 = scalar_lea.vmem %s1, 136
  %824 = vst.msk [vmem:[%s823] ss:$16 sm:$0x3] %vm822, %v821
  %s825 = scalar_lea.vmem %s1, 136
  %826 = vst.msk [vmem:[%s825] ss:$16 sm:$0xc] %vm822, %v821
  %s827 = scalar_lea.vmem %s1, 136
  %828 = vst.msk [vmem:[%s827] ss:$16 sm:$0x30] %vm822, %v821
  %s829 = scalar_lea.vmem %s1, 136
  %830 = vst.msk [vmem:[%s829] ss:$16 sm:$0xc0] %vm822, %v821
  %s831 = scalar_lea.vmem %s0, 16
  %v832 = vld [vmem:[%s831] sm:$0xff]
  %833 = vrot.lane.b32.xlu0 %v832, 120
  %v834 = vpop.permute.xlu0 %833
  %vm835 = vcmask 7168
  %s836 = scalar_lea.vmem %s1, 264
  %837 = vst.msk [vmem:[%s836] ss:$16 sm:$0x3] %vm835, %v834
  %s838 = scalar_lea.vmem %s1, 264
  %839 = vst.msk [vmem:[%s838] ss:$16 sm:$0xc] %vm835, %v834
  %s840 = scalar_lea.vmem %s1, 264
  %841 = vst.msk [vmem:[%s840] ss:$16 sm:$0x30] %vm835, %v834
  %s842 = scalar_lea.vmem %s1, 264
  %843 = vst.msk [vmem:[%s842] ss:$16 sm:$0xc0] %vm835, %v834
  %s844 = scalar_lea.vmem %s0, 24
  %v845 = vld [vmem:[%s844] sm:$0xff]
  %846 = vrot.lane.b32.xlu0 %v845, 120
  %v847 = vpop.permute.xlu0 %846
  %vm848 = vcmask 7168
  %s849 = scalar_lea.vmem %s1, 392
  %850 = vst.msk [vmem:[%s849] ss:$16 sm:$0x3] %vm848, %v847
  %s851 = scalar_lea.vmem %s1, 392
  %852 = vst.msk [vmem:[%s851] ss:$16 sm:$0xc] %vm848, %v847
  %s853 = scalar_lea.vmem %s1, 392
  %854 = vst.msk [vmem:[%s853] ss:$16 sm:$0x30] %vm848, %v847
  %s855 = scalar_lea.vmem %s1, 392
  %856 = vst.msk [vmem:[%s855] ss:$16 sm:$0xc0] %vm848, %v847
  %s857 = scalar_lea.vmem %s0, 32
  %v858 = vld [vmem:[%s857] sm:$0xff]
  %859 = vrot.lane.b32.xlu0 %v858, 120
  %v860 = vpop.permute.xlu0 %859
  %vm861 = vcmask 7168
  %s862 = scalar_lea.vmem %s1, 520
  %863 = vst.msk [vmem:[%s862] ss:$16 sm:$0x3] %vm861, %v860
  %s864 = scalar_lea.vmem %s1, 520
  %865 = vst.msk [vmem:[%s864] ss:$16 sm:$0xc] %vm861, %v860
  %s866 = scalar_lea.vmem %s1, 520
  %867 = vst.msk [vmem:[%s866] ss:$16 sm:$0x30] %vm861, %v860
  %s868 = scalar_lea.vmem %s1, 520
  %869 = vst.msk [vmem:[%s868] ss:$16 sm:$0xc0] %vm861, %v860
  %s870 = scalar_lea.vmem %s0, 40
  %v871 = vld [vmem:[%s870] sm:$0xff]
  %872 = vrot.lane.b32.xlu0 %v871, 120
  %v873 = vpop.permute.xlu0 %872
  %vm874 = vcmask 7168
  %s875 = scalar_lea.vmem %s1, 648
  %876 = vst.msk [vmem:[%s875] ss:$16 sm:$0x3] %vm874, %v873
  %s877 = scalar_lea.vmem %s1, 648
  %878 = vst.msk [vmem:[%s877] ss:$16 sm:$0xc] %vm874, %v873
  %s879 = scalar_lea.vmem %s1, 648
  %880 = vst.msk [vmem:[%s879] ss:$16 sm:$0x30] %vm874, %v873
  %s881 = scalar_lea.vmem %s1, 648
  %882 = vst.msk [vmem:[%s881] ss:$16 sm:$0xc0] %vm874, %v873
  %s883 = scalar_lea.vmem %s0, 48
  %v884 = vld [vmem:[%s883] sm:$0xff]
  %885 = vrot.lane.b32.xlu0 %v884, 120
  %v886 = vpop.permute.xlu0 %885
  %vm887 = vcmask 7168
  %s888 = scalar_lea.vmem %s1, 776
  %889 = vst.msk [vmem:[%s888] ss:$16 sm:$0x3] %vm887, %v886
  %s890 = scalar_lea.vmem %s1, 776
  %891 = vst.msk [vmem:[%s890] ss:$16 sm:$0xc] %vm887, %v886
  %s892 = scalar_lea.vmem %s1, 776
  %893 = vst.msk [vmem:[%s892] ss:$16 sm:$0x30] %vm887, %v886
  %s894 = scalar_lea.vmem %s1, 776
  %895 = vst.msk [vmem:[%s894] ss:$16 sm:$0xc0] %vm887, %v886
  %s896 = scalar_lea.vmem %s0, 56
  %v897 = vld [vmem:[%s896] sm:$0xff]
  %898 = vrot.lane.b32.xlu0 %v897, 120
  %v899 = vpop.permute.xlu0 %898
  %vm900 = vcmask 7168
  %s901 = scalar_lea.vmem %s1, 904
  %902 = vst.msk [vmem:[%s901] ss:$16 sm:$0x3] %vm900, %v899
  %s903 = scalar_lea.vmem %s1, 904
  %904 = vst.msk [vmem:[%s903] ss:$16 sm:$0xc] %vm900, %v899
  %s905 = scalar_lea.vmem %s1, 904
  %906 = vst.msk [vmem:[%s905] ss:$16 sm:$0x30] %vm900, %v899
  %s907 = scalar_lea.vmem %s1, 904
  %908 = vst.msk [vmem:[%s907] ss:$16 sm:$0xc0] %vm900, %v899
  %v909 = vld [vmem:[%s0] sm:$0xff]
  %910 = vrot.lane.b32.xlu0 %v909, 119
  %v911 = vpop.permute.xlu0 %910
  %vm912 = vcmask 7168
  %s913 = scalar_lea.vmem %s1, 9
  %914 = vst.msk [vmem:[%s913] ss:$16 sm:$0x3] %vm912, %v911
  %s915 = scalar_lea.vmem %s1, 9
  %916 = vst.msk [vmem:[%s915] ss:$16 sm:$0xc] %vm912, %v911
  %s917 = scalar_lea.vmem %s1, 9
  %918 = vst.msk [vmem:[%s917] ss:$16 sm:$0x30] %vm912, %v911
  %s919 = scalar_lea.vmem %s1, 9
  %920 = vst.msk [vmem:[%s919] ss:$16 sm:$0xc0] %vm912, %v911
  %s921 = scalar_lea.vmem %s0, 8
  %v922 = vld [vmem:[%s921] sm:$0xff]
  %923 = vrot.lane.b32.xlu0 %v922, 119
  %v924 = vpop.permute.xlu0 %923
  %vm925 = vcmask 7168
  %s926 = scalar_lea.vmem %s1, 137
  %927 = vst.msk [vmem:[%s926] ss:$16 sm:$0x3] %vm925, %v924
  %s928 = scalar_lea.vmem %s1, 137
  %929 = vst.msk [vmem:[%s928] ss:$16 sm:$0xc] %vm925, %v924
  %s930 = scalar_lea.vmem %s1, 137
  %931 = vst.msk [vmem:[%s930] ss:$16 sm:$0x30] %vm925, %v924
  %s932 = scalar_lea.vmem %s1, 137
  %933 = vst.msk [vmem:[%s932] ss:$16 sm:$0xc0] %vm925, %v924
  %s934 = scalar_lea.vmem %s0, 16
  %v935 = vld [vmem:[%s934] sm:$0xff]
  %936 = vrot.lane.b32.xlu0 %v935, 119
  %v937 = vpop.permute.xlu0 %936
  %vm938 = vcmask 7168
  %s939 = scalar_lea.vmem %s1, 265
  %940 = vst.msk [vmem:[%s939] ss:$16 sm:$0x3] %vm938, %v937
  %s941 = scalar_lea.vmem %s1, 265
  %942 = vst.msk [vmem:[%s941] ss:$16 sm:$0xc] %vm938, %v937
  %s943 = scalar_lea.vmem %s1, 265
  %944 = vst.msk [vmem:[%s943] ss:$16 sm:$0x30] %vm938, %v937
  %s945 = scalar_lea.vmem %s1, 265
  %946 = vst.msk [vmem:[%s945] ss:$16 sm:$0xc0] %vm938, %v937
  %s947 = scalar_lea.vmem %s0, 24
  %v948 = vld [vmem:[%s947] sm:$0xff]
  %949 = vrot.lane.b32.xlu0 %v948, 119
  %v950 = vpop.permute.xlu0 %949
  %vm951 = vcmask 7168
  %s952 = scalar_lea.vmem %s1, 393
  %953 = vst.msk [vmem:[%s952] ss:$16 sm:$0x3] %vm951, %v950
  %s954 = scalar_lea.vmem %s1, 393
  %955 = vst.msk [vmem:[%s954] ss:$16 sm:$0xc] %vm951, %v950
  %s956 = scalar_lea.vmem %s1, 393
  %957 = vst.msk [vmem:[%s956] ss:$16 sm:$0x30] %vm951, %v950
  %s958 = scalar_lea.vmem %s1, 393
  %959 = vst.msk [vmem:[%s958] ss:$16 sm:$0xc0] %vm951, %v950
  %s960 = scalar_lea.vmem %s0, 32
  %v961 = vld [vmem:[%s960] sm:$0xff]
  %962 = vrot.lane.b32.xlu0 %v961, 119
  %v963 = vpop.permute.xlu0 %962
  %vm964 = vcmask 7168
  %s965 = scalar_lea.vmem %s1, 521
  %966 = vst.msk [vmem:[%s965] ss:$16 sm:$0x3] %vm964, %v963
  %s967 = scalar_lea.vmem %s1, 521
  %968 = vst.msk [vmem:[%s967] ss:$16 sm:$0xc] %vm964, %v963
  %s969 = scalar_lea.vmem %s1, 521
  %970 = vst.msk [vmem:[%s969] ss:$16 sm:$0x30] %vm964, %v963
  %s971 = scalar_lea.vmem %s1, 521
  %972 = vst.msk [vmem:[%s971] ss:$16 sm:$0xc0] %vm964, %v963
  %s973 = scalar_lea.vmem %s0, 40
  %v974 = vld [vmem:[%s973] sm:$0xff]
  %975 = vrot.lane.b32.xlu0 %v974, 119
  %v976 = vpop.permute.xlu0 %975
  %vm977 = vcmask 7168
  %s978 = scalar_lea.vmem %s1, 649
  %979 = vst.msk [vmem:[%s978] ss:$16 sm:$0x3] %vm977, %v976
  %s980 = scalar_lea.vmem %s1, 649
  %981 = vst.msk [vmem:[%s980] ss:$16 sm:$0xc] %vm977, %v976
  %s982 = scalar_lea.vmem %s1, 649
  %983 = vst.msk [vmem:[%s982] ss:$16 sm:$0x30] %vm977, %v976
  %s984 = scalar_lea.vmem %s1, 649
  %985 = vst.msk [vmem:[%s984] ss:$16 sm:$0xc0] %vm977, %v976
  %s986 = scalar_lea.vmem %s0, 48
  %v987 = vld [vmem:[%s986] sm:$0xff]
  %988 = vrot.lane.b32.xlu0 %v987, 119
  %v989 = vpop.permute.xlu0 %988
  %vm990 = vcmask 7168
  %s991 = scalar_lea.vmem %s1, 777
  %992 = vst.msk [vmem:[%s991] ss:$16 sm:$0x3] %vm990, %v989
  %s993 = scalar_lea.vmem %s1, 777
  %994 = vst.msk [vmem:[%s993] ss:$16 sm:$0xc] %vm990, %v989
  %s995 = scalar_lea.vmem %s1, 777
  %996 = vst.msk [vmem:[%s995] ss:$16 sm:$0x30] %vm990, %v989
  %s997 = scalar_lea.vmem %s1, 777
  %998 = vst.msk [vmem:[%s997] ss:$16 sm:$0xc0] %vm990, %v989
  %s999 = scalar_lea.vmem %s0, 56
  %v1000 = vld [vmem:[%s999] sm:$0xff]
  %1001 = vrot.lane.b32.xlu0 %v1000, 119
  %v1002 = vpop.permute.xlu0 %1001
  %vm1003 = vcmask 7168
  %s1004 = scalar_lea.vmem %s1, 905
  %1005 = vst.msk [vmem:[%s1004] ss:$16 sm:$0x3] %vm1003, %v1002
  %s1006 = scalar_lea.vmem %s1, 905
  %1007 = vst.msk [vmem:[%s1006] ss:$16 sm:$0xc] %vm1003, %v1002
  %s1008 = scalar_lea.vmem %s1, 905
  %1009 = vst.msk [vmem:[%s1008] ss:$16 sm:$0x30] %vm1003, %v1002
  %s1010 = scalar_lea.vmem %s1, 905
  %1011 = vst.msk [vmem:[%s1010] ss:$16 sm:$0xc0] %vm1003, %v1002
  %v1012 = vld [vmem:[%s0] sm:$0xff]
  %1013 = vrot.lane.b32.xlu0 %v1012, 118
  %v1014 = vpop.permute.xlu0 %1013
  %vm1015 = vcmask 7168
  %s1016 = scalar_lea.vmem %s1, 10
  %1017 = vst.msk [vmem:[%s1016] ss:$16 sm:$0x3] %vm1015, %v1014
  %s1018 = scalar_lea.vmem %s1, 10
  %1019 = vst.msk [vmem:[%s1018] ss:$16 sm:$0xc] %vm1015, %v1014
  %s1020 = scalar_lea.vmem %s1, 10
  %1021 = vst.msk [vmem:[%s1020] ss:$16 sm:$0x30] %vm1015, %v1014
  %s1022 = scalar_lea.vmem %s1, 10
  %1023 = vst.msk [vmem:[%s1022] ss:$16 sm:$0xc0] %vm1015, %v1014
  %s1024 = scalar_lea.vmem %s0, 8
  %v1025 = vld [vmem:[%s1024] sm:$0xff]
  %1026 = vrot.lane.b32.xlu0 %v1025, 118
  %v1027 = vpop.permute.xlu0 %1026
  %vm1028 = vcmask 7168
  %s1029 = scalar_lea.vmem %s1, 138
  %1030 = vst.msk [vmem:[%s1029] ss:$16 sm:$0x3] %vm1028, %v1027
  %s1031 = scalar_lea.vmem %s1, 138
  %1032 = vst.msk [vmem:[%s1031] ss:$16 sm:$0xc] %vm1028, %v1027
  %s1033 = scalar_lea.vmem %s1, 138
  %1034 = vst.msk [vmem:[%s1033] ss:$16 sm:$0x30] %vm1028, %v1027
  %s1035 = scalar_lea.vmem %s1, 138
  %1036 = vst.msk [vmem:[%s1035] ss:$16 sm:$0xc0] %vm1028, %v1027
  %s1037 = scalar_lea.vmem %s0, 16
  %v1038 = vld [vmem:[%s1037] sm:$0xff]
  %1039 = vrot.lane.b32.xlu0 %v1038, 118
  %v1040 = vpop.permute.xlu0 %1039
  %vm1041 = vcmask 7168
  %s1042 = scalar_lea.vmem %s1, 266
  %1043 = vst.msk [vmem:[%s1042] ss:$16 sm:$0x3] %vm1041, %v1040
  %s1044 = scalar_lea.vmem %s1, 266
  %1045 = vst.msk [vmem:[%s1044] ss:$16 sm:$0xc] %vm1041, %v1040
  %s1046 = scalar_lea.vmem %s1, 266
  %1047 = vst.msk [vmem:[%s1046] ss:$16 sm:$0x30] %vm1041, %v1040
  %s1048 = scalar_lea.vmem %s1, 266
  %1049 = vst.msk [vmem:[%s1048] ss:$16 sm:$0xc0] %vm1041, %v1040
  %s1050 = scalar_lea.vmem %s0, 24
  %v1051 = vld [vmem:[%s1050] sm:$0xff]
  %1052 = vrot.lane.b32.xlu0 %v1051, 118
  %v1053 = vpop.permute.xlu0 %1052
  %vm1054 = vcmask 7168
  %s1055 = scalar_lea.vmem %s1, 394
  %1056 = vst.msk [vmem:[%s1055] ss:$16 sm:$0x3] %vm1054, %v1053
  %s1057 = scalar_lea.vmem %s1, 394
  %1058 = vst.msk [vmem:[%s1057] ss:$16 sm:$0xc] %vm1054, %v1053
  %s1059 = scalar_lea.vmem %s1, 394
  %1060 = vst.msk [vmem:[%s1059] ss:$16 sm:$0x30] %vm1054, %v1053
  %s1061 = scalar_lea.vmem %s1, 394
  %1062 = vst.msk [vmem:[%s1061] ss:$16 sm:$0xc0] %vm1054, %v1053
  %s1063 = scalar_lea.vmem %s0, 32
  %v1064 = vld [vmem:[%s1063] sm:$0xff]
  %1065 = vrot.lane.b32.xlu0 %v1064, 118
  %v1066 = vpop.permute.xlu0 %1065
  %vm1067 = vcmask 7168
  %s1068 = scalar_lea.vmem %s1, 522
  %1069 = vst.msk [vmem:[%s1068] ss:$16 sm:$0x3] %vm1067, %v1066
  %s1070 = scalar_lea.vmem %s1, 522
  %1071 = vst.msk [vmem:[%s1070] ss:$16 sm:$0xc] %vm1067, %v1066
  %s1072 = scalar_lea.vmem %s1, 522
  %1073 = vst.msk [vmem:[%s1072] ss:$16 sm:$0x30] %vm1067, %v1066
  %s1074 = scalar_lea.vmem %s1, 522
  %1075 = vst.msk [vmem:[%s1074] ss:$16 sm:$0xc0] %vm1067, %v1066
  %s1076 = scalar_lea.vmem %s0, 40
  %v1077 = vld [vmem:[%s1076] sm:$0xff]
  %1078 = vrot.lane.b32.xlu0 %v1077, 118
  %v1079 = vpop.permute.xlu0 %1078
  %vm1080 = vcmask 7168
  %s1081 = scalar_lea.vmem %s1, 650
  %1082 = vst.msk [vmem:[%s1081] ss:$16 sm:$0x3] %vm1080, %v1079
  %s1083 = scalar_lea.vmem %s1, 650
  %1084 = vst.msk [vmem:[%s1083] ss:$16 sm:$0xc] %vm1080, %v1079
  %s1085 = scalar_lea.vmem %s1, 650
  %1086 = vst.msk [vmem:[%s1085] ss:$16 sm:$0x30] %vm1080, %v1079
  %s1087 = scalar_lea.vmem %s1, 650
  %1088 = vst.msk [vmem:[%s1087] ss:$16 sm:$0xc0] %vm1080, %v1079
  %s1089 = scalar_lea.vmem %s0, 48
  %v1090 = vld [vmem:[%s1089] sm:$0xff]
  %1091 = vrot.lane.b32.xlu0 %v1090, 118
  %v1092 = vpop.permute.xlu0 %1091
  %vm1093 = vcmask 7168
  %s1094 = scalar_lea.vmem %s1, 778
  %1095 = vst.msk [vmem:[%s1094] ss:$16 sm:$0x3] %vm1093, %v1092
  %s1096 = scalar_lea.vmem %s1, 778
  %1097 = vst.msk [vmem:[%s1096] ss:$16 sm:$0xc] %vm1093, %v1092
  %s1098 = scalar_lea.vmem %s1, 778
  %1099 = vst.msk [vmem:[%s1098] ss:$16 sm:$0x30] %vm1093, %v1092
  %s1100 = scalar_lea.vmem %s1, 778
  %1101 = vst.msk [vmem:[%s1100] ss:$16 sm:$0xc0] %vm1093, %v1092
  %s1102 = scalar_lea.vmem %s0, 56
  %v1103 = vld [vmem:[%s1102] sm:$0xff]
  %1104 = vrot.lane.b32.xlu0 %v1103, 118
  %v1105 = vpop.permute.xlu0 %1104
  %vm1106 = vcmask 7168
  %s1107 = scalar_lea.vmem %s1, 906
  %1108 = vst.msk [vmem:[%s1107] ss:$16 sm:$0x3] %vm1106, %v1105
  %s1109 = scalar_lea.vmem %s1, 906
  %1110 = vst.msk [vmem:[%s1109] ss:$16 sm:$0xc] %vm1106, %v1105
  %s1111 = scalar_lea.vmem %s1, 906
  %1112 = vst.msk [vmem:[%s1111] ss:$16 sm:$0x30] %vm1106, %v1105
  %s1113 = scalar_lea.vmem %s1, 906
  %1114 = vst.msk [vmem:[%s1113] ss:$16 sm:$0xc0] %vm1106, %v1105
  %v1115 = vld [vmem:[%s0] sm:$0xff]
  %1116 = vrot.lane.b32.xlu0 %v1115, 117
  %v1117 = vpop.permute.xlu0 %1116
  %vm1118 = vcmask 7168
  %s1119 = scalar_lea.vmem %s1, 11
  %1120 = vst.msk [vmem:[%s1119] ss:$16 sm:$0x3] %vm1118, %v1117
  %s1121 = scalar_lea.vmem %s1, 11
  %1122 = vst.msk [vmem:[%s1121] ss:$16 sm:$0xc] %vm1118, %v1117
  %s1123 = scalar_lea.vmem %s1, 11
  %1124 = vst.msk [vmem:[%s1123] ss:$16 sm:$0x30] %vm1118, %v1117
  %s1125 = scalar_lea.vmem %s1, 11
  %1126 = vst.msk [vmem:[%s1125] ss:$16 sm:$0xc0] %vm1118, %v1117
  %s1127 = scalar_lea.vmem %s0, 8
  %v1128 = vld [vmem:[%s1127] sm:$0xff]
  %1129 = vrot.lane.b32.xlu0 %v1128, 117
  %v1130 = vpop.permute.xlu0 %1129
  %vm1131 = vcmask 7168
  %s1132 = scalar_lea.vmem %s1, 139
  %1133 = vst.msk [vmem:[%s1132] ss:$16 sm:$0x3] %vm1131, %v1130
  %s1134 = scalar_lea.vmem %s1, 139
  %1135 = vst.msk [vmem:[%s1134] ss:$16 sm:$0xc] %vm1131, %v1130
  %s1136 = scalar_lea.vmem %s1, 139
  %1137 = vst.msk [vmem:[%s1136] ss:$16 sm:$0x30] %vm1131, %v1130
  %s1138 = scalar_lea.vmem %s1, 139
  %1139 = vst.msk [vmem:[%s1138] ss:$16 sm:$0xc0] %vm1131, %v1130
  %s1140 = scalar_lea.vmem %s0, 16
  %v1141 = vld [vmem:[%s1140] sm:$0xff]
  %1142 = vrot.lane.b32.xlu0 %v1141, 117
  %v1143 = vpop.permute.xlu0 %1142
  %vm1144 = vcmask 7168
  %s1145 = scalar_lea.vmem %s1, 267
  %1146 = vst.msk [vmem:[%s1145] ss:$16 sm:$0x3] %vm1144, %v1143
  %s1147 = scalar_lea.vmem %s1, 267
  %1148 = vst.msk [vmem:[%s1147] ss:$16 sm:$0xc] %vm1144, %v1143
  %s1149 = scalar_lea.vmem %s1, 267
  %1150 = vst.msk [vmem:[%s1149] ss:$16 sm:$0x30] %vm1144, %v1143
  %s1151 = scalar_lea.vmem %s1, 267
  %1152 = vst.msk [vmem:[%s1151] ss:$16 sm:$0xc0] %vm1144, %v1143
  %s1153 = scalar_lea.vmem %s0, 24
  %v1154 = vld [vmem:[%s1153] sm:$0xff]
  %1155 = vrot.lane.b32.xlu0 %v1154, 117
  %v1156 = vpop.permute.xlu0 %1155
  %vm1157 = vcmask 7168
  %s1158 = scalar_lea.vmem %s1, 395
  %1159 = vst.msk [vmem:[%s1158] ss:$16 sm:$0x3] %vm1157, %v1156
  %s1160 = scalar_lea.vmem %s1, 395
  %1161 = vst.msk [vmem:[%s1160] ss:$16 sm:$0xc] %vm1157, %v1156
  %s1162 = scalar_lea.vmem %s1, 395
  %1163 = vst.msk [vmem:[%s1162] ss:$16 sm:$0x30] %vm1157, %v1156
  %s1164 = scalar_lea.vmem %s1, 395
  %1165 = vst.msk [vmem:[%s1164] ss:$16 sm:$0xc0] %vm1157, %v1156
  %s1166 = scalar_lea.vmem %s0, 32
  %v1167 = vld [vmem:[%s1166] sm:$0xff]
  %1168 = vrot.lane.b32.xlu0 %v1167, 117
  %v1169 = vpop.permute.xlu0 %1168
  %vm1170 = vcmask 7168
  %s1171 = scalar_lea.vmem %s1, 523
  %1172 = vst.msk [vmem:[%s1171] ss:$16 sm:$0x3] %vm1170, %v1169
  %s1173 = scalar_lea.vmem %s1, 523
  %1174 = vst.msk [vmem:[%s1173] ss:$16 sm:$0xc] %vm1170, %v1169
  %s1175 = scalar_lea.vmem %s1, 523
  %1176 = vst.msk [vmem:[%s1175] ss:$16 sm:$0x30] %vm1170, %v1169
  %s1177 = scalar_lea.vmem %s1, 523
  %1178 = vst.msk [vmem:[%s1177] ss:$16 sm:$0xc0] %vm1170, %v1169
  %s1179 = scalar_lea.vmem %s0, 40
  %v1180 = vld [vmem:[%s1179] sm:$0xff]
  %1181 = vrot.lane.b32.xlu0 %v1180, 117
  %v1182 = vpop.permute.xlu0 %1181
  %vm1183 = vcmask 7168
  %s1184 = scalar_lea.vmem %s1, 651
  %1185 = vst.msk [vmem:[%s1184] ss:$16 sm:$0x3] %vm1183, %v1182
  %s1186 = scalar_lea.vmem %s1, 651
  %1187 = vst.msk [vmem:[%s1186] ss:$16 sm:$0xc] %vm1183, %v1182
  %s1188 = scalar_lea.vmem %s1, 651
  %1189 = vst.msk [vmem:[%s1188] ss:$16 sm:$0x30] %vm1183, %v1182
  %s1190 = scalar_lea.vmem %s1, 651
  %1191 = vst.msk [vmem:[%s1190] ss:$16 sm:$0xc0] %vm1183, %v1182
  %s1192 = scalar_lea.vmem %s0, 48
  %v1193 = vld [vmem:[%s1192] sm:$0xff]
  %1194 = vrot.lane.b32.xlu0 %v1193, 117
  %v1195 = vpop.permute.xlu0 %1194
  %vm1196 = vcmask 7168
  %s1197 = scalar_lea.vmem %s1, 779
  %1198 = vst.msk [vmem:[%s1197] ss:$16 sm:$0x3] %vm1196, %v1195
  %s1199 = scalar_lea.vmem %s1, 779
  %1200 = vst.msk [vmem:[%s1199] ss:$16 sm:$0xc] %vm1196, %v1195
  %s1201 = scalar_lea.vmem %s1, 779
  %1202 = vst.msk [vmem:[%s1201] ss:$16 sm:$0x30] %vm1196, %v1195
  %s1203 = scalar_lea.vmem %s1, 779
  %1204 = vst.msk [vmem:[%s1203] ss:$16 sm:$0xc0] %vm1196, %v1195
  %s1205 = scalar_lea.vmem %s0, 56
  %v1206 = vld [vmem:[%s1205] sm:$0xff]
  %1207 = vrot.lane.b32.xlu0 %v1206, 117
  %v1208 = vpop.permute.xlu0 %1207
  %vm1209 = vcmask 7168
  %s1210 = scalar_lea.vmem %s1, 907
  %1211 = vst.msk [vmem:[%s1210] ss:$16 sm:$0x3] %vm1209, %v1208
  %s1212 = scalar_lea.vmem %s1, 907
  %1213 = vst.msk [vmem:[%s1212] ss:$16 sm:$0xc] %vm1209, %v1208
  %s1214 = scalar_lea.vmem %s1, 907
  %1215 = vst.msk [vmem:[%s1214] ss:$16 sm:$0x30] %vm1209, %v1208
  %s1216 = scalar_lea.vmem %s1, 907
  %1217 = vst.msk [vmem:[%s1216] ss:$16 sm:$0xc0] %vm1209, %v1208
  %v1218 = vld [vmem:[%s0] sm:$0xff]
  %1219 = vrot.lane.b32.xlu0 %v1218, 116
  %v1220 = vpop.permute.xlu0 %1219
  %vm1221 = vcmask 7168
  %s1222 = scalar_lea.vmem %s1, 12
  %1223 = vst.msk [vmem:[%s1222] ss:$16 sm:$0x3] %vm1221, %v1220
  %s1224 = scalar_lea.vmem %s1, 12
  %1225 = vst.msk [vmem:[%s1224] ss:$16 sm:$0xc] %vm1221, %v1220
  %s1226 = scalar_lea.vmem %s1, 12
  %1227 = vst.msk [vmem:[%s1226] ss:$16 sm:$0x30] %vm1221, %v1220
  %s1228 = scalar_lea.vmem %s1, 12
  %1229 = vst.msk [vmem:[%s1228] ss:$16 sm:$0xc0] %vm1221, %v1220
  %s1230 = scalar_lea.vmem %s0, 8
  %v1231 = vld [vmem:[%s1230] sm:$0xff]
  %1232 = vrot.lane.b32.xlu0 %v1231, 116
  %v1233 = vpop.permute.xlu0 %1232
  %vm1234 = vcmask 7168
  %s1235 = scalar_lea.vmem %s1, 140
  %1236 = vst.msk [vmem:[%s1235] ss:$16 sm:$0x3] %vm1234, %v1233
  %s1237 = scalar_lea.vmem %s1, 140
  %1238 = vst.msk [vmem:[%s1237] ss:$16 sm:$0xc] %vm1234, %v1233
  %s1239 = scalar_lea.vmem %s1, 140
  %1240 = vst.msk [vmem:[%s1239] ss:$16 sm:$0x30] %vm1234, %v1233
  %s1241 = scalar_lea.vmem %s1, 140
  %1242 = vst.msk [vmem:[%s1241] ss:$16 sm:$0xc0] %vm1234, %v1233
  %s1243 = scalar_lea.vmem %s0, 16
  %v1244 = vld [vmem:[%s1243] sm:$0xff]
  %1245 = vrot.lane.b32.xlu0 %v1244, 116
  %v1246 = vpop.permute.xlu0 %1245
  %vm1247 = vcmask 7168
  %s1248 = scalar_lea.vmem %s1, 268
  %1249 = vst.msk [vmem:[%s1248] ss:$16 sm:$0x3] %vm1247, %v1246
  %s1250 = scalar_lea.vmem %s1, 268
  %1251 = vst.msk [vmem:[%s1250] ss:$16 sm:$0xc] %vm1247, %v1246
  %s1252 = scalar_lea.vmem %s1, 268
  %1253 = vst.msk [vmem:[%s1252] ss:$16 sm:$0x30] %vm1247, %v1246
  %s1254 = scalar_lea.vmem %s1, 268
  %1255 = vst.msk [vmem:[%s1254] ss:$16 sm:$0xc0] %vm1247, %v1246
  %s1256 = scalar_lea.vmem %s0, 24
  %v1257 = vld [vmem:[%s1256] sm:$0xff]
  %1258 = vrot.lane.b32.xlu0 %v1257, 116
  %v1259 = vpop.permute.xlu0 %1258
  %vm1260 = vcmask 7168
  %s1261 = scalar_lea.vmem %s1, 396
  %1262 = vst.msk [vmem:[%s1261] ss:$16 sm:$0x3] %vm1260, %v1259
  %s1263 = scalar_lea.vmem %s1, 396
  %1264 = vst.msk [vmem:[%s1263] ss:$16 sm:$0xc] %vm1260, %v1259
  %s1265 = scalar_lea.vmem %s1, 396
  %1266 = vst.msk [vmem:[%s1265] ss:$16 sm:$0x30] %vm1260, %v1259
  %s1267 = scalar_lea.vmem %s1, 396
  %1268 = vst.msk [vmem:[%s1267] ss:$16 sm:$0xc0] %vm1260, %v1259
  %s1269 = scalar_lea.vmem %s0, 32
  %v1270 = vld [vmem:[%s1269] sm:$0xff]
  %1271 = vrot.lane.b32.xlu0 %v1270, 116
  %v1272 = vpop.permute.xlu0 %1271
  %vm1273 = vcmask 7168
  %s1274 = scalar_lea.vmem %s1, 524
  %1275 = vst.msk [vmem:[%s1274] ss:$16 sm:$0x3] %vm1273, %v1272
  %s1276 = scalar_lea.vmem %s1, 524
  %1277 = vst.msk [vmem:[%s1276] ss:$16 sm:$0xc] %vm1273, %v1272
  %s1278 = scalar_lea.vmem %s1, 524
  %1279 = vst.msk [vmem:[%s1278] ss:$16 sm:$0x30] %vm1273, %v1272
  %s1280 = scalar_lea.vmem %s1, 524
  %1281 = vst.msk [vmem:[%s1280] ss:$16 sm:$0xc0] %vm1273, %v1272
  %s1282 = scalar_lea.vmem %s0, 40
  %v1283 = vld [vmem:[%s1282] sm:$0xff]
  %1284 = vrot.lane.b32.xlu0 %v1283, 116
  %v1285 = vpop.permute.xlu0 %1284
  %vm1286 = vcmask 7168
  %s1287 = scalar_lea.vmem %s1, 652
  %1288 = vst.msk [vmem:[%s1287] ss:$16 sm:$0x3] %vm1286, %v1285
  %s1289 = scalar_lea.vmem %s1, 652
  %1290 = vst.msk [vmem:[%s1289] ss:$16 sm:$0xc] %vm1286, %v1285
  %s1291 = scalar_lea.vmem %s1, 652
  %1292 = vst.msk [vmem:[%s1291] ss:$16 sm:$0x30] %vm1286, %v1285
  %s1293 = scalar_lea.vmem %s1, 652
  %1294 = vst.msk [vmem:[%s1293] ss:$16 sm:$0xc0] %vm1286, %v1285
  %s1295 = scalar_lea.vmem %s0, 48
  %v1296 = vld [vmem:[%s1295] sm:$0xff]
  %1297 = vrot.lane.b32.xlu0 %v1296, 116
  %v1298 = vpop.permute.xlu0 %1297
  %vm1299 = vcmask 7168
  %s1300 = scalar_lea.vmem %s1, 780
  %1301 = vst.msk [vmem:[%s1300] ss:$16 sm:$0x3] %vm1299, %v1298
  %s1302 = scalar_lea.vmem %s1, 780
  %1303 = vst.msk [vmem:[%s1302] ss:$16 sm:$0xc] %vm1299, %v1298
  %s1304 = scalar_lea.vmem %s1, 780
  %1305 = vst.msk [vmem:[%s1304] ss:$16 sm:$0x30] %vm1299, %v1298
  %s1306 = scalar_lea.vmem %s1, 780
  %1307 = vst.msk [vmem:[%s1306] ss:$16 sm:$0xc0] %vm1299, %v1298
  %s1308 = scalar_lea.vmem %s0, 56
  %v1309 = vld [vmem:[%s1308] sm:$0xff]
  %1310 = vrot.lane.b32.xlu0 %v1309, 116
  %v1311 = vpop.permute.xlu0 %1310
  %vm1312 = vcmask 7168
  %s1313 = scalar_lea.vmem %s1, 908
  %1314 = vst.msk [vmem:[%s1313] ss:$16 sm:$0x3] %vm1312, %v1311
  %s1315 = scalar_lea.vmem %s1, 908
  %1316 = vst.msk [vmem:[%s1315] ss:$16 sm:$0xc] %vm1312, %v1311
  %s1317 = scalar_lea.vmem %s1, 908
  %1318 = vst.msk [vmem:[%s1317] ss:$16 sm:$0x30] %vm1312, %v1311
  %s1319 = scalar_lea.vmem %s1, 908
  %1320 = vst.msk [vmem:[%s1319] ss:$16 sm:$0xc0] %vm1312, %v1311
  %v1321 = vld [vmem:[%s0] sm:$0xff]
  %1322 = vrot.lane.b32.xlu0 %v1321, 115
  %v1323 = vpop.permute.xlu0 %1322
  %vm1324 = vcmask 7168
  %s1325 = scalar_lea.vmem %s1, 13
  %1326 = vst.msk [vmem:[%s1325] ss:$16 sm:$0x3] %vm1324, %v1323
  %s1327 = scalar_lea.vmem %s1, 13
  %1328 = vst.msk [vmem:[%s1327] ss:$16 sm:$0xc] %vm1324, %v1323
  %s1329 = scalar_lea.vmem %s1, 13
  %1330 = vst.msk [vmem:[%s1329] ss:$16 sm:$0x30] %vm1324, %v1323
  %s1331 = scalar_lea.vmem %s1, 13
  %1332 = vst.msk [vmem:[%s1331] ss:$16 sm:$0xc0] %vm1324, %v1323
  %s1333 = scalar_lea.vmem %s0, 8
  %v1334 = vld [vmem:[%s1333] sm:$0xff]
  %1335 = vrot.lane.b32.xlu0 %v1334, 115
  %v1336 = vpop.permute.xlu0 %1335
  %vm1337 = vcmask 7168
  %s1338 = scalar_lea.vmem %s1, 141
  %1339 = vst.msk [vmem:[%s1338] ss:$16 sm:$0x3] %vm1337, %v1336
  %s1340 = scalar_lea.vmem %s1, 141
  %1341 = vst.msk [vmem:[%s1340] ss:$16 sm:$0xc] %vm1337, %v1336
  %s1342 = scalar_lea.vmem %s1, 141
  %1343 = vst.msk [vmem:[%s1342] ss:$16 sm:$0x30] %vm1337, %v1336
  %s1344 = scalar_lea.vmem %s1, 141
  %1345 = vst.msk [vmem:[%s1344] ss:$16 sm:$0xc0] %vm1337, %v1336
  %s1346 = scalar_lea.vmem %s0, 16
  %v1347 = vld [vmem:[%s1346] sm:$0xff]
  %1348 = vrot.lane.b32.xlu0 %v1347, 115
  %v1349 = vpop.permute.xlu0 %1348
  %vm1350 = vcmask 7168
  %s1351 = scalar_lea.vmem %s1, 269
  %1352 = vst.msk [vmem:[%s1351] ss:$16 sm:$0x3] %vm1350, %v1349
  %s1353 = scalar_lea.vmem %s1, 269
  %1354 = vst.msk [vmem:[%s1353] ss:$16 sm:$0xc] %vm1350, %v1349
  %s1355 = scalar_lea.vmem %s1, 269
  %1356 = vst.msk [vmem:[%s1355] ss:$16 sm:$0x30] %vm1350, %v1349
  %s1357 = scalar_lea.vmem %s1, 269
  %1358 = vst.msk [vmem:[%s1357] ss:$16 sm:$0xc0] %vm1350, %v1349
  %s1359 = scalar_lea.vmem %s0, 24
  %v1360 = vld [vmem:[%s1359] sm:$0xff]
  %1361 = vrot.lane.b32.xlu0 %v1360, 115
  %v1362 = vpop.permute.xlu0 %1361
  %vm1363 = vcmask 7168
  %s1364 = scalar_lea.vmem %s1, 397
  %1365 = vst.msk [vmem:[%s1364] ss:$16 sm:$0x3] %vm1363, %v1362
  %s1366 = scalar_lea.vmem %s1, 397
  %1367 = vst.msk [vmem:[%s1366] ss:$16 sm:$0xc] %vm1363, %v1362
  %s1368 = scalar_lea.vmem %s1, 397
  %1369 = vst.msk [vmem:[%s1368] ss:$16 sm:$0x30] %vm1363, %v1362
  %s1370 = scalar_lea.vmem %s1, 397
  %1371 = vst.msk [vmem:[%s1370] ss:$16 sm:$0xc0] %vm1363, %v1362
  %s1372 = scalar_lea.vmem %s0, 32
  %v1373 = vld [vmem:[%s1372] sm:$0xff]
  %1374 = vrot.lane.b32.xlu0 %v1373, 115
  %v1375 = vpop.permute.xlu0 %1374
  %vm1376 = vcmask 7168
  %s1377 = scalar_lea.vmem %s1, 525
  %1378 = vst.msk [vmem:[%s1377] ss:$16 sm:$0x3] %vm1376, %v1375
  %s1379 = scalar_lea.vmem %s1, 525
  %1380 = vst.msk [vmem:[%s1379] ss:$16 sm:$0xc] %vm1376, %v1375
  %s1381 = scalar_lea.vmem %s1, 525
  %1382 = vst.msk [vmem:[%s1381] ss:$16 sm:$0x30] %vm1376, %v1375
  %s1383 = scalar_lea.vmem %s1, 525
  %1384 = vst.msk [vmem:[%s1383] ss:$16 sm:$0xc0] %vm1376, %v1375
  %s1385 = scalar_lea.vmem %s0, 40
  %v1386 = vld [vmem:[%s1385] sm:$0xff]
  %1387 = vrot.lane.b32.xlu0 %v1386, 115
  %v1388 = vpop.permute.xlu0 %1387
  %vm1389 = vcmask 7168
  %s1390 = scalar_lea.vmem %s1, 653
  %1391 = vst.msk [vmem:[%s1390] ss:$16 sm:$0x3] %vm1389, %v1388
  %s1392 = scalar_lea.vmem %s1, 653
  %1393 = vst.msk [vmem:[%s1392] ss:$16 sm:$0xc] %vm1389, %v1388
  %s1394 = scalar_lea.vmem %s1, 653
  %1395 = vst.msk [vmem:[%s1394] ss:$16 sm:$0x30] %vm1389, %v1388
  %s1396 = scalar_lea.vmem %s1, 653
  %1397 = vst.msk [vmem:[%s1396] ss:$16 sm:$0xc0] %vm1389, %v1388
  %s1398 = scalar_lea.vmem %s0, 48
  %v1399 = vld [vmem:[%s1398] sm:$0xff]
  %1400 = vrot.lane.b32.xlu0 %v1399, 115
  %v1401 = vpop.permute.xlu0 %1400
  %vm1402 = vcmask 7168
  %s1403 = scalar_lea.vmem %s1, 781
  %1404 = vst.msk [vmem:[%s1403] ss:$16 sm:$0x3] %vm1402, %v1401
  %s1405 = scalar_lea.vmem %s1, 781
  %1406 = vst.msk [vmem:[%s1405] ss:$16 sm:$0xc] %vm1402, %v1401
  %s1407 = scalar_lea.vmem %s1, 781
  %1408 = vst.msk [vmem:[%s1407] ss:$16 sm:$0x30] %vm1402, %v1401
  %s1409 = scalar_lea.vmem %s1, 781
  %1410 = vst.msk [vmem:[%s1409] ss:$16 sm:$0xc0] %vm1402, %v1401
  %s1411 = scalar_lea.vmem %s0, 56
  %v1412 = vld [vmem:[%s1411] sm:$0xff]
  %1413 = vrot.lane.b32.xlu0 %v1412, 115
  %v1414 = vpop.permute.xlu0 %1413
  %vm1415 = vcmask 7168
  %s1416 = scalar_lea.vmem %s1, 909
  %1417 = vst.msk [vmem:[%s1416] ss:$16 sm:$0x3] %vm1415, %v1414
  %s1418 = scalar_lea.vmem %s1, 909
  %1419 = vst.msk [vmem:[%s1418] ss:$16 sm:$0xc] %vm1415, %v1414
  %s1420 = scalar_lea.vmem %s1, 909
  %1421 = vst.msk [vmem:[%s1420] ss:$16 sm:$0x30] %vm1415, %v1414
  %s1422 = scalar_lea.vmem %s1, 909
  %1423 = vst.msk [vmem:[%s1422] ss:$16 sm:$0xc0] %vm1415, %v1414
  %v1424 = vld [vmem:[%s0] sm:$0xff]
  %1425 = vrot.lane.b32.xlu0 %v1424, 114
  %v1426 = vpop.permute.xlu0 %1425
  %vm1427 = vcmask 7168
  %s1428 = scalar_lea.vmem %s1, 14
  %1429 = vst.msk [vmem:[%s1428] ss:$16 sm:$0x3] %vm1427, %v1426
  %s1430 = scalar_lea.vmem %s1, 14
  %1431 = vst.msk [vmem:[%s1430] ss:$16 sm:$0xc] %vm1427, %v1426
  %s1432 = scalar_lea.vmem %s1, 14
  %1433 = vst.msk [vmem:[%s1432] ss:$16 sm:$0x30] %vm1427, %v1426
  %s1434 = scalar_lea.vmem %s1, 14
  %1435 = vst.msk [vmem:[%s1434] ss:$16 sm:$0xc0] %vm1427, %v1426
  %s1436 = scalar_lea.vmem %s0, 8
  %v1437 = vld [vmem:[%s1436] sm:$0xff]
  %1438 = vrot.lane.b32.xlu0 %v1437, 114
  %v1439 = vpop.permute.xlu0 %1438
  %vm1440 = vcmask 7168
  %s1441 = scalar_lea.vmem %s1, 142
  %1442 = vst.msk [vmem:[%s1441] ss:$16 sm:$0x3] %vm1440, %v1439
  %s1443 = scalar_lea.vmem %s1, 142
  %1444 = vst.msk [vmem:[%s1443] ss:$16 sm:$0xc] %vm1440, %v1439
  %s1445 = scalar_lea.vmem %s1, 142
  %1446 = vst.msk [vmem:[%s1445] ss:$16 sm:$0x30] %vm1440, %v1439
  %s1447 = scalar_lea.vmem %s1, 142
  %1448 = vst.msk [vmem:[%s1447] ss:$16 sm:$0xc0] %vm1440, %v1439
  %s1449 = scalar_lea.vmem %s0, 16
  %v1450 = vld [vmem:[%s1449] sm:$0xff]
  %1451 = vrot.lane.b32.xlu0 %v1450, 114
  %v1452 = vpop.permute.xlu0 %1451
  %vm1453 = vcmask 7168
  %s1454 = scalar_lea.vmem %s1, 270
  %1455 = vst.msk [vmem:[%s1454] ss:$16 sm:$0x3] %vm1453, %v1452
  %s1456 = scalar_lea.vmem %s1, 270
  %1457 = vst.msk [vmem:[%s1456] ss:$16 sm:$0xc] %vm1453, %v1452
  %s1458 = scalar_lea.vmem %s1, 270
  %1459 = vst.msk [vmem:[%s1458] ss:$16 sm:$0x30] %vm1453, %v1452
  %s1460 = scalar_lea.vmem %s1, 270
  %1461 = vst.msk [vmem:[%s1460] ss:$16 sm:$0xc0] %vm1453, %v1452
  %s1462 = scalar_lea.vmem %s0, 24
  %v1463 = vld [vmem:[%s1462] sm:$0xff]
  %1464 = vrot.lane.b32.xlu0 %v1463, 114
  %v1465 = vpop.permute.xlu0 %1464
  %vm1466 = vcmask 7168
  %s1467 = scalar_lea.vmem %s1, 398
  %1468 = vst.msk [vmem:[%s1467] ss:$16 sm:$0x3] %vm1466, %v1465
  %s1469 = scalar_lea.vmem %s1, 398
  %1470 = vst.msk [vmem:[%s1469] ss:$16 sm:$0xc] %vm1466, %v1465
  %s1471 = scalar_lea.vmem %s1, 398
  %1472 = vst.msk [vmem:[%s1471] ss:$16 sm:$0x30] %vm1466, %v1465
  %s1473 = scalar_lea.vmem %s1, 398
  %1474 = vst.msk [vmem:[%s1473] ss:$16 sm:$0xc0] %vm1466, %v1465
  %s1475 = scalar_lea.vmem %s0, 32
  %v1476 = vld [vmem:[%s1475] sm:$0xff]
  %1477 = vrot.lane.b32.xlu0 %v1476, 114
  %v1478 = vpop.permute.xlu0 %1477
  %vm1479 = vcmask 7168
  %s1480 = scalar_lea.vmem %s1, 526
  %1481 = vst.msk [vmem:[%s1480] ss:$16 sm:$0x3] %vm1479, %v1478
  %s1482 = scalar_lea.vmem %s1, 526
  %1483 = vst.msk [vmem:[%s1482] ss:$16 sm:$0xc] %vm1479, %v1478
  %s1484 = scalar_lea.vmem %s1, 526
  %1485 = vst.msk [vmem:[%s1484] ss:$16 sm:$0x30] %vm1479, %v1478
  %s1486 = scalar_lea.vmem %s1, 526
  %1487 = vst.msk [vmem:[%s1486] ss:$16 sm:$0xc0] %vm1479, %v1478
  %s1488 = scalar_lea.vmem %s0, 40
  %v1489 = vld [vmem:[%s1488] sm:$0xff]
  %1490 = vrot.lane.b32.xlu0 %v1489, 114
  %v1491 = vpop.permute.xlu0 %1490
  %vm1492 = vcmask 7168
  %s1493 = scalar_lea.vmem %s1, 654
  %1494 = vst.msk [vmem:[%s1493] ss:$16 sm:$0x3] %vm1492, %v1491
  %s1495 = scalar_lea.vmem %s1, 654
  %1496 = vst.msk [vmem:[%s1495] ss:$16 sm:$0xc] %vm1492, %v1491
  %s1497 = scalar_lea.vmem %s1, 654
  %1498 = vst.msk [vmem:[%s1497] ss:$16 sm:$0x30] %vm1492, %v1491
  %s1499 = scalar_lea.vmem %s1, 654
  %1500 = vst.msk [vmem:[%s1499] ss:$16 sm:$0xc0] %vm1492, %v1491
  %s1501 = scalar_lea.vmem %s0, 48
  %v1502 = vld [vmem:[%s1501] sm:$0xff]
  %1503 = vrot.lane.b32.xlu0 %v1502, 114
  %v1504 = vpop.permute.xlu0 %1503
  %vm1505 = vcmask 7168
  %s1506 = scalar_lea.vmem %s1, 782
  %1507 = vst.msk [vmem:[%s1506] ss:$16 sm:$0x3] %vm1505, %v1504
  %s1508 = scalar_lea.vmem %s1, 782
  %1509 = vst.msk [vmem:[%s1508] ss:$16 sm:$0xc] %vm1505, %v1504
  %s1510 = scalar_lea.vmem %s1, 782
  %1511 = vst.msk [vmem:[%s1510] ss:$16 sm:$0x30] %vm1505, %v1504
  %s1512 = scalar_lea.vmem %s1, 782
  %1513 = vst.msk [vmem:[%s1512] ss:$16 sm:$0xc0] %vm1505, %v1504
  %s1514 = scalar_lea.vmem %s0, 56
  %v1515 = vld [vmem:[%s1514] sm:$0xff]
  %1516 = vrot.lane.b32.xlu0 %v1515, 114
  %v1517 = vpop.permute.xlu0 %1516
  %vm1518 = vcmask 7168
  %s1519 = scalar_lea.vmem %s1, 910
  %1520 = vst.msk [vmem:[%s1519] ss:$16 sm:$0x3] %vm1518, %v1517
  %s1521 = scalar_lea.vmem %s1, 910
  %1522 = vst.msk [vmem:[%s1521] ss:$16 sm:$0xc] %vm1518, %v1517
  %s1523 = scalar_lea.vmem %s1, 910
  %1524 = vst.msk [vmem:[%s1523] ss:$16 sm:$0x30] %vm1518, %v1517
  %s1525 = scalar_lea.vmem %s1, 910
  %1526 = vst.msk [vmem:[%s1525] ss:$16 sm:$0xc0] %vm1518, %v1517
  %v1527 = vld [vmem:[%s0] sm:$0xff]
  %1528 = vrot.lane.b32.xlu0 %v1527, 113
  %v1529 = vpop.permute.xlu0 %1528
  %vm1530 = vcmask 7168
  %s1531 = scalar_lea.vmem %s1, 15
  %1532 = vst.msk [vmem:[%s1531] ss:$16 sm:$0x3] %vm1530, %v1529
  %s1533 = scalar_lea.vmem %s1, 15
  %1534 = vst.msk [vmem:[%s1533] ss:$16 sm:$0xc] %vm1530, %v1529
  %s1535 = scalar_lea.vmem %s1, 15
  %1536 = vst.msk [vmem:[%s1535] ss:$16 sm:$0x30] %vm1530, %v1529
  %s1537 = scalar_lea.vmem %s1, 15
  %1538 = vst.msk [vmem:[%s1537] ss:$16 sm:$0xc0] %vm1530, %v1529
  %s1539 = scalar_lea.vmem %s0, 8
  %v1540 = vld [vmem:[%s1539] sm:$0xff]
  %1541 = vrot.lane.b32.xlu0 %v1540, 113
  %v1542 = vpop.permute.xlu0 %1541
  %vm1543 = vcmask 7168
  %s1544 = scalar_lea.vmem %s1, 143
  %1545 = vst.msk [vmem:[%s1544] ss:$16 sm:$0x3] %vm1543, %v1542
  %s1546 = scalar_lea.vmem %s1, 143
  %1547 = vst.msk [vmem:[%s1546] ss:$16 sm:$0xc] %vm1543, %v1542
  %s1548 = scalar_lea.vmem %s1, 143
  %1549 = vst.msk [vmem:[%s1548] ss:$16 sm:$0x30] %vm1543, %v1542
  %s1550 = scalar_lea.vmem %s1, 143
  %1551 = vst.msk [vmem:[%s1550] ss:$16 sm:$0xc0] %vm1543, %v1542
  %s1552 = scalar_lea.vmem %s0, 16
  %v1553 = vld [vmem:[%s1552] sm:$0xff]
  %1554 = vrot.lane.b32.xlu0 %v1553, 113
  %v1555 = vpop.permute.xlu0 %1554
  %vm1556 = vcmask 7168
  %s1557 = scalar_lea.vmem %s1, 271
  %1558 = vst.msk [vmem:[%s1557] ss:$16 sm:$0x3] %vm1556, %v1555
  %s1559 = scalar_lea.vmem %s1, 271
  %1560 = vst.msk [vmem:[%s1559] ss:$16 sm:$0xc] %vm1556, %v1555
  %s1561 = scalar_lea.vmem %s1, 271
  %1562 = vst.msk [vmem:[%s1561] ss:$16 sm:$0x30] %vm1556, %v1555
  %s1563 = scalar_lea.vmem %s1, 271
  %1564 = vst.msk [vmem:[%s1563] ss:$16 sm:$0xc0] %vm1556, %v1555
  %s1565 = scalar_lea.vmem %s0, 24
  %v1566 = vld [vmem:[%s1565] sm:$0xff]
  %1567 = vrot.lane.b32.xlu0 %v1566, 113
  %v1568 = vpop.permute.xlu0 %1567
  %vm1569 = vcmask 7168
  %s1570 = scalar_lea.vmem %s1, 399
  %1571 = vst.msk [vmem:[%s1570] ss:$16 sm:$0x3] %vm1569, %v1568
  %s1572 = scalar_lea.vmem %s1, 399
  %1573 = vst.msk [vmem:[%s1572] ss:$16 sm:$0xc] %vm1569, %v1568
  %s1574 = scalar_lea.vmem %s1, 399
  %1575 = vst.msk [vmem:[%s1574] ss:$16 sm:$0x30] %vm1569, %v1568
  %s1576 = scalar_lea.vmem %s1, 399
  %1577 = vst.msk [vmem:[%s1576] ss:$16 sm:$0xc0] %vm1569, %v1568
  %s1578 = scalar_lea.vmem %s0, 32
  %v1579 = vld [vmem:[%s1578] sm:$0xff]
  %1580 = vrot.lane.b32.xlu0 %v1579, 113
  %v1581 = vpop.permute.xlu0 %1580
  %vm1582 = vcmask 7168
  %s1583 = scalar_lea.vmem %s1, 527
  %1584 = vst.msk [vmem:[%s1583] ss:$16 sm:$0x3] %vm1582, %v1581
  %s1585 = scalar_lea.vmem %s1, 527
  %1586 = vst.msk [vmem:[%s1585] ss:$16 sm:$0xc] %vm1582, %v1581
  %s1587 = scalar_lea.vmem %s1, 527
  %1588 = vst.msk [vmem:[%s1587] ss:$16 sm:$0x30] %vm1582, %v1581
  %s1589 = scalar_lea.vmem %s1, 527
  %1590 = vst.msk [vmem:[%s1589] ss:$16 sm:$0xc0] %vm1582, %v1581
  %s1591 = scalar_lea.vmem %s0, 40
  %v1592 = vld [vmem:[%s1591] sm:$0xff]
  %1593 = vrot.lane.b32.xlu0 %v1592, 113
  %v1594 = vpop.permute.xlu0 %1593
  %vm1595 = vcmask 7168
  %s1596 = scalar_lea.vmem %s1, 655
  %1597 = vst.msk [vmem:[%s1596] ss:$16 sm:$0x3] %vm1595, %v1594
  %s1598 = scalar_lea.vmem %s1, 655
  %1599 = vst.msk [vmem:[%s1598] ss:$16 sm:$0xc] %vm1595, %v1594
  %s1600 = scalar_lea.vmem %s1, 655
  %1601 = vst.msk [vmem:[%s1600] ss:$16 sm:$0x30] %vm1595, %v1594
  %s1602 = scalar_lea.vmem %s1, 655
  %1603 = vst.msk [vmem:[%s1602] ss:$16 sm:$0xc0] %vm1595, %v1594
  %s1604 = scalar_lea.vmem %s0, 48
  %v1605 = vld [vmem:[%s1604] sm:$0xff]
  %1606 = vrot.lane.b32.xlu0 %v1605, 113
  %v1607 = vpop.permute.xlu0 %1606
  %vm1608 = vcmask 7168
  %s1609 = scalar_lea.vmem %s1, 783
  %1610 = vst.msk [vmem:[%s1609] ss:$16 sm:$0x3] %vm1608, %v1607
  %s1611 = scalar_lea.vmem %s1, 783
  %1612 = vst.msk [vmem:[%s1611] ss:$16 sm:$0xc] %vm1608, %v1607
  %s1613 = scalar_lea.vmem %s1, 783
  %1614 = vst.msk [vmem:[%s1613] ss:$16 sm:$0x30] %vm1608, %v1607
  %s1615 = scalar_lea.vmem %s1, 783
  %1616 = vst.msk [vmem:[%s1615] ss:$16 sm:$0xc0] %vm1608, %v1607
  %s1617 = scalar_lea.vmem %s0, 56
  %v1618 = vld [vmem:[%s1617] sm:$0xff]
  %1619 = vrot.lane.b32.xlu0 %v1618, 113
  %v1620 = vpop.permute.xlu0 %1619
  %vm1621 = vcmask 7168
  %s1622 = scalar_lea.vmem %s1, 911
  %1623 = vst.msk [vmem:[%s1622] ss:$16 sm:$0x3] %vm1621, %v1620
  %s1624 = scalar_lea.vmem %s1, 911
  %1625 = vst.msk [vmem:[%s1624] ss:$16 sm:$0xc] %vm1621, %v1620
  %s1626 = scalar_lea.vmem %s1, 911
  %1627 = vst.msk [vmem:[%s1626] ss:$16 sm:$0x30] %vm1621, %v1620
  %s1628 = scalar_lea.vmem %s1, 911
  %1629 = vst.msk [vmem:[%s1628] ss:$16 sm:$0xc0] %vm1621, %v1620

// kernel: tile.18
$region0: #{tile.18}
  #allocation0 [shape = 's32[1]{0}', space=sflag, size = 0x4, scoped, tag = 'scoped memory for tile.18']
  %s0 = inlined_call_operand.vmem [shape: f32[16], index: 0, kind: input, shape index: {}]
  %s1 = inlined_call_operand.vmem [shape: f32[16,16], index: 1, kind: output, shape index: {}]
  // Predicated region
  $region2: #{tile.18} parent=0 // pred_check
    _
  $region3: #{tile.18} parent=0 // pred_check_branch
    %3 = sbr.rel (0) target = $region5
  $region4: #{tile.18} parent=0 // pred_region
    _
  $region5: #{tile.18} parent=0 // pred_fallthru
    _
  %v4 = vld [vmem:[%s0] ss:$0 sm:$0xff]
  %5 = vst [vmem:[%s1] sm:$0xff] %v4
  %s6 = scalar_lea.vmem %s1, 8
  %7 = vst [vmem:[%s6] sm:$0xff] %v4

// kernel: tile.1
$region0: #{tile.1}
  %s0 = inlined_call_operand.vmem [shape: f32[16,16], index: 0, kind: input, shape index: {}]
  %s1 = inlined_call_operand.vmem [shape: f32[256,1], index: 1, kind: output, shape index: {}]
  %v2 = vld [vmem:[%s0] sm:$0xff]
  %vm3 = vcmask 7168
  %4 = vst.msk [vmem:[%s1] ss:$16 sm:$0x3] %vm3, %v2
  %5 = vst.msk [vmem:[%s1] ss:$16 sm:$0xc] %vm3, %v2
  %6 = vst.msk [vmem:[%s1] ss:$16 sm:$0x30] %vm3, %v2
  %7 = vst.msk [vmem:[%s1] ss:$16 sm:$0xc0] %vm3, %v2
  %s8 = scalar_lea.vmem %s0, 8
  %v9 = vld [vmem:[%s8] sm:$0xff]
  %vm10 = vcmask 7168
  %s11 = scalar_lea.vmem %s1, 128
  %12 = vst.msk [vmem:[%s11] ss:$16 sm:$0x3] %vm10, %v9
  %s13 = scalar_lea.vmem %s1, 128
  %14 = vst.msk [vmem:[%s13] ss:$16 sm:$0xc] %vm10, %v9
  %s15 = scalar_lea.vmem %s1, 128
  %16 = vst.msk [vmem:[%s15] ss:$16 sm:$0x30] %vm10, %v9
  %s17 = scalar_lea.vmem %s1, 128
  %18 = vst.msk [vmem:[%s17] ss:$16 sm:$0xc0] %vm10, %v9
  %v19 = vld [vmem:[%s0] sm:$0xff]
  %20 = vrot.lane.b32.xlu0 %v19, 127
  %v21 = vpop.permute.xlu0 %20
  %vm22 = vcmask 7168
  %s23 = scalar_lea.vmem %s1, 1
  %24 = vst.msk [vmem:[%s23] ss:$16 sm:$0x3] %vm22, %v21
  %s25 = scalar_lea.vmem %s1, 1
  %26 = vst.msk [vmem:[%s25] ss:$16 sm:$0xc] %vm22, %v21
  %s27 = scalar_lea.vmem %s1, 1
  %28 = vst.msk [vmem:[%s27] ss:$16 sm:$0x30] %vm22, %v21
  %s29 = scalar_lea.vmem %s1, 1
  %30 = vst.msk [vmem:[%s29] ss:$16 sm:$0xc0] %vm22, %v21
  %s31 = scalar_lea.vmem %s0, 8
  %v32 = vld [vmem:[%s31] sm:$0xff]
  %33 = vrot.lane.b32.xlu0 %v32, 127
  %v34 = vpop.permute.xlu0 %33
  %vm35 = vcmask 7168
  %s36 = scalar_lea.vmem %s1, 129
  %37 = vst.msk [vmem:[%s36] ss:$16 sm:$0x3] %vm35, %v34
  %s38 = scalar_lea.vmem %s1, 129
  %39 = vst.msk [vmem:[%s38] ss:$16 sm:$0xc] %vm35, %v34
  %s40 = scalar_lea.vmem %s1, 129
  %41 = vst.msk [vmem:[%s40] ss:$16 sm:$0x30] %vm35, %v34
  %s42 = scalar_lea.vmem %s1, 129
  %43 = vst.msk [vmem:[%s42] ss:$16 sm:$0xc0] %vm35, %v34
  %v44 = vld [vmem:[%s0] sm:$0xff]
  %45 = vrot.lane.b32.xlu0 %v44, 126
  %v46 = vpop.permute.xlu0 %45
  %vm47 = vcmask 7168
  %s48 = scalar_lea.vmem %s1, 2
  %49 = vst.msk [vmem:[%s48] ss:$16 sm:$0x3] %vm47, %v46
  %s50 = scalar_lea.vmem %s1, 2
  %51 = vst.msk [vmem:[%s50] ss:$16 sm:$0xc] %vm47, %v46
  %s52 = scalar_lea.vmem %s1, 2
  %53 = vst.msk [vmem:[%s52] ss:$16 sm:$0x30] %vm47, %v46
  %s54 = scalar_lea.vmem %s1, 2
  %55 = vst.msk [vmem:[%s54] ss:$16 sm:$0xc0] %vm47, %v46
  %s56 = scalar_lea.vmem %s0, 8
  %v57 = vld [vmem:[%s56] sm:$0xff]
  %58 = vrot.lane.b32.xlu0 %v57, 126
  %v59 = vpop.permute.xlu0 %58
  %vm60 = vcmask 7168
  %s61 = scalar_lea.vmem %s1, 130
  %62 = vst.msk [vmem:[%s61] ss:$16 sm:$0x3] %vm60, %v59
  %s63 = scalar_lea.vmem %s1, 130
  %64 = vst.msk [vmem:[%s63] ss:$16 sm:$0xc] %vm60, %v59
  %s65 = scalar_lea.vmem %s1, 130
  %66 = vst.msk [vmem:[%s65] ss:$16 sm:$0x30] %vm60, %v59
  %s67 = scalar_lea.vmem %s1, 130
  %68 = vst.msk [vmem:[%s67] ss:$16 sm:$0xc0] %vm60, %v59
  %v69 = vld [vmem:[%s0] sm:$0xff]
  %70 = vrot.lane.b32.xlu0 %v69, 125
  %v71 = vpop.permute.xlu0 %70
  %vm72 = vcmask 7168
  %s73 = scalar_lea.vmem %s1, 3
  %74 = vst.msk [vmem:[%s73] ss:$16 sm:$0x3] %vm72, %v71
  %s75 = scalar_lea.vmem %s1, 3
  %76 = vst.msk [vmem:[%s75] ss:$16 sm:$0xc] %vm72, %v71
  %s77 = scalar_lea.vmem %s1, 3
  %78 = vst.msk [vmem:[%s77] ss:$16 sm:$0x30] %vm72, %v71
  %s79 = scalar_lea.vmem %s1, 3
  %80 = vst.msk [vmem:[%s79] ss:$16 sm:$0xc0] %vm72, %v71
  %s81 = scalar_lea.vmem %s0, 8
  %v82 = vld [vmem:[%s81] sm:$0xff]
  %83 = vrot.lane.b32.xlu0 %v82, 125
  %v84 = vpop.permute.xlu0 %83
  %vm85 = vcmask 7168
  %s86 = scalar_lea.vmem %s1, 131
  %87 = vst.msk [vmem:[%s86] ss:$16 sm:$0x3] %vm85, %v84
  %s88 = scalar_lea.vmem %s1, 131
  %89 = vst.msk [vmem:[%s88] ss:$16 sm:$0xc] %vm85, %v84
  %s90 = scalar_lea.vmem %s1, 131
  %91 = vst.msk [vmem:[%s90] ss:$16 sm:$0x30] %vm85, %v84
  %s92 = scalar_lea.vmem %s1, 131
  %93 = vst.msk [vmem:[%s92] ss:$16 sm:$0xc0] %vm85, %v84
  %v94 = vld [vmem:[%s0] sm:$0xff]
  %95 = vrot.lane.b32.xlu0 %v94, 124
  %v96 = vpop.permute.xlu0 %95
  %vm97 = vcmask 7168
  %s98 = scalar_lea.vmem %s1, 4
  %99 = vst.msk [vmem:[%s98] ss:$16 sm:$0x3] %vm97, %v96
  %s100 = scalar_lea.vmem %s1, 4
  %101 = vst.msk [vmem:[%s100] ss:$16 sm:$0xc] %vm97, %v96
  %s102 = scalar_lea.vmem %s1, 4
  %103 = vst.msk [vmem:[%s102] ss:$16 sm:$0x30] %vm97, %v96
  %s104 = scalar_lea.vmem %s1, 4
  %105 = vst.msk [vmem:[%s104] ss:$16 sm:$0xc0] %vm97, %v96
  %s106 = scalar_lea.vmem %s0, 8
  %v107 = vld [vmem:[%s106] sm:$0xff]
  %108 = vrot.lane.b32.xlu0 %v107, 124
  %v109 = vpop.permute.xlu0 %108
  %vm110 = vcmask 7168
  %s111 = scalar_lea.vmem %s1, 132
  %112 = vst.msk [vmem:[%s111] ss:$16 sm:$0x3] %vm110, %v109
  %s113 = scalar_lea.vmem %s1, 132
  %114 = vst.msk [vmem:[%s113] ss:$16 sm:$0xc] %vm110, %v109
  %s115 = scalar_lea.vmem %s1, 132
  %116 = vst.msk [vmem:[%s115] ss:$16 sm:$0x30] %vm110, %v109
  %s117 = scalar_lea.vmem %s1, 132
  %118 = vst.msk [vmem:[%s117] ss:$16 sm:$0xc0] %vm110, %v109
  %v119 = vld [vmem:[%s0] sm:$0xff]
  %120 = vrot.lane.b32.xlu0 %v119, 123
  %v121 = vpop.permute.xlu0 %120
  %vm122 = vcmask 7168
  %s123 = scalar_lea.vmem %s1, 5
  %124 = vst.msk [vmem:[%s123] ss:$16 sm:$0x3] %vm122, %v121
  %s125 = scalar_lea.vmem %s1, 5
  %126 = vst.msk [vmem:[%s125] ss:$16 sm:$0xc] %vm122, %v121
  %s127 = scalar_lea.vmem %s1, 5
  %128 = vst.msk [vmem:[%s127] ss:$16 sm:$0x30] %vm122, %v121
  %s129 = scalar_lea.vmem %s1, 5
  %130 = vst.msk [vmem:[%s129] ss:$16 sm:$0xc0] %vm122, %v121
  %s131 = scalar_lea.vmem %s0, 8
  %v132 = vld [vmem:[%s131] sm:$0xff]
  %133 = vrot.lane.b32.xlu0 %v132, 123
  %v134 = vpop.permute.xlu0 %133
  %vm135 = vcmask 7168
  %s136 = scalar_lea.vmem %s1, 133
  %137 = vst.msk [vmem:[%s136] ss:$16 sm:$0x3] %vm135, %v134
  %s138 = scalar_lea.vmem %s1, 133
  %139 = vst.msk [vmem:[%s138] ss:$16 sm:$0xc] %vm135, %v134
  %s140 = scalar_lea.vmem %s1, 133
  %141 = vst.msk [vmem:[%s140] ss:$16 sm:$0x30] %vm135, %v134
  %s142 = scalar_lea.vmem %s1, 133
  %143 = vst.msk [vmem:[%s142] ss:$16 sm:$0xc0] %vm135, %v134
  %v144 = vld [vmem:[%s0] sm:$0xff]
  %145 = vrot.lane.b32.xlu0 %v144, 122
  %v146 = vpop.permute.xlu0 %145
  %vm147 = vcmask 7168
  %s148 = scalar_lea.vmem %s1, 6
  %149 = vst.msk [vmem:[%s148] ss:$16 sm:$0x3] %vm147, %v146
  %s150 = scalar_lea.vmem %s1, 6
  %151 = vst.msk [vmem:[%s150] ss:$16 sm:$0xc] %vm147, %v146
  %s152 = scalar_lea.vmem %s1, 6
  %153 = vst.msk [vmem:[%s152] ss:$16 sm:$0x30] %vm147, %v146
  %s154 = scalar_lea.vmem %s1, 6
  %155 = vst.msk [vmem:[%s154] ss:$16 sm:$0xc0] %vm147, %v146
  %s156 = scalar_lea.vmem %s0, 8
  %v157 = vld [vmem:[%s156] sm:$0xff]
  %158 = vrot.lane.b32.xlu0 %v157, 122
  %v159 = vpop.permute.xlu0 %158
  %vm160 = vcmask 7168
  %s161 = scalar_lea.vmem %s1, 134
  %162 = vst.msk [vmem:[%s161] ss:$16 sm:$0x3] %vm160, %v159
  %s163 = scalar_lea.vmem %s1, 134
  %164 = vst.msk [vmem:[%s163] ss:$16 sm:$0xc] %vm160, %v159
  %s165 = scalar_lea.vmem %s1, 134
  %166 = vst.msk [vmem:[%s165] ss:$16 sm:$0x30] %vm160, %v159
  %s167 = scalar_lea.vmem %s1, 134
  %168 = vst.msk [vmem:[%s167] ss:$16 sm:$0xc0] %vm160, %v159
  %v169 = vld [vmem:[%s0] sm:$0xff]
  %170 = vrot.lane.b32.xlu0 %v169, 121
  %v171 = vpop.permute.xlu0 %170
  %vm172 = vcmask 7168
  %s173 = scalar_lea.vmem %s1, 7
  %174 = vst.msk [vmem:[%s173] ss:$16 sm:$0x3] %vm172, %v171
  %s175 = scalar_lea.vmem %s1, 7
  %176 = vst.msk [vmem:[%s175] ss:$16 sm:$0xc] %vm172, %v171
  %s177 = scalar_lea.vmem %s1, 7
  %178 = vst.msk [vmem:[%s177] ss:$16 sm:$0x30] %vm172, %v171
  %s179 = scalar_lea.vmem %s1, 7
  %180 = vst.msk [vmem:[%s179] ss:$16 sm:$0xc0] %vm172, %v171
  %s181 = scalar_lea.vmem %s0, 8
  %v182 = vld [vmem:[%s181] sm:$0xff]
  %183 = vrot.lane.b32.xlu0 %v182, 121
  %v184 = vpop.permute.xlu0 %183
  %vm185 = vcmask 7168
  %s186 = scalar_lea.vmem %s1, 135
  %187 = vst.msk [vmem:[%s186] ss:$16 sm:$0x3] %vm185, %v184
  %s188 = scalar_lea.vmem %s1, 135
  %189 = vst.msk [vmem:[%s188] ss:$16 sm:$0xc] %vm185, %v184
  %s190 = scalar_lea.vmem %s1, 135
  %191 = vst.msk [vmem:[%s190] ss:$16 sm:$0x30] %vm185, %v184
  %s192 = scalar_lea.vmem %s1, 135
  %193 = vst.msk [vmem:[%s192] ss:$16 sm:$0xc0] %vm185, %v184
  %v194 = vld [vmem:[%s0] sm:$0xff]
  %195 = vrot.lane.b32.xlu0 %v194, 120
  %v196 = vpop.permute.xlu0 %195
  %vm197 = vcmask 7168
  %s198 = scalar_lea.vmem %s1, 8
  %199 = vst.msk [vmem:[%s198] ss:$16 sm:$0x3] %vm197, %v196
  %s200 = scalar_lea.vmem %s1, 8
  %201 = vst.msk [vmem:[%s200] ss:$16 sm:$0xc] %vm197, %v196
  %s202 = scalar_lea.vmem %s1, 8
  %203 = vst.msk [vmem:[%s202] ss:$16 sm:$0x30] %vm197, %v196
  %s204 = scalar_lea.vmem %s1, 8
  %205 = vst.msk [vmem:[%s204] ss:$16 sm:$0xc0] %vm197, %v196
  %s206 = scalar_lea.vmem %s0, 8
  %v207 = vld [vmem:[%s206] sm:$0xff]
  %208 = vrot.lane.b32.xlu0 %v207, 120
  %v209 = vpop.permute.xlu0 %208
  %vm210 = vcmask 7168
  %s211 = scalar_lea.vmem %s1, 136
  %212 = vst.msk [vmem:[%s211] ss:$16 sm:$0x3] %vm210, %v209
  %s213 = scalar_lea.vmem %s1, 136
  %214 = vst.msk [vmem:[%s213] ss:$16 sm:$0xc] %vm210, %v209
  %s215 = scalar_lea.vmem %s1, 136
  %216 = vst.msk [vmem:[%s215] ss:$16 sm:$0x30] %vm210, %v209
  %s217 = scalar_lea.vmem %s1, 136
  %218 = vst.msk [vmem:[%s217] ss:$16 sm:$0xc0] %vm210, %v209
  %v219 = vld [vmem:[%s0] sm:$0xff]
  %220 = vrot.lane.b32.xlu0 %v219, 119
  %v221 = vpop.permute.xlu0 %220
  %vm222 = vcmask 7168
  %s223 = scalar_lea.vmem %s1, 9
  %224 = vst.msk [vmem:[%s223] ss:$16 sm:$0x3] %vm222, %v221
  %s225 = scalar_lea.vmem %s1, 9
  %226 = vst.msk [vmem:[%s225] ss:$16 sm:$0xc] %vm222, %v221
  %s227 = scalar_lea.vmem %s1, 9
  %228 = vst.msk [vmem:[%s227] ss:$16 sm:$0x30] %vm222, %v221
  %s229 = scalar_lea.vmem %s1, 9
  %230 = vst.msk [vmem:[%s229] ss:$16 sm:$0xc0] %vm222, %v221
  %s231 = scalar_lea.vmem %s0, 8
  %v232 = vld [vmem:[%s231] sm:$0xff]
  %233 = vrot.lane.b32.xlu0 %v232, 119
  %v234 = vpop.permute.xlu0 %233
  %vm235 = vcmask 7168
  %s236 = scalar_lea.vmem %s1, 137
  %237 = vst.msk [vmem:[%s236] ss:$16 sm:$0x3] %vm235, %v234
  %s238 = scalar_lea.vmem %s1, 137
  %239 = vst.msk [vmem:[%s238] ss:$16 sm:$0xc] %vm235, %v234
  %s240 = scalar_lea.vmem %s1, 137
  %241 = vst.msk [vmem:[%s240] ss:$16 sm:$0x30] %vm235, %v234
  %s242 = scalar_lea.vmem %s1, 137
  %243 = vst.msk [vmem:[%s242] ss:$16 sm:$0xc0] %vm235, %v234
  %v244 = vld [vmem:[%s0] sm:$0xff]
  %245 = vrot.lane.b32.xlu0 %v244, 118
  %v246 = vpop.permute.xlu0 %245
  %vm247 = vcmask 7168
  %s248 = scalar_lea.vmem %s1, 10
  %249 = vst.msk [vmem:[%s248] ss:$16 sm:$0x3] %vm247, %v246
  %s250 = scalar_lea.vmem %s1, 10
  %251 = vst.msk [vmem:[%s250] ss:$16 sm:$0xc] %vm247, %v246
  %s252 = scalar_lea.vmem %s1, 10
  %253 = vst.msk [vmem:[%s252] ss:$16 sm:$0x30] %vm247, %v246
  %s254 = scalar_lea.vmem %s1, 10
  %255 = vst.msk [vmem:[%s254] ss:$16 sm:$0xc0] %vm247, %v246
  %s256 = scalar_lea.vmem %s0, 8
  %v257 = vld [vmem:[%s256] sm:$0xff]
  %258 = vrot.lane.b32.xlu0 %v257, 118
  %v259 = vpop.permute.xlu0 %258
  %vm260 = vcmask 7168
  %s261 = scalar_lea.vmem %s1, 138
  %262 = vst.msk [vmem:[%s261] ss:$16 sm:$0x3] %vm260, %v259
  %s263 = scalar_lea.vmem %s1, 138
  %264 = vst.msk [vmem:[%s263] ss:$16 sm:$0xc] %vm260, %v259
  %s265 = scalar_lea.vmem %s1, 138
  %266 = vst.msk [vmem:[%s265] ss:$16 sm:$0x30] %vm260, %v259
  %s267 = scalar_lea.vmem %s1, 138
  %268 = vst.msk [vmem:[%s267] ss:$16 sm:$0xc0] %vm260, %v259
  %v269 = vld [vmem:[%s0] sm:$0xff]
  %270 = vrot.lane.b32.xlu0 %v269, 117
  %v271 = vpop.permute.xlu0 %270
  %vm272 = vcmask 7168
  %s273 = scalar_lea.vmem %s1, 11
  %274 = vst.msk [vmem:[%s273] ss:$16 sm:$0x3] %vm272, %v271
  %s275 = scalar_lea.vmem %s1, 11
  %276 = vst.msk [vmem:[%s275] ss:$16 sm:$0xc] %vm272, %v271
  %s277 = scalar_lea.vmem %s1, 11
  %278 = vst.msk [vmem:[%s277] ss:$16 sm:$0x30] %vm272, %v271
  %s279 = scalar_lea.vmem %s1, 11
  %280 = vst.msk [vmem:[%s279] ss:$16 sm:$0xc0] %vm272, %v271
  %s281 = scalar_lea.vmem %s0, 8
  %v282 = vld [vmem:[%s281] sm:$0xff]
  %283 = vrot.lane.b32.xlu0 %v282, 117
  %v284 = vpop.permute.xlu0 %283
  %vm285 = vcmask 7168
  %s286 = scalar_lea.vmem %s1, 139
  %287 = vst.msk [vmem:[%s286] ss:$16 sm:$0x3] %vm285, %v284
  %s288 = scalar_lea.vmem %s1, 139
  %289 = vst.msk [vmem:[%s288] ss:$16 sm:$0xc] %vm285, %v284
  %s290 = scalar_lea.vmem %s1, 139
  %291 = vst.msk [vmem:[%s290] ss:$16 sm:$0x30] %vm285, %v284
  %s292 = scalar_lea.vmem %s1, 139
  %293 = vst.msk [vmem:[%s292] ss:$16 sm:$0xc0] %vm285, %v284
  %v294 = vld [vmem:[%s0] sm:$0xff]
  %295 = vrot.lane.b32.xlu0 %v294, 116
  %v296 = vpop.permute.xlu0 %295
  %vm297 = vcmask 7168
  %s298 = scalar_lea.vmem %s1, 12
  %299 = vst.msk [vmem:[%s298] ss:$16 sm:$0x3] %vm297, %v296
  %s300 = scalar_lea.vmem %s1, 12
  %301 = vst.msk [vmem:[%s300] ss:$16 sm:$0xc] %vm297, %v296
  %s302 = scalar_lea.vmem %s1, 12
  %303 = vst.msk [vmem:[%s302] ss:$16 sm:$0x30] %vm297, %v296
  %s304 = scalar_lea.vmem %s1, 12
  %305 = vst.msk [vmem:[%s304] ss:$16 sm:$0xc0] %vm297, %v296
  %s306 = scalar_lea.vmem %s0, 8
  %v307 = vld [vmem:[%s306] sm:$0xff]
  %308 = vrot.lane.b32.xlu0 %v307, 116
  %v309 = vpop.permute.xlu0 %308
  %vm310 = vcmask 7168
  %s311 = scalar_lea.vmem %s1, 140
  %312 = vst.msk [vmem:[%s311] ss:$16 sm:$0x3] %vm310, %v309
  %s313 = scalar_lea.vmem %s1, 140
  %314 = vst.msk [vmem:[%s313] ss:$16 sm:$0xc] %vm310, %v309
  %s315 = scalar_lea.vmem %s1, 140
  %316 = vst.msk [vmem:[%s315] ss:$16 sm:$0x30] %vm310, %v309
  %s317 = scalar_lea.vmem %s1, 140
  %318 = vst.msk [vmem:[%s317] ss:$16 sm:$0xc0] %vm310, %v309
  %v319 = vld [vmem:[%s0] sm:$0xff]
  %320 = vrot.lane.b32.xlu0 %v319, 115
  %v321 = vpop.permute.xlu0 %320
  %vm322 = vcmask 7168
  %s323 = scalar_lea.vmem %s1, 13
  %324 = vst.msk [vmem:[%s323] ss:$16 sm:$0x3] %vm322, %v321
  %s325 = scalar_lea.vmem %s1, 13
  %326 = vst.msk [vmem:[%s325] ss:$16 sm:$0xc] %vm322, %v321
  %s327 = scalar_lea.vmem %s1, 13
  %328 = vst.msk [vmem:[%s327] ss:$16 sm:$0x30] %vm322, %v321
  %s329 = scalar_lea.vmem %s1, 13
  %330 = vst.msk [vmem:[%s329] ss:$16 sm:$0xc0] %vm322, %v321
  %s331 = scalar_lea.vmem %s0, 8
  %v332 = vld [vmem:[%s331] sm:$0xff]
  %333 = vrot.lane.b32.xlu0 %v332, 115
  %v334 = vpop.permute.xlu0 %333
  %vm335 = vcmask 7168
  %s336 = scalar_lea.vmem %s1, 141
  %337 = vst.msk [vmem:[%s336] ss:$16 sm:$0x3] %vm335, %v334
  %s338 = scalar_lea.vmem %s1, 141
  %339 = vst.msk [vmem:[%s338] ss:$16 sm:$0xc] %vm335, %v334
  %s340 = scalar_lea.vmem %s1, 141
  %341 = vst.msk [vmem:[%s340] ss:$16 sm:$0x30] %vm335, %v334
  %s342 = scalar_lea.vmem %s1, 141
  %343 = vst.msk [vmem:[%s342] ss:$16 sm:$0xc0] %vm335, %v334
  %v344 = vld [vmem:[%s0] sm:$0xff]
  %345 = vrot.lane.b32.xlu0 %v344, 114
  %v346 = vpop.permute.xlu0 %345
  %vm347 = vcmask 7168
  %s348 = scalar_lea.vmem %s1, 14
  %349 = vst.msk [vmem:[%s348] ss:$16 sm:$0x3] %vm347, %v346
  %s350 = scalar_lea.vmem %s1, 14
  %351 = vst.msk [vmem:[%s350] ss:$16 sm:$0xc] %vm347, %v346
  %s352 = scalar_lea.vmem %s1, 14
  %353 = vst.msk [vmem:[%s352] ss:$16 sm:$0x30] %vm347, %v346
  %s354 = scalar_lea.vmem %s1, 14
  %355 = vst.msk [vmem:[%s354] ss:$16 sm:$0xc0] %vm347, %v346
  %s356 = scalar_lea.vmem %s0, 8
  %v357 = vld [vmem:[%s356] sm:$0xff]
  %358 = vrot.lane.b32.xlu0 %v357, 114
  %v359 = vpop.permute.xlu0 %358
  %vm360 = vcmask 7168
  %s361 = scalar_lea.vmem %s1, 142
  %362 = vst.msk [vmem:[%s361] ss:$16 sm:$0x3] %vm360, %v359
  %s363 = scalar_lea.vmem %s1, 142
  %364 = vst.msk [vmem:[%s363] ss:$16 sm:$0xc] %vm360, %v359
  %s365 = scalar_lea.vmem %s1, 142
  %366 = vst.msk [vmem:[%s365] ss:$16 sm:$0x30] %vm360, %v359
  %s367 = scalar_lea.vmem %s1, 142
  %368 = vst.msk [vmem:[%s367] ss:$16 sm:$0xc0] %vm360, %v359
  %v369 = vld [vmem:[%s0] sm:$0xff]
  %370 = vrot.lane.b32.xlu0 %v369, 113
  %v371 = vpop.permute.xlu0 %370
  %vm372 = vcmask 7168
  %s373 = scalar_lea.vmem %s1, 15
  %374 = vst.msk [vmem:[%s373] ss:$16 sm:$0x3] %vm372, %v371
  %s375 = scalar_lea.vmem %s1, 15
  %376 = vst.msk [vmem:[%s375] ss:$16 sm:$0xc] %vm372, %v371
  %s377 = scalar_lea.vmem %s1, 15
  %378 = vst.msk [vmem:[%s377] ss:$16 sm:$0x30] %vm372, %v371
  %s379 = scalar_lea.vmem %s1, 15
  %380 = vst.msk [vmem:[%s379] ss:$16 sm:$0xc0] %vm372, %v371
  %s381 = scalar_lea.vmem %s0, 8
  %v382 = vld [vmem:[%s381] sm:$0xff]
  %383 = vrot.lane.b32.xlu0 %v382, 113
  %v384 = vpop.permute.xlu0 %383
  %vm385 = vcmask 7168
  %s386 = scalar_lea.vmem %s1, 143
  %387 = vst.msk [vmem:[%s386] ss:$16 sm:$0x3] %vm385, %v384
  %s388 = scalar_lea.vmem %s1, 143
  %389 = vst.msk [vmem:[%s388] ss:$16 sm:$0xc] %vm385, %v384
  %s390 = scalar_lea.vmem %s1, 143
  %391 = vst.msk [vmem:[%s390] ss:$16 sm:$0x30] %vm385, %v384
  %s392 = scalar_lea.vmem %s1, 143
  %393 = vst.msk [vmem:[%s392] ss:$16 sm:$0xc0] %vm385, %v384

// kernel: _lambda_.1
$region0: #{_lambda_.1}
  #allocation0 [shape = 'u32[]', space=smem, size = 0x4, offset = 0x4, fixed_abs, tag = 'smem constant byte address 0x4 - core index']
  #allocation1 [shape = 'u32[144,128]{1,0:T(1,128)}', space=vmem, size = 0x12000, scoped, tag = 'internal scratch']
  %s0 = inlined_call_operand.vmem [shape: bf16[256,8], index: 0, kind: input, shape index: {}]
  %s1 = inlined_call_operand.vmem [shape: bf16[1024,256], index: 1, kind: input, shape index: {}]
  %s2 = inlined_call_operand.vmem [shape: f32[1024,1], index: 2, kind: input, shape index: {}]
  %s3 = inlined_call_operand.vmem [shape: bf16[256,256], index: 3, kind: input, shape index: {}]
  %s4 = inlined_call_operand.vmem [shape: f32[256,1], index: 4, kind: input, shape index: {}]
  %s5 = inlined_call_operand.vmem [shape: bf16[8,256], index: 5, kind: input, shape index: {}]
  %s6 = inlined_call_operand.vmem [shape: f32[8,1], index: 6, kind: input, shape index: {}]
  %s7 = inlined_call_operand.vmem [shape: f32[8,1], index: 7, kind: input, shape index: {}]
  %s8 = inlined_call_operand.vmem [shape: s32[1,8], index: 8, kind: input, shape index: {}]
  %s9 = inlined_call_operand.vmem [shape: f32[8,8], index: 9, kind: output, shape index: {0}]
  %s10 = inlined_call_operand.vmem [shape: f32[8,128], index: 10, kind: output, shape index: {1}]
  %11 = xla_tuple %s9, %s10
  %s12 = sld [smem:[#allocation0]]
  $region54: #{_lambda_.1} parent=0
    _
  %s14 = ssub.s32 1, %s12
  %s15 = scalar_select 0, %s14, %s12
  // Predicated region
  $region2: #{_lambda_.1} parent=0 // pred_check
    _
  $region3: #{_lambda_.1} parent=0 // pred_check_branch
    %17 = sbr.rel (0) target = $region5
  $region4: #{_lambda_.1} parent=0 // pred_region
    _
  $region5: #{_lambda_.1} parent=0 // pred_fallthru
    _
  // Predicated region
  $region6: #{_lambda_.1} parent=0 // pred_check
    _
  $region7: #{_lambda_.1} parent=0 // pred_check_branch
    %19 = sbr.rel (0) target = $region9
  $region8: #{_lambda_.1} parent=0 // pred_region
    _
  $region9: #{_lambda_.1} parent=0 // pred_fallthru
    _
  // Predicated region
  $region10: #{_lambda_.1} parent=0 // pred_check
    _
  $region11: #{_lambda_.1} parent=0 // pred_check_branch
    %21 = sbr.rel (0) target = $region13
  $region12: #{_lambda_.1} parent=0 // pred_region
    _
  $region13: #{_lambda_.1} parent=0 // pred_fallthru
    _
  // Predicated region
  $region14: #{_lambda_.1} parent=0 // pred_check
    _
  $region15: #{_lambda_.1} parent=0 // pred_check_branch
    %23 = sbr.rel (0) target = $region17
  $region16: #{_lambda_.1} parent=0 // pred_region
    _
  $region17: #{_lambda_.1} parent=0 // pred_fallthru
    _
  // Predicated region
  $region18: #{_lambda_.1} parent=0 // pred_check
    _
  $region19: #{_lambda_.1} parent=0 // pred_check_branch
    %25 = sbr.rel (0) target = $region21
  $region20: #{_lambda_.1} parent=0 // pred_region
    _
  $region21: #{_lambda_.1} parent=0 // pred_fallthru
    _
  // Predicated region
  $region22: #{_lambda_.1} parent=0 // pred_check
    _
  $region23: #{_lambda_.1} parent=0 // pred_check_branch
    %27 = sbr.rel (0) target = $region25
  $region24: #{_lambda_.1} parent=0 // pred_region
    _
  $region25: #{_lambda_.1} parent=0 // pred_fallthru
    _
  // Predicated region
  $region26: #{_lambda_.1} parent=0 // pred_check
    _
  $region27: #{_lambda_.1} parent=0 // pred_check_branch
    %29 = sbr.rel (0) target = $region29
  $region28: #{_lambda_.1} parent=0 // pred_region
    _
  $region29: #{_lambda_.1} parent=0 // pred_fallthru
    _
  // Predicated region
  $region30: #{_lambda_.1} parent=0 // pred_check
    _
  $region31: #{_lambda_.1} parent=0 // pred_check_branch
    %31 = sbr.rel (0) target = $region33
  $region32: #{_lambda_.1} parent=0 // pred_region
    _
  $region33: #{_lambda_.1} parent=0 // pred_fallthru
    _
  // Predicated region
  $region34: #{_lambda_.1} parent=0 // pred_check
    _
  $region35: #{_lambda_.1} parent=0 // pred_check_branch
    %33 = sbr.rel (0) target = $region37
  $region36: #{_lambda_.1} parent=0 // pred_region
    _
  $region37: #{_lambda_.1} parent=0 // pred_fallthru
    _
  %v35 = vld [vmem:[%s1] sm:$0xff]
  %v36 = vld [vmem:[%s1 + $0x8] sm:$0xff]
  %v37 = vld [vmem:[%s1 + $0x10] sm:$0xff]
  %v38 = vld [vmem:[%s1 + $0x18] sm:$0xff]
  %v39 = vld [vmem:[%s1 + $0x20] sm:$0xff]
  %v40 = vld [vmem:[%s1 + $0x28] sm:$0xff]
  %v41 = vld [vmem:[%s1 + $0x30] sm:$0xff]
  %v42 = vld [vmem:[%s1 + $0x38] sm:$0xff]
  %v43 = vld [vmem:[%s1 + $0x40] sm:$0xff]
  %v44 = vld [vmem:[%s1 + $0x48] sm:$0xff]
  %v45 = vld [vmem:[%s1 + $0x50] sm:$0xff]
  %v46 = vld [vmem:[%s1 + $0x58] sm:$0xff]
  %v47 = vld [vmem:[%s1 + $0x60] sm:$0xff]
  %v48 = vld [vmem:[%s1 + $0x68] sm:$0xff]
  %v49 = vld [vmem:[%s1 + $0x70] sm:$0xff]
  %v50 = vld [vmem:[%s1 + $0x78] sm:$0xff]
  %v51 = vld [vmem:[%s1 + $0x80] sm:$0xff]
  %v52 = vld [vmem:[%s1 + $0x88] sm:$0xff]
  %v53 = vld [vmem:[%s1 + $0x90] sm:$0xff]
  %v54 = vld [vmem:[%s1 + $0x98] sm:$0xff]
  %v55 = vld [vmem:[%s1 + $0xa0] sm:$0xff]
  %v56 = vld [vmem:[%s1 + $0xa8] sm:$0xff]
  %v57 = vld [vmem:[%s1 + $0xb0] sm:$0xff]
  %v58 = vld [vmem:[%s1 + $0xb8] sm:$0xff]
  %v59 = vld [vmem:[%s1 + $0xc0] sm:$0xff]
  %v60 = vld [vmem:[%s1 + $0xc8] sm:$0xff]
  %v61 = vld [vmem:[%s1 + $0xd0] sm:$0xff]
  %v62 = vld [vmem:[%s1 + $0xd8] sm:$0xff]
  %v63 = vld [vmem:[%s1 + $0xe0] sm:$0xff]
  %v64 = vld [vmem:[%s1 + $0xe8] sm:$0xff]
  %v65 = vld [vmem:[%s1 + $0xf0] sm:$0xff]
  %v66 = vld [vmem:[%s1 + $0xf8] sm:$0xff]
  %v67 = vld [vmem:[%s1 + $0x100] sm:$0xff]
  %v68 = vld [vmem:[%s1 + $0x108] sm:$0xff]
  %v69 = vld [vmem:[%s1 + $0x110] sm:$0xff]
  %v70 = vld [vmem:[%s1 + $0x118] sm:$0xff]
  %v71 = vld [vmem:[%s1 + $0x120] sm:$0xff]
  %v72 = vld [vmem:[%s1 + $0x128] sm:$0xff]
  %v73 = vld [vmem:[%s1 + $0x130] sm:$0xff]
  %v74 = vld [vmem:[%s1 + $0x138] sm:$0xff]
  %v75 = vld [vmem:[%s1 + $0x140] sm:$0xff]
  %v76 = vld [vmem:[%s1 + $0x148] sm:$0xff]
  %v77 = vld [vmem:[%s1 + $0x150] sm:$0xff]
  %v78 = vld [vmem:[%s1 + $0x158] sm:$0xff]
  %v79 = vld [vmem:[%s1 + $0x160] sm:$0xff]
  %v80 = vld [vmem:[%s1 + $0x168] sm:$0xff]
  %v81 = vld [vmem:[%s1 + $0x170] sm:$0xff]
  %v82 = vld [vmem:[%s1 + $0x178] sm:$0xff]
  %v83 = vld [vmem:[%s1 + $0x180] sm:$0xff]
  %v84 = vld [vmem:[%s1 + $0x188] sm:$0xff]
  %v85 = vld [vmem:[%s1 + $0x190] sm:$0xff]
  %v86 = vld [vmem:[%s1 + $0x198] sm:$0xff]
  %v87 = vld [vmem:[%s1 + $0x1a0] sm:$0xff]
  %v88 = vld [vmem:[%s1 + $0x1a8] sm:$0xff]
  %v89 = vld [vmem:[%s1 + $0x1b0] sm:$0xff]
  %v90 = vld [vmem:[%s1 + $0x1b8] sm:$0xff]
  %v91 = vld [vmem:[%s1 + $0x1c0] sm:$0xff]
  %v92 = vld [vmem:[%s1 + $0x1c8] sm:$0xff]
  %v93 = vld [vmem:[%s1 + $0x1d0] sm:$0xff]
  %v94 = vld [vmem:[%s1 + $0x1d8] sm:$0xff]
  %v95 = vld [vmem:[%s1 + $0x1e0] sm:$0xff]
  %v96 = vld [vmem:[%s1 + $0x1e8] sm:$0xff]
  %v97 = vld [vmem:[%s1 + $0x1f0] sm:$0xff]
  %v98 = vld [vmem:[%s1 + $0x1f8] sm:$0xff]
  %v99 = vld [vmem:[%s1 + $0x200] sm:$0xff]
  %v100 = vld [vmem:[%s1 + $0x208] sm:$0xff]
  %v101 = vld [vmem:[%s1 + $0x210] sm:$0xff]
  %v102 = vld [vmem:[%s1 + $0x218] sm:$0xff]
  %v103 = vld [vmem:[%s1 + $0x220] sm:$0xff]
  %v104 = vld [vmem:[%s1 + $0x228] sm:$0xff]
  %v105 = vld [vmem:[%s1 + $0x230] sm:$0xff]
  %v106 = vld [vmem:[%s1 + $0x238] sm:$0xff]
  %v107 = vld [vmem:[%s1 + $0x240] sm:$0xff]
  %v108 = vld [vmem:[%s1 + $0x248] sm:$0xff]
  %v109 = vld [vmem:[%s1 + $0x250] sm:$0xff]
  %v110 = vld [vmem:[%s1 + $0x258] sm:$0xff]
  %v111 = vld [vmem:[%s1 + $0x260] sm:$0xff]
  %v112 = vld [vmem:[%s1 + $0x268] sm:$0xff]
  %v113 = vld [vmem:[%s1 + $0x270] sm:$0xff]
  %v114 = vld [vmem:[%s1 + $0x278] sm:$0xff]
  %v115 = vld [vmem:[%s1 + $0x280] sm:$0xff]
  %v116 = vld [vmem:[%s1 + $0x288] sm:$0xff]
  %v117 = vld [vmem:[%s1 + $0x290] sm:$0xff]
  %v118 = vld [vmem:[%s1 + $0x298] sm:$0xff]
  %v119 = vld [vmem:[%s1 + $0x2a0] sm:$0xff]
  %v120 = vld [vmem:[%s1 + $0x2a8] sm:$0xff]
  %v121 = vld [vmem:[%s1 + $0x2b0] sm:$0xff]
  %v122 = vld [vmem:[%s1 + $0x2b8] sm:$0xff]
  %v123 = vld [vmem:[%s1 + $0x2c0] sm:$0xff]
  %v124 = vld [vmem:[%s1 + $0x2c8] sm:$0xff]
  %v125 = vld [vmem:[%s1 + $0x2d0] sm:$0xff]
  %v126 = vld [vmem:[%s1 + $0x2d8] sm:$0xff]
  %v127 = vld [vmem:[%s1 + $0x2e0] sm:$0xff]
  %v128 = vld [vmem:[%s1 + $0x2e8] sm:$0xff]
  %v129 = vld [vmem:[%s1 + $0x2f0] sm:$0xff]
  %v130 = vld [vmem:[%s1 + $0x2f8] sm:$0xff]
  %v131 = vld [vmem:[%s1 + $0x300] sm:$0xff]
  %v132 = vld [vmem:[%s1 + $0x308] sm:$0xff]
  %v133 = vld [vmem:[%s1 + $0x310] sm:$0xff]
  %v134 = vld [vmem:[%s1 + $0x318] sm:$0xff]
  %v135 = vld [vmem:[%s1 + $0x320] sm:$0xff]
  %v136 = vld [vmem:[%s1 + $0x328] sm:$0xff]
  %v137 = vld [vmem:[%s1 + $0x330] sm:$0xff]
  %v138 = vld [vmem:[%s1 + $0x338] sm:$0xff]
  %v139 = vld [vmem:[%s1 + $0x340] sm:$0xff]
  %v140 = vld [vmem:[%s1 + $0x348] sm:$0xff]
  %v141 = vld [vmem:[%s1 + $0x350] sm:$0xff]
  %v142 = vld [vmem:[%s1 + $0x358] sm:$0xff]
  %v143 = vld [vmem:[%s1 + $0x360] sm:$0xff]
  %v144 = vld [vmem:[%s1 + $0x368] sm:$0xff]
  %v145 = vld [vmem:[%s1 + $0x370] sm:$0xff]
  %v146 = vld [vmem:[%s1 + $0x378] sm:$0xff]
  %v147 = vld [vmem:[%s1 + $0x380] sm:$0xff]
  %v148 = vld [vmem:[%s1 + $0x388] sm:$0xff]
  %v149 = vld [vmem:[%s1 + $0x390] sm:$0xff]
  %v150 = vld [vmem:[%s1 + $0x398] sm:$0xff]
  %v151 = vld [vmem:[%s1 + $0x3a0] sm:$0xff]
  %v152 = vld [vmem:[%s1 + $0x3a8] sm:$0xff]
  %v153 = vld [vmem:[%s1 + $0x3b0] sm:$0xff]
  %v154 = vld [vmem:[%s1 + $0x3b8] sm:$0xff]
  %v155 = vld [vmem:[%s1 + $0x3c0] sm:$0xff]
  %v156 = vld [vmem:[%s1 + $0x3c8] sm:$0xff]
  %v157 = vld [vmem:[%s1 + $0x3d0] sm:$0xff]
  %v158 = vld [vmem:[%s1 + $0x3d8] sm:$0xff]
  %v159 = vld [vmem:[%s1 + $0x3e0] sm:$0xff]
  %v160 = vld [vmem:[%s1 + $0x3e8] sm:$0xff]
  %v161 = vld [vmem:[%s1 + $0x3f0] sm:$0xff]
  %v162 = vld [vmem:[%s1 + $0x3f8] sm:$0xff]
  %v163 = vld [vmem:[%s0] sm:$0xf]
  %v164 = vld [vmem:[%s0 + $0x4] sm:$0xf]
  %v165 = vld [vmem:[%s0 + $0x8] sm:$0xf]
  %v166 = vld [vmem:[%s0 + $0xc] sm:$0xf]
  %v167 = vld [vmem:[%s0 + $0x10] sm:$0xf]
  %v168 = vld [vmem:[%s0 + $0x14] sm:$0xf]
  %v169 = vld [vmem:[%s0 + $0x18] sm:$0xf]
  %v170 = vld [vmem:[%s0 + $0x1c] sm:$0xf]
  %v171 = vld [vmem:[%s0 + $0x20] sm:$0xf]
  %v172 = vld [vmem:[%s0 + $0x24] sm:$0xf]
  %v173 = vld [vmem:[%s0 + $0x28] sm:$0xf]
  %v174 = vld [vmem:[%s0 + $0x2c] sm:$0xf]
  %v175 = vld [vmem:[%s0 + $0x30] sm:$0xf]
  %v176 = vld [vmem:[%s0 + $0x34] sm:$0xf]
  %v177 = vld [vmem:[%s0 + $0x38] sm:$0xf]
  %v178 = vld [vmem:[%s0 + $0x3c] sm:$0xf]
  %v179 = vld [vmem:[%s0 + $0x40] sm:$0xf]
  %v180 = vld [vmem:[%s0 + $0x44] sm:$0xf]
  %v181 = vld [vmem:[%s0 + $0x48] sm:$0xf]
  %v182 = vld [vmem:[%s0 + $0x4c] sm:$0xf]
  %v183 = vld [vmem:[%s0 + $0x50] sm:$0xf]
  %v184 = vld [vmem:[%s0 + $0x54] sm:$0xf]
  %v185 = vld [vmem:[%s0 + $0x58] sm:$0xf]
  %v186 = vld [vmem:[%s0 + $0x5c] sm:$0xf]
  %v187 = vld [vmem:[%s0 + $0x60] sm:$0xf]
  %v188 = vld [vmem:[%s0 + $0x64] sm:$0xf]
  %v189 = vld [vmem:[%s0 + $0x68] sm:$0xf]
  %v190 = vld [vmem:[%s0 + $0x6c] sm:$0xf]
  %v191 = vld [vmem:[%s0 + $0x70] sm:$0xf]
  %v192 = vld [vmem:[%s0 + $0x74] sm:$0xf]
  %v193 = vld [vmem:[%s0 + $0x78] sm:$0xf]
  %v194 = vld [vmem:[%s0 + $0x7c] sm:$0xf]
  %v195 = vld [vmem:[%s2] sm:$0xff]
  %v196 = vld [vmem:[%s2 + $0x8] sm:$0xff]
  %v197 = vld [vmem:[%s2 + $0x10] sm:$0xff]
  %v198 = vld [vmem:[%s2 + $0x18] sm:$0xff]
  %v199 = vld [vmem:[%s2 + $0x20] sm:$0xff]
  %v200 = vld [vmem:[%s2 + $0x28] sm:$0xff]
  %v201 = vld [vmem:[%s2 + $0x30] sm:$0xff]
  %v202 = vld [vmem:[%s2 + $0x38] sm:$0xff]
  %v203 = vld [vmem:[%s2 + $0x40] sm:$0xff]
  %v204 = vld [vmem:[%s2 + $0x48] sm:$0xff]
  %v205 = vld [vmem:[%s2 + $0x50] sm:$0xff]
  %v206 = vld [vmem:[%s2 + $0x58] sm:$0xff]
  %v207 = vld [vmem:[%s2 + $0x60] sm:$0xff]
  %v208 = vld [vmem:[%s2 + $0x68] sm:$0xff]
  %v209 = vld [vmem:[%s2 + $0x70] sm:$0xff]
  %v210 = vld [vmem:[%s2 + $0x78] sm:$0xff]
  %v211 = vld [vmem:[%s2 + $0x80] sm:$0xff]
  %v212 = vld [vmem:[%s2 + $0x88] sm:$0xff]
  %v213 = vld [vmem:[%s2 + $0x90] sm:$0xff]
  %v214 = vld [vmem:[%s2 + $0x98] sm:$0xff]
  %v215 = vld [vmem:[%s2 + $0xa0] sm:$0xff]
  %v216 = vld [vmem:[%s2 + $0xa8] sm:$0xff]
  %v217 = vld [vmem:[%s2 + $0xb0] sm:$0xff]
  %v218 = vld [vmem:[%s2 + $0xb8] sm:$0xff]
  %v219 = vld [vmem:[%s2 + $0xc0] sm:$0xff]
  %v220 = vld [vmem:[%s2 + $0xc8] sm:$0xff]
  %v221 = vld [vmem:[%s2 + $0xd0] sm:$0xff]
  %v222 = vld [vmem:[%s2 + $0xd8] sm:$0xff]
  %v223 = vld [vmem:[%s2 + $0xe0] sm:$0xff]
  %v224 = vld [vmem:[%s2 + $0xe8] sm:$0xff]
  %v225 = vld [vmem:[%s2 + $0xf0] sm:$0xff]
  %v226 = vld [vmem:[%s2 + $0xf8] sm:$0xff]
  %v227 = vld [vmem:[%s2 + $0x100] sm:$0xff]
  %v228 = vld [vmem:[%s2 + $0x108] sm:$0xff]
  %v229 = vld [vmem:[%s2 + $0x110] sm:$0xff]
  %v230 = vld [vmem:[%s2 + $0x118] sm:$0xff]
  %v231 = vld [vmem:[%s2 + $0x120] sm:$0xff]
  %v232 = vld [vmem:[%s2 + $0x128] sm:$0xff]
  %v233 = vld [vmem:[%s2 + $0x130] sm:$0xff]
  %v234 = vld [vmem:[%s2 + $0x138] sm:$0xff]
  %v235 = vld [vmem:[%s2 + $0x140] sm:$0xff]
  %v236 = vld [vmem:[%s2 + $0x148] sm:$0xff]
  %v237 = vld [vmem:[%s2 + $0x150] sm:$0xff]
  %v238 = vld [vmem:[%s2 + $0x158] sm:$0xff]
  %v239 = vld [vmem:[%s2 + $0x160] sm:$0xff]
  %v240 = vld [vmem:[%s2 + $0x168] sm:$0xff]
  %v241 = vld [vmem:[%s2 + $0x170] sm:$0xff]
  %v242 = vld [vmem:[%s2 + $0x178] sm:$0xff]
  %v243 = vld [vmem:[%s2 + $0x180] sm:$0xff]
  %v244 = vld [vmem:[%s2 + $0x188] sm:$0xff]
  %v245 = vld [vmem:[%s2 + $0x190] sm:$0xff]
  %v246 = vld [vmem:[%s2 + $0x198] sm:$0xff]
  %v247 = vld [vmem:[%s2 + $0x1a0] sm:$0xff]
  %v248 = vld [vmem:[%s2 + $0x1a8] sm:$0xff]
  %v249 = vld [vmem:[%s2 + $0x1b0] sm:$0xff]
  %v250 = vld [vmem:[%s2 + $0x1b8] sm:$0xff]
  %v251 = vld [vmem:[%s2 + $0x1c0] sm:$0xff]
  %v252 = vld [vmem:[%s2 + $0x1c8] sm:$0xff]
  %v253 = vld [vmem:[%s2 + $0x1d0] sm:$0xff]
  %v254 = vld [vmem:[%s2 + $0x1d8] sm:$0xff]
  %v255 = vld [vmem:[%s2 + $0x1e0] sm:$0xff]
  %v256 = vld [vmem:[%s2 + $0x1e8] sm:$0xff]
  %v257 = vld [vmem:[%s2 + $0x1f0] sm:$0xff]
  %v258 = vld [vmem:[%s2 + $0x1f8] sm:$0xff]
  %v259 = vld [vmem:[%s2 + $0x200] sm:$0xff]
  %v260 = vld [vmem:[%s2 + $0x208] sm:$0xff]
  %v261 = vld [vmem:[%s2 + $0x210] sm:$0xff]
  %v262 = vld [vmem:[%s2 + $0x218] sm:$0xff]
  %v263 = vld [vmem:[%s2 + $0x220] sm:$0xff]
  %v264 = vld [vmem:[%s2 + $0x228] sm:$0xff]
  %v265 = vld [vmem:[%s2 + $0x230] sm:$0xff]
  %v266 = vld [vmem:[%s2 + $0x238] sm:$0xff]
  %v267 = vld [vmem:[%s2 + $0x240] sm:$0xff]
  %v268 = vld [vmem:[%s2 + $0x248] sm:$0xff]
  %v269 = vld [vmem:[%s2 + $0x250] sm:$0xff]
  %v270 = vld [vmem:[%s2 + $0x258] sm:$0xff]
  %v271 = vld [vmem:[%s2 + $0x260] sm:$0xff]
  %v272 = vld [vmem:[%s2 + $0x268] sm:$0xff]
  %v273 = vld [vmem:[%s2 + $0x270] sm:$0xff]
  %v274 = vld [vmem:[%s2 + $0x278] sm:$0xff]
  %v275 = vld [vmem:[%s2 + $0x280] sm:$0xff]
  %v276 = vld [vmem:[%s2 + $0x288] sm:$0xff]
  %v277 = vld [vmem:[%s2 + $0x290] sm:$0xff]
  %v278 = vld [vmem:[%s2 + $0x298] sm:$0xff]
  %v279 = vld [vmem:[%s2 + $0x2a0] sm:$0xff]
  %v280 = vld [vmem:[%s2 + $0x2a8] sm:$0xff]
  %v281 = vld [vmem:[%s2 + $0x2b0] sm:$0xff]
  %v282 = vld [vmem:[%s2 + $0x2b8] sm:$0xff]
  %v283 = vld [vmem:[%s2 + $0x2c0] sm:$0xff]
  %v284 = vld [vmem:[%s2 + $0x2c8] sm:$0xff]
  %v285 = vld [vmem:[%s2 + $0x2d0] sm:$0xff]
  %v286 = vld [vmem:[%s2 + $0x2d8] sm:$0xff]
  %v287 = vld [vmem:[%s2 + $0x2e0] sm:$0xff]
  %v288 = vld [vmem:[%s2 + $0x2e8] sm:$0xff]
  %v289 = vld [vmem:[%s2 + $0x2f0] sm:$0xff]
  %v290 = vld [vmem:[%s2 + $0x2f8] sm:$0xff]
  %v291 = vld [vmem:[%s2 + $0x300] sm:$0xff]
  %v292 = vld [vmem:[%s2 + $0x308] sm:$0xff]
  %v293 = vld [vmem:[%s2 + $0x310] sm:$0xff]
  %v294 = vld [vmem:[%s2 + $0x318] sm:$0xff]
  %v295 = vld [vmem:[%s2 + $0x320] sm:$0xff]
  %v296 = vld [vmem:[%s2 + $0x328] sm:$0xff]
  %v297 = vld [vmem:[%s2 + $0x330] sm:$0xff]
  %v298 = vld [vmem:[%s2 + $0x338] sm:$0xff]
  %v299 = vld [vmem:[%s2 + $0x340] sm:$0xff]
  %v300 = vld [vmem:[%s2 + $0x348] sm:$0xff]
  %v301 = vld [vmem:[%s2 + $0x350] sm:$0xff]
  %v302 = vld [vmem:[%s2 + $0x358] sm:$0xff]
  %v303 = vld [vmem:[%s2 + $0x360] sm:$0xff]
  %v304 = vld [vmem:[%s2 + $0x368] sm:$0xff]
  %v305 = vld [vmem:[%s2 + $0x370] sm:$0xff]
  %v306 = vld [vmem:[%s2 + $0x378] sm:$0xff]
  %v307 = vld [vmem:[%s2 + $0x380] sm:$0xff]
  %v308 = vld [vmem:[%s2 + $0x388] sm:$0xff]
  %v309 = vld [vmem:[%s2 + $0x390] sm:$0xff]
  %v310 = vld [vmem:[%s2 + $0x398] sm:$0xff]
  %v311 = vld [vmem:[%s2 + $0x3a0] sm:$0xff]
  %v312 = vld [vmem:[%s2 + $0x3a8] sm:$0xff]
  %v313 = vld [vmem:[%s2 + $0x3b0] sm:$0xff]
  %v314 = vld [vmem:[%s2 + $0x3b8] sm:$0xff]
  %v315 = vld [vmem:[%s2 + $0x3c0] sm:$0xff]
  %v316 = vld [vmem:[%s2 + $0x3c8] sm:$0xff]
  %v317 = vld [vmem:[%s2 + $0x3d0] sm:$0xff]
  %v318 = vld [vmem:[%s2 + $0x3d8] sm:$0xff]
  %v319 = vld [vmem:[%s2 + $0x3e0] sm:$0xff]
  %v320 = vld [vmem:[%s2 + $0x3e8] sm:$0xff]
  %v321 = vld [vmem:[%s2 + $0x3f0] sm:$0xff]
  %v322 = vld [vmem:[%s2 + $0x3f8] sm:$0xff]
  %324 = vset.pattern.permute.xlu0 0
  %325 = vperm.xlu0 %324, %v195
  %v326 = vpop.permute.xlu0 %325
  %329 = vset.pattern.permute.xlu0 0
  %330 = vperm.xlu0 %329, %v196
  %v331 = vpop.permute.xlu0 %330
  %334 = vset.pattern.permute.xlu0 0
  %335 = vperm.xlu0 %334, %v197
  %v336 = vpop.permute.xlu0 %335
  %339 = vset.pattern.permute.xlu0 0
  %340 = vperm.xlu0 %339, %v198
  %v341 = vpop.permute.xlu0 %340
  %344 = vset.pattern.permute.xlu0 0
  %345 = vperm.xlu0 %344, %v199
  %v346 = vpop.permute.xlu0 %345
  %349 = vset.pattern.permute.xlu0 0
  %350 = vperm.xlu0 %349, %v200
  %v351 = vpop.permute.xlu0 %350
  %354 = vset.pattern.permute.xlu0 0
  %355 = vperm.xlu0 %354, %v201
  %v356 = vpop.permute.xlu0 %355
  %359 = vset.pattern.permute.xlu0 0
  %360 = vperm.xlu0 %359, %v202
  %v361 = vpop.permute.xlu0 %360
  %364 = vset.pattern.permute.xlu0 0
  %365 = vperm.xlu0 %364, %v203
  %v366 = vpop.permute.xlu0 %365
  %369 = vset.pattern.permute.xlu0 0
  %370 = vperm.xlu0 %369, %v204
  %v371 = vpop.permute.xlu0 %370
  %374 = vset.pattern.permute.xlu0 0
  %375 = vperm.xlu0 %374, %v205
  %v376 = vpop.permute.xlu0 %375
  %379 = vset.pattern.permute.xlu0 0
  %380 = vperm.xlu0 %379, %v206
  %v381 = vpop.permute.xlu0 %380
  %384 = vset.pattern.permute.xlu0 0
  %385 = vperm.xlu0 %384, %v207
  %v386 = vpop.permute.xlu0 %385
  %389 = vset.pattern.permute.xlu0 0
  %390 = vperm.xlu0 %389, %v208
  %v391 = vpop.permute.xlu0 %390
  %394 = vset.pattern.permute.xlu0 0
  %395 = vperm.xlu0 %394, %v209
  %v396 = vpop.permute.xlu0 %395
  %399 = vset.pattern.permute.xlu0 0
  %400 = vperm.xlu0 %399, %v210
  %v401 = vpop.permute.xlu0 %400
  %404 = vset.pattern.permute.xlu0 0
  %405 = vperm.xlu0 %404, %v211
  %v406 = vpop.permute.xlu0 %405
  %409 = vset.pattern.permute.xlu0 0
  %410 = vperm.xlu0 %409, %v212
  %v411 = vpop.permute.xlu0 %410
  %414 = vset.pattern.permute.xlu0 0
  %415 = vperm.xlu0 %414, %v213
  %v416 = vpop.permute.xlu0 %415
  %419 = vset.pattern.permute.xlu0 0
  %420 = vperm.xlu0 %419, %v214
  %v421 = vpop.permute.xlu0 %420
  %424 = vset.pattern.permute.xlu0 0
  %425 = vperm.xlu0 %424, %v215
  %v426 = vpop.permute.xlu0 %425
  %429 = vset.pattern.permute.xlu0 0
  %430 = vperm.xlu0 %429, %v216
  %v431 = vpop.permute.xlu0 %430
  %434 = vset.pattern.permute.xlu0 0
  %435 = vperm.xlu0 %434, %v217
  %v436 = vpop.permute.xlu0 %435
  %439 = vset.pattern.permute.xlu0 0
  %440 = vperm.xlu0 %439, %v218
  %v441 = vpop.permute.xlu0 %440
  %444 = vset.pattern.permute.xlu0 0
  %445 = vperm.xlu0 %444, %v219
  %v446 = vpop.permute.xlu0 %445
  %449 = vset.pattern.permute.xlu0 0
  %450 = vperm.xlu0 %449, %v220
  %v451 = vpop.permute.xlu0 %450
  %454 = vset.pattern.permute.xlu0 0
  %455 = vperm.xlu0 %454, %v221
  %v456 = vpop.permute.xlu0 %455
  %459 = vset.pattern.permute.xlu0 0
  %460 = vperm.xlu0 %459, %v222
  %v461 = vpop.permute.xlu0 %460
  %464 = vset.pattern.permute.xlu0 0
  %465 = vperm.xlu0 %464, %v223
  %v466 = vpop.permute.xlu0 %465
  %469 = vset.pattern.permute.xlu0 0
  %470 = vperm.xlu0 %469, %v224
  %v471 = vpop.permute.xlu0 %470
  %474 = vset.pattern.permute.xlu0 0
  %475 = vperm.xlu0 %474, %v225
  %v476 = vpop.permute.xlu0 %475
  %479 = vset.pattern.permute.xlu0 0
  %480 = vperm.xlu0 %479, %v226
  %v481 = vpop.permute.xlu0 %480
  %484 = vset.pattern.permute.xlu0 0
  %485 = vperm.xlu0 %484, %v227
  %v486 = vpop.permute.xlu0 %485
  %489 = vset.pattern.permute.xlu0 0
  %490 = vperm.xlu0 %489, %v228
  %v491 = vpop.permute.xlu0 %490
  %494 = vset.pattern.permute.xlu0 0
  %495 = vperm.xlu0 %494, %v229
  %v496 = vpop.permute.xlu0 %495
  %499 = vset.pattern.permute.xlu0 0
  %500 = vperm.xlu0 %499, %v230
  %v501 = vpop.permute.xlu0 %500
  %504 = vset.pattern.permute.xlu0 0
  %505 = vperm.xlu0 %504, %v231
  %v506 = vpop.permute.xlu0 %505
  %509 = vset.pattern.permute.xlu0 0
  %510 = vperm.xlu0 %509, %v232
  %v511 = vpop.permute.xlu0 %510
  %514 = vset.pattern.permute.xlu0 0
  %515 = vperm.xlu0 %514, %v233
  %v516 = vpop.permute.xlu0 %515
  %519 = vset.pattern.permute.xlu0 0
  %520 = vperm.xlu0 %519, %v234
  %v521 = vpop.permute.xlu0 %520
  %524 = vset.pattern.permute.xlu0 0
  %525 = vperm.xlu0 %524, %v235
  %v526 = vpop.permute.xlu0 %525
  %529 = vset.pattern.permute.xlu0 0
  %530 = vperm.xlu0 %529, %v236
  %v531 = vpop.permute.xlu0 %530
  %534 = vset.pattern.permute.xlu0 0
  %535 = vperm.xlu0 %534, %v237
  %v536 = vpop.permute.xlu0 %535
  %539 = vset.pattern.permute.xlu0 0
  %540 = vperm.xlu0 %539, %v238
  %v541 = vpop.permute.xlu0 %540
  %544 = vset.pattern.permute.xlu0 0
  %545 = vperm.xlu0 %544, %v239
  %v546 = vpop.permute.xlu0 %545
  %549 = vset.pattern.permute.xlu0 0
  %550 = vperm.xlu0 %549, %v240
  %v551 = vpop.permute.xlu0 %550
  %554 = vset.pattern.permute.xlu0 0
  %555 = vperm.xlu0 %554, %v241
  %v556 = vpop.permute.xlu0 %555
  %559 = vset.pattern.permute.xlu0 0
  %560 = vperm.xlu0 %559, %v242
  %v561 = vpop.permute.xlu0 %560
  %564 = vset.pattern.permute.xlu0 0
  %565 = vperm.xlu0 %564, %v243
  %v566 = vpop.permute.xlu0 %565
  %569 = vset.pattern.permute.xlu0 0
  %570 = vperm.xlu0 %569, %v244
  %v571 = vpop.permute.xlu0 %570
  %574 = vset.pattern.permute.xlu0 0
  %575 = vperm.xlu0 %574, %v245
  %v576 = vpop.permute.xlu0 %575
  %579 = vset.pattern.permute.xlu0 0
  %580 = vperm.xlu0 %579, %v246
  %v581 = vpop.permute.xlu0 %580
  %584 = vset.pattern.permute.xlu0 0
  %585 = vperm.xlu0 %584, %v247
  %v586 = vpop.permute.xlu0 %585
  %589 = vset.pattern.permute.xlu0 0
  %590 = vperm.xlu0 %589, %v248
  %v591 = vpop.permute.xlu0 %590
  %594 = vset.pattern.permute.xlu0 0
  %595 = vperm.xlu0 %594, %v249
  %v596 = vpop.permute.xlu0 %595
  %599 = vset.pattern.permute.xlu0 0
  %600 = vperm.xlu0 %599, %v250
  %v601 = vpop.permute.xlu0 %600
  %604 = vset.pattern.permute.xlu0 0
  %605 = vperm.xlu0 %604, %v251
  %v606 = vpop.permute.xlu0 %605
  %609 = vset.pattern.permute.xlu0 0
  %610 = vperm.xlu0 %609, %v252
  %v611 = vpop.permute.xlu0 %610
  %614 = vset.pattern.permute.xlu0 0
  %615 = vperm.xlu0 %614, %v253
  %v616 = vpop.permute.xlu0 %615
  %619 = vset.pattern.permute.xlu0 0
  %620 = vperm.xlu0 %619, %v254
  %v621 = vpop.permute.xlu0 %620
  %624 = vset.pattern.permute.xlu0 0
  %625 = vperm.xlu0 %624, %v255
  %v626 = vpop.permute.xlu0 %625
  %629 = vset.pattern.permute.xlu0 0
  %630 = vperm.xlu0 %629, %v256
  %v631 = vpop.permute.xlu0 %630
  %634 = vset.pattern.permute.xlu0 0
  %635 = vperm.xlu0 %634, %v257
  %v636 = vpop.permute.xlu0 %635
  %639 = vset.pattern.permute.xlu0 0
  %640 = vperm.xlu0 %639, %v258
  %v641 = vpop.permute.xlu0 %640
  %644 = vset.pattern.permute.xlu0 0
  %645 = vperm.xlu0 %644, %v259
  %v646 = vpop.permute.xlu0 %645
  %649 = vset.pattern.permute.xlu0 0
  %650 = vperm.xlu0 %649, %v260
  %v651 = vpop.permute.xlu0 %650
  %654 = vset.pattern.permute.xlu0 0
  %655 = vperm.xlu0 %654, %v261
  %v656 = vpop.permute.xlu0 %655
  %659 = vset.pattern.permute.xlu0 0
  %660 = vperm.xlu0 %659, %v262
  %v661 = vpop.permute.xlu0 %660
  %664 = vset.pattern.permute.xlu0 0
  %665 = vperm.xlu0 %664, %v263
  %v666 = vpop.permute.xlu0 %665
  %669 = vset.pattern.permute.xlu0 0
  %670 = vperm.xlu0 %669, %v264
  %v671 = vpop.permute.xlu0 %670
  %674 = vset.pattern.permute.xlu0 0
  %675 = vperm.xlu0 %674, %v265
  %v676 = vpop.permute.xlu0 %675
  %679 = vset.pattern.permute.xlu0 0
  %680 = vperm.xlu0 %679, %v266
  %v681 = vpop.permute.xlu0 %680
  %684 = vset.pattern.permute.xlu0 0
  %685 = vperm.xlu0 %684, %v267
  %v686 = vpop.permute.xlu0 %685
  %689 = vset.pattern.permute.xlu0 0
  %690 = vperm.xlu0 %689, %v268
  %v691 = vpop.permute.xlu0 %690
  %694 = vset.pattern.permute.xlu0 0
  %695 = vperm.xlu0 %694, %v269
  %v696 = vpop.permute.xlu0 %695
  %699 = vset.pattern.permute.xlu0 0
  %700 = vperm.xlu0 %699, %v270
  %v701 = vpop.permute.xlu0 %700
  %704 = vset.pattern.permute.xlu0 0
  %705 = vperm.xlu0 %704, %v271
  %v706 = vpop.permute.xlu0 %705
  %709 = vset.pattern.permute.xlu0 0
  %710 = vperm.xlu0 %709, %v272
  %v711 = vpop.permute.xlu0 %710
  %714 = vset.pattern.permute.xlu0 0
  %715 = vperm.xlu0 %714, %v273
  %v716 = vpop.permute.xlu0 %715
  %719 = vset.pattern.permute.xlu0 0
  %720 = vperm.xlu0 %719, %v274
  %v721 = vpop.permute.xlu0 %720
  %724 = vset.pattern.permute.xlu0 0
  %725 = vperm.xlu0 %724, %v275
  %v726 = vpop.permute.xlu0 %725
  %729 = vset.pattern.permute.xlu0 0
  %730 = vperm.xlu0 %729, %v276
  %v731 = vpop.permute.xlu0 %730
  %734 = vset.pattern.permute.xlu0 0
  %735 = vperm.xlu0 %734, %v277
  %v736 = vpop.permute.xlu0 %735
  %739 = vset.pattern.permute.xlu0 0
  %740 = vperm.xlu0 %739, %v278
  %v741 = vpop.permute.xlu0 %740
  %744 = vset.pattern.permute.xlu0 0
  %745 = vperm.xlu0 %744, %v279
  %v746 = vpop.permute.xlu0 %745
  %749 = vset.pattern.permute.xlu0 0
  %750 = vperm.xlu0 %749, %v280
  %v751 = vpop.permute.xlu0 %750
  %754 = vset.pattern.permute.xlu0 0
  %755 = vperm.xlu0 %754, %v281
  %v756 = vpop.permute.xlu0 %755
  %759 = vset.pattern.permute.xlu0 0
  %760 = vperm.xlu0 %759, %v282
  %v761 = vpop.permute.xlu0 %760
  %764 = vset.pattern.permute.xlu0 0
  %765 = vperm.xlu0 %764, %v283
  %v766 = vpop.permute.xlu0 %765
  %769 = vset.pattern.permute.xlu0 0
  %770 = vperm.xlu0 %769, %v284
  %v771 = vpop.permute.xlu0 %770
  %774 = vset.pattern.permute.xlu0 0
  %775 = vperm.xlu0 %774, %v285
  %v776 = vpop.permute.xlu0 %775
  %779 = vset.pattern.permute.xlu0 0
  %780 = vperm.xlu0 %779, %v286
  %v781 = vpop.permute.xlu0 %780
  %784 = vset.pattern.permute.xlu0 0
  %785 = vperm.xlu0 %784, %v287
  %v786 = vpop.permute.xlu0 %785
  %789 = vset.pattern.permute.xlu0 0
  %790 = vperm.xlu0 %789, %v288
  %v791 = vpop.permute.xlu0 %790
  %794 = vset.pattern.permute.xlu0 0
  %795 = vperm.xlu0 %794, %v289
  %v796 = vpop.permute.xlu0 %795
  %799 = vset.pattern.permute.xlu0 0
  %800 = vperm.xlu0 %799, %v290
  %v801 = vpop.permute.xlu0 %800
  %804 = vset.pattern.permute.xlu0 0
  %805 = vperm.xlu0 %804, %v291
  %v806 = vpop.permute.xlu0 %805
  %809 = vset.pattern.permute.xlu0 0
  %810 = vperm.xlu0 %809, %v292
  %v811 = vpop.permute.xlu0 %810
  %814 = vset.pattern.permute.xlu0 0
  %815 = vperm.xlu0 %814, %v293
  %v816 = vpop.permute.xlu0 %815
  %819 = vset.pattern.permute.xlu0 0
  %820 = vperm.xlu0 %819, %v294
  %v821 = vpop.permute.xlu0 %820
  %824 = vset.pattern.permute.xlu0 0
  %825 = vperm.xlu0 %824, %v295
  %v826 = vpop.permute.xlu0 %825
  %829 = vset.pattern.permute.xlu0 0
  %830 = vperm.xlu0 %829, %v296
  %v831 = vpop.permute.xlu0 %830
  %834 = vset.pattern.permute.xlu0 0
  %835 = vperm.xlu0 %834, %v297
  %v836 = vpop.permute.xlu0 %835
  %839 = vset.pattern.permute.xlu0 0
  %840 = vperm.xlu0 %839, %v298
  %v841 = vpop.permute.xlu0 %840
  %844 = vset.pattern.permute.xlu0 0
  %845 = vperm.xlu0 %844, %v299
  %v846 = vpop.permute.xlu0 %845
  %849 = vset.pattern.permute.xlu0 0
  %850 = vperm.xlu0 %849, %v300
  %v851 = vpop.permute.xlu0 %850
  %854 = vset.pattern.permute.xlu0 0
  %855 = vperm.xlu0 %854, %v301
  %v856 = vpop.permute.xlu0 %855
  %859 = vset.pattern.permute.xlu0 0
  %860 = vperm.xlu0 %859, %v302
  %v861 = vpop.permute.xlu0 %860
  %864 = vset.pattern.permute.xlu0 0
  %865 = vperm.xlu0 %864, %v303
  %v866 = vpop.permute.xlu0 %865
  %869 = vset.pattern.permute.xlu0 0
  %870 = vperm.xlu0 %869, %v304
  %v871 = vpop.permute.xlu0 %870
  %874 = vset.pattern.permute.xlu0 0
  %875 = vperm.xlu0 %874, %v305
  %v876 = vpop.permute.xlu0 %875
  %879 = vset.pattern.permute.xlu0 0
  %880 = vperm.xlu0 %879, %v306
  %v881 = vpop.permute.xlu0 %880
  %884 = vset.pattern.permute.xlu0 0
  %885 = vperm.xlu0 %884, %v307
  %v886 = vpop.permute.xlu0 %885
  %889 = vset.pattern.permute.xlu0 0
  %890 = vperm.xlu0 %889, %v308
  %v891 = vpop.permute.xlu0 %890
  %894 = vset.pattern.permute.xlu0 0
  %895 = vperm.xlu0 %894, %v309
  %v896 = vpop.permute.xlu0 %895
  %899 = vset.pattern.permute.xlu0 0
  %900 = vperm.xlu0 %899, %v310
  %v901 = vpop.permute.xlu0 %900
  %904 = vset.pattern.permute.xlu0 0
  %905 = vperm.xlu0 %904, %v311
  %v906 = vpop.permute.xlu0 %905
  %909 = vset.pattern.permute.xlu0 0
  %910 = vperm.xlu0 %909, %v312
  %v911 = vpop.permute.xlu0 %910
  %914 = vset.pattern.permute.xlu0 0
  %915 = vperm.xlu0 %914, %v313
  %v916 = vpop.permute.xlu0 %915
  %919 = vset.pattern.permute.xlu0 0
  %920 = vperm.xlu0 %919, %v314
  %v921 = vpop.permute.xlu0 %920
  %924 = vset.pattern.permute.xlu0 0
  %925 = vperm.xlu0 %924, %v315
  %v926 = vpop.permute.xlu0 %925
  %929 = vset.pattern.permute.xlu0 0
  %930 = vperm.xlu0 %929, %v316
  %v931 = vpop.permute.xlu0 %930
  %934 = vset.pattern.permute.xlu0 0
  %935 = vperm.xlu0 %934, %v317
  %v936 = vpop.permute.xlu0 %935
  %939 = vset.pattern.permute.xlu0 0
  %940 = vperm.xlu0 %939, %v318
  %v941 = vpop.permute.xlu0 %940
  %944 = vset.pattern.permute.xlu0 0
  %945 = vperm.xlu0 %944, %v319
  %v946 = vpop.permute.xlu0 %945
  %949 = vset.pattern.permute.xlu0 0
  %950 = vperm.xlu0 %949, %v320
  %v951 = vpop.permute.xlu0 %950
  %954 = vset.pattern.permute.xlu0 0
  %955 = vperm.xlu0 %954, %v321
  %v956 = vpop.permute.xlu0 %955
  %959 = vset.pattern.permute.xlu0 0
  %960 = vperm.xlu0 %959, %v322
  %v961 = vpop.permute.xlu0 %960
  %v1091 = vunpack.c.l.b16 %v35
  %v1092 = vunpack.c.h.b16 %v35
  %v1093 = vunpack.c.l.b16 %v36
  %v1094 = vunpack.c.h.b16 %v36
  %v1095 = vunpack.c.l.b16 %v37
  %v1096 = vunpack.c.h.b16 %v37
  %v1097 = vunpack.c.l.b16 %v38
  %v1098 = vunpack.c.h.b16 %v38
  %v1099 = vunpack.c.l.b16 %v39
  %v1100 = vunpack.c.h.b16 %v39
  %v1101 = vunpack.c.l.b16 %v40
  %v1102 = vunpack.c.h.b16 %v40
  %v1103 = vunpack.c.l.b16 %v41
  %v1104 = vunpack.c.h.b16 %v41
  %v1105 = vunpack.c.l.b16 %v42
  %v1106 = vunpack.c.h.b16 %v42
  %v1107 = vunpack.c.l.b16 %v43
  %v1108 = vunpack.c.h.b16 %v43
  %v1109 = vunpack.c.l.b16 %v44
  %v1110 = vunpack.c.h.b16 %v44
  %v1111 = vunpack.c.l.b16 %v45
  %v1112 = vunpack.c.h.b16 %v45
  %v1113 = vunpack.c.l.b16 %v46
  %v1114 = vunpack.c.h.b16 %v46
  %v1115 = vunpack.c.l.b16 %v47
  %v1116 = vunpack.c.h.b16 %v47
  %v1117 = vunpack.c.l.b16 %v48
  %v1118 = vunpack.c.h.b16 %v48
  %v1119 = vunpack.c.l.b16 %v49
  %v1120 = vunpack.c.h.b16 %v49
  %v1121 = vunpack.c.l.b16 %v50
  %v1122 = vunpack.c.h.b16 %v50
  %v1123 = vunpack.c.l.b16 %v51
  %v1124 = vunpack.c.h.b16 %v51
  %v1125 = vunpack.c.l.b16 %v52
  %v1126 = vunpack.c.h.b16 %v52
  %v1127 = vunpack.c.l.b16 %v53
  %v1128 = vunpack.c.h.b16 %v53
  %v1129 = vunpack.c.l.b16 %v54
  %v1130 = vunpack.c.h.b16 %v54
  %v1131 = vunpack.c.l.b16 %v55
  %v1132 = vunpack.c.h.b16 %v55
  %v1133 = vunpack.c.l.b16 %v56
  %v1134 = vunpack.c.h.b16 %v56
  %v1135 = vunpack.c.l.b16 %v57
  %v1136 = vunpack.c.h.b16 %v57
  %v1137 = vunpack.c.l.b16 %v58
  %v1138 = vunpack.c.h.b16 %v58
  %v1139 = vunpack.c.l.b16 %v59
  %v1140 = vunpack.c.h.b16 %v59
  %v1141 = vunpack.c.l.b16 %v60
  %v1142 = vunpack.c.h.b16 %v60
  %v1143 = vunpack.c.l.b16 %v61
  %v1144 = vunpack.c.h.b16 %v61
  %v1145 = vunpack.c.l.b16 %v62
  %v1146 = vunpack.c.h.b16 %v62
  %v1147 = vunpack.c.l.b16 %v63
  %v1148 = vunpack.c.h.b16 %v63
  %v1149 = vunpack.c.l.b16 %v64
  %v1150 = vunpack.c.h.b16 %v64
  %v1151 = vunpack.c.l.b16 %v65
  %v1152 = vunpack.c.h.b16 %v65
  %v1153 = vunpack.c.l.b16 %v66
  %v1154 = vunpack.c.h.b16 %v66
  %v1155 = vunpack.c.l.b16 %v67
  %v1156 = vunpack.c.h.b16 %v67
  %v1157 = vunpack.c.l.b16 %v68
  %v1158 = vunpack.c.h.b16 %v68
  %v1159 = vunpack.c.l.b16 %v69
  %v1160 = vunpack.c.h.b16 %v69
  %v1161 = vunpack.c.l.b16 %v70
  %v1162 = vunpack.c.h.b16 %v70
  %v1163 = vunpack.c.l.b16 %v71
  %v1164 = vunpack.c.h.b16 %v71
  %v1165 = vunpack.c.l.b16 %v72
  %v1166 = vunpack.c.h.b16 %v72
  %v1167 = vunpack.c.l.b16 %v73
  %v1168 = vunpack.c.h.b16 %v73
  %v1169 = vunpack.c.l.b16 %v74
  %v1170 = vunpack.c.h.b16 %v74
  %v1171 = vunpack.c.l.b16 %v75
  %v1172 = vunpack.c.h.b16 %v75
  %v1173 = vunpack.c.l.b16 %v76
  %v1174 = vunpack.c.h.b16 %v76
  %v1175 = vunpack.c.l.b16 %v77
  %v1176 = vunpack.c.h.b16 %v77
  %v1177 = vunpack.c.l.b16 %v78
  %v1178 = vunpack.c.h.b16 %v78
  %v1179 = vunpack.c.l.b16 %v79
  %v1180 = vunpack.c.h.b16 %v79
  %v1181 = vunpack.c.l.b16 %v80
  %v1182 = vunpack.c.h.b16 %v80
  %v1183 = vunpack.c.l.b16 %v81
  %v1184 = vunpack.c.h.b16 %v81
  %v1185 = vunpack.c.l.b16 %v82
  %v1186 = vunpack.c.h.b16 %v82
  %v1187 = vunpack.c.l.b16 %v83
  %v1188 = vunpack.c.h.b16 %v83
  %v1189 = vunpack.c.l.b16 %v84
  %v1190 = vunpack.c.h.b16 %v84
  %v1191 = vunpack.c.l.b16 %v85
  %v1192 = vunpack.c.h.b16 %v85
  %v1193 = vunpack.c.l.b16 %v86
  %v1194 = vunpack.c.h.b16 %v86
  %v1195 = vunpack.c.l.b16 %v87
  %v1196 = vunpack.c.h.b16 %v87
  %v1197 = vunpack.c.l.b16 %v88
  %v1198 = vunpack.c.h.b16 %v88
  %v1199 = vunpack.c.l.b16 %v89
  %v1200 = vunpack.c.h.b16 %v89
  %v1201 = vunpack.c.l.b16 %v90
  %v1202 = vunpack.c.h.b16 %v90
  %v1203 = vunpack.c.l.b16 %v91
  %v1204 = vunpack.c.h.b16 %v91
  %v1205 = vunpack.c.l.b16 %v92
  %v1206 = vunpack.c.h.b16 %v92
  %v1207 = vunpack.c.l.b16 %v93
  %v1208 = vunpack.c.h.b16 %v93
  %v1209 = vunpack.c.l.b16 %v94
  %v1210 = vunpack.c.h.b16 %v94
  %v1211 = vunpack.c.l.b16 %v95
  %v1212 = vunpack.c.h.b16 %v95
  %v1213 = vunpack.c.l.b16 %v96
  %v1214 = vunpack.c.h.b16 %v96
  %v1215 = vunpack.c.l.b16 %v97
  %v1216 = vunpack.c.h.b16 %v97
  %v1217 = vunpack.c.l.b16 %v98
  %v1218 = vunpack.c.h.b16 %v98
  %v1219 = vunpack.c.l.b16 %v99
  %v1220 = vunpack.c.h.b16 %v99
  %v1221 = vunpack.c.l.b16 %v100
  %v1222 = vunpack.c.h.b16 %v100
  %v1223 = vunpack.c.l.b16 %v101
  %v1224 = vunpack.c.h.b16 %v101
  %v1225 = vunpack.c.l.b16 %v102
  %v1226 = vunpack.c.h.b16 %v102
  %v1227 = vunpack.c.l.b16 %v103
  %v1228 = vunpack.c.h.b16 %v103
  %v1229 = vunpack.c.l.b16 %v104
  %v1230 = vunpack.c.h.b16 %v104
  %v1231 = vunpack.c.l.b16 %v105
  %v1232 = vunpack.c.h.b16 %v105
  %v1233 = vunpack.c.l.b16 %v106
  %v1234 = vunpack.c.h.b16 %v106
  %v1235 = vunpack.c.l.b16 %v107
  %v1236 = vunpack.c.h.b16 %v107
  %v1237 = vunpack.c.l.b16 %v108
  %v1238 = vunpack.c.h.b16 %v108
  %v1239 = vunpack.c.l.b16 %v109
  %v1240 = vunpack.c.h.b16 %v109
  %v1241 = vunpack.c.l.b16 %v110
  %v1242 = vunpack.c.h.b16 %v110
  %v1243 = vunpack.c.l.b16 %v111
  %v1244 = vunpack.c.h.b16 %v111
  %v1245 = vunpack.c.l.b16 %v112
  %v1246 = vunpack.c.h.b16 %v112
  %v1247 = vunpack.c.l.b16 %v113
  %v1248 = vunpack.c.h.b16 %v113
  %v1249 = vunpack.c.l.b16 %v114
  %v1250 = vunpack.c.h.b16 %v114
  %v1251 = vunpack.c.l.b16 %v115
  %v1252 = vunpack.c.h.b16 %v115
  %v1253 = vunpack.c.l.b16 %v116
  %v1254 = vunpack.c.h.b16 %v116
  %v1255 = vunpack.c.l.b16 %v117
  %v1256 = vunpack.c.h.b16 %v117
  %v1257 = vunpack.c.l.b16 %v118
  %v1258 = vunpack.c.h.b16 %v118
  %v1259 = vunpack.c.l.b16 %v119
  %v1260 = vunpack.c.h.b16 %v119
  %v1261 = vunpack.c.l.b16 %v120
  %v1262 = vunpack.c.h.b16 %v120
  %v1263 = vunpack.c.l.b16 %v121
  %v1264 = vunpack.c.h.b16 %v121
  %v1265 = vunpack.c.l.b16 %v122
  %v1266 = vunpack.c.h.b16 %v122
  %v1267 = vunpack.c.l.b16 %v123
  %v1268 = vunpack.c.h.b16 %v123
  %v1269 = vunpack.c.l.b16 %v124
  %v1270 = vunpack.c.h.b16 %v124
  %v1271 = vunpack.c.l.b16 %v125
  %v1272 = vunpack.c.h.b16 %v125
  %v1273 = vunpack.c.l.b16 %v126
  %v1274 = vunpack.c.h.b16 %v126
  %v1275 = vunpack.c.l.b16 %v127
  %v1276 = vunpack.c.h.b16 %v127
  %v1277 = vunpack.c.l.b16 %v128
  %v1278 = vunpack.c.h.b16 %v128
  %v1279 = vunpack.c.l.b16 %v129
  %v1280 = vunpack.c.h.b16 %v129
  %v1281 = vunpack.c.l.b16 %v130
  %v1282 = vunpack.c.h.b16 %v130
  %v1283 = vunpack.c.l.b16 %v131
  %v1284 = vunpack.c.h.b16 %v131
  %v1285 = vunpack.c.l.b16 %v132
  %v1286 = vunpack.c.h.b16 %v132
  %v1287 = vunpack.c.l.b16 %v133
  %v1288 = vunpack.c.h.b16 %v133
  %v1289 = vunpack.c.l.b16 %v134
  %v1290 = vunpack.c.h.b16 %v134
  %v1291 = vunpack.c.l.b16 %v135
  %v1292 = vunpack.c.h.b16 %v135
  %v1293 = vunpack.c.l.b16 %v136
  %v1294 = vunpack.c.h.b16 %v136
  %v1295 = vunpack.c.l.b16 %v137
  %v1296 = vunpack.c.h.b16 %v137
  %v1297 = vunpack.c.l.b16 %v138
  %v1298 = vunpack.c.h.b16 %v138
  %v1299 = vunpack.c.l.b16 %v139
  %v1300 = vunpack.c.h.b16 %v139
  %v1301 = vunpack.c.l.b16 %v140
  %v1302 = vunpack.c.h.b16 %v140
  %v1303 = vunpack.c.l.b16 %v141
  %v1304 = vunpack.c.h.b16 %v141
  %v1305 = vunpack.c.l.b16 %v142
  %v1306 = vunpack.c.h.b16 %v142
  %v1307 = vunpack.c.l.b16 %v143
  %v1308 = vunpack.c.h.b16 %v143
  %v1309 = vunpack.c.l.b16 %v144
  %v1310 = vunpack.c.h.b16 %v144
  %v1311 = vunpack.c.l.b16 %v145
  %v1312 = vunpack.c.h.b16 %v145
  %v1313 = vunpack.c.l.b16 %v146
  %v1314 = vunpack.c.h.b16 %v146
  %v1315 = vunpack.c.l.b16 %v147
  %v1316 = vunpack.c.h.b16 %v147
  %v1317 = vunpack.c.l.b16 %v148
  %v1318 = vunpack.c.h.b16 %v148
  %v1319 = vunpack.c.l.b16 %v149
  %v1320 = vunpack.c.h.b16 %v149
  %v1321 = vunpack.c.l.b16 %v150
  %v1322 = vunpack.c.h.b16 %v150
  %v1323 = vunpack.c.l.b16 %v151
  %v1324 = vunpack.c.h.b16 %v151
  %v1325 = vunpack.c.l.b16 %v152
  %v1326 = vunpack.c.h.b16 %v152
  %v1327 = vunpack.c.l.b16 %v153
  %v1328 = vunpack.c.h.b16 %v153
  %v1329 = vunpack.c.l.b16 %v154
  %v1330 = vunpack.c.h.b16 %v154
  %v1331 = vunpack.c.l.b16 %v155
  %v1332 = vunpack.c.h.b16 %v155
  %v1333 = vunpack.c.l.b16 %v156
  %v1334 = vunpack.c.h.b16 %v156
  %v1335 = vunpack.c.l.b16 %v157
  %v1336 = vunpack.c.h.b16 %v157
  %v1337 = vunpack.c.l.b16 %v158
  %v1338 = vunpack.c.h.b16 %v158
  %v1339 = vunpack.c.l.b16 %v159
  %v1340 = vunpack.c.h.b16 %v159
  %v1341 = vunpack.c.l.b16 %v160
  %v1342 = vunpack.c.h.b16 %v160
  %v1343 = vunpack.c.l.b16 %v161
  %v1344 = vunpack.c.h.b16 %v161
  %v1345 = vunpack.c.l.b16 %v162
  %v1346 = vunpack.c.h.b16 %v162
  %v1347 = vpack.c.b16 %v1093, %v1091
  %v1348 = vpack.c.b16 %v1094, %v1092
  %v1349 = vpack.c.b16 %v1097, %v1095
  %v1350 = vpack.c.b16 %v1098, %v1096
  %v1351 = vpack.c.b16 %v1101, %v1099
  %v1352 = vpack.c.b16 %v1102, %v1100
  %v1353 = vpack.c.b16 %v1105, %v1103
  %v1354 = vpack.c.b16 %v1106, %v1104
  %v1355 = vpack.c.b16 %v1109, %v1107
  %v1356 = vpack.c.b16 %v1110, %v1108
  %v1357 = vpack.c.b16 %v1113, %v1111
  %v1358 = vpack.c.b16 %v1114, %v1112
  %v1359 = vpack.c.b16 %v1117, %v1115
  %v1360 = vpack.c.b16 %v1118, %v1116
  %v1361 = vpack.c.b16 %v1121, %v1119
  %v1362 = vpack.c.b16 %v1122, %v1120
  %v1363 = vpack.c.b16 %v1125, %v1123
  %v1364 = vpack.c.b16 %v1126, %v1124
  %v1365 = vpack.c.b16 %v1129, %v1127
  %v1366 = vpack.c.b16 %v1130, %v1128
  %v1367 = vpack.c.b16 %v1133, %v1131
  %v1368 = vpack.c.b16 %v1134, %v1132
  %v1369 = vpack.c.b16 %v1137, %v1135
  %v1370 = vpack.c.b16 %v1138, %v1136
  %v1371 = vpack.c.b16 %v1141, %v1139
  %v1372 = vpack.c.b16 %v1142, %v1140
  %v1373 = vpack.c.b16 %v1145, %v1143
  %v1374 = vpack.c.b16 %v1146, %v1144
  %v1375 = vpack.c.b16 %v1149, %v1147
  %v1376 = vpack.c.b16 %v1150, %v1148
  %v1377 = vpack.c.b16 %v1153, %v1151
  %v1378 = vpack.c.b16 %v1154, %v1152
  %v1379 = vpack.c.b16 %v1157, %v1155
  %v1380 = vpack.c.b16 %v1158, %v1156
  %v1381 = vpack.c.b16 %v1161, %v1159
  %v1382 = vpack.c.b16 %v1162, %v1160
  %v1383 = vpack.c.b16 %v1165, %v1163
  %v1384 = vpack.c.b16 %v1166, %v1164
  %v1385 = vpack.c.b16 %v1169, %v1167
  %v1386 = vpack.c.b16 %v1170, %v1168
  %v1387 = vpack.c.b16 %v1173, %v1171
  %v1388 = vpack.c.b16 %v1174, %v1172
  %v1389 = vpack.c.b16 %v1177, %v1175
  %v1390 = vpack.c.b16 %v1178, %v1176
  %v1391 = vpack.c.b16 %v1181, %v1179
  %v1392 = vpack.c.b16 %v1182, %v1180
  %v1393 = vpack.c.b16 %v1185, %v1183
  %v1394 = vpack.c.b16 %v1186, %v1184
  %v1395 = vpack.c.b16 %v1189, %v1187
  %v1396 = vpack.c.b16 %v1190, %v1188
  %v1397 = vpack.c.b16 %v1193, %v1191
  %v1398 = vpack.c.b16 %v1194, %v1192
  %v1399 = vpack.c.b16 %v1197, %v1195
  %v1400 = vpack.c.b16 %v1198, %v1196
  %v1401 = vpack.c.b16 %v1201, %v1199
  %v1402 = vpack.c.b16 %v1202, %v1200
  %v1403 = vpack.c.b16 %v1205, %v1203
  %v1404 = vpack.c.b16 %v1206, %v1204
  %v1405 = vpack.c.b16 %v1209, %v1207
  %v1406 = vpack.c.b16 %v1210, %v1208
  %v1407 = vpack.c.b16 %v1213, %v1211
  %v1408 = vpack.c.b16 %v1214, %v1212
  %v1409 = vpack.c.b16 %v1217, %v1215
  %v1410 = vpack.c.b16 %v1218, %v1216
  %v1411 = vpack.c.b16 %v1221, %v1219
  %v1412 = vpack.c.b16 %v1222, %v1220
  %v1413 = vpack.c.b16 %v1225, %v1223
  %v1414 = vpack.c.b16 %v1226, %v1224
  %v1415 = vpack.c.b16 %v1229, %v1227
  %v1416 = vpack.c.b16 %v1230, %v1228
  %v1417 = vpack.c.b16 %v1233, %v1231
  %v1418 = vpack.c.b16 %v1234, %v1232
  %v1419 = vpack.c.b16 %v1237, %v1235
  %v1420 = vpack.c.b16 %v1238, %v1236
  %v1421 = vpack.c.b16 %v1241, %v1239
  %v1422 = vpack.c.b16 %v1242, %v1240
  %v1423 = vpack.c.b16 %v1245, %v1243
  %v1424 = vpack.c.b16 %v1246, %v1244
  %v1425 = vpack.c.b16 %v1249, %v1247
  %v1426 = vpack.c.b16 %v1250, %v1248
  %v1427 = vpack.c.b16 %v1253, %v1251
  %v1428 = vpack.c.b16 %v1254, %v1252
  %v1429 = vpack.c.b16 %v1257, %v1255
  %v1430 = vpack.c.b16 %v1258, %v1256
  %v1431 = vpack.c.b16 %v1261, %v1259
  %v1432 = vpack.c.b16 %v1262, %v1260
  %v1433 = vpack.c.b16 %v1265, %v1263
  %v1434 = vpack.c.b16 %v1266, %v1264
  %v1435 = vpack.c.b16 %v1269, %v1267
  %v1436 = vpack.c.b16 %v1270, %v1268
  %v1437 = vpack.c.b16 %v1273, %v1271
  %v1438 = vpack.c.b16 %v1274, %v1272
  %v1439 = vpack.c.b16 %v1277, %v1275
  %v1440 = vpack.c.b16 %v1278, %v1276
  %v1441 = vpack.c.b16 %v1281, %v1279
  %v1442 = vpack.c.b16 %v1282, %v1280
  %v1443 = vpack.c.b16 %v1285, %v1283
  %v1444 = vpack.c.b16 %v1286, %v1284
  %v1445 = vpack.c.b16 %v1289, %v1287
  %v1446 = vpack.c.b16 %v1290, %v1288
  %v1447 = vpack.c.b16 %v1293, %v1291
  %v1448 = vpack.c.b16 %v1294, %v1292
  %v1449 = vpack.c.b16 %v1297, %v1295
  %v1450 = vpack.c.b16 %v1298, %v1296
  %v1451 = vpack.c.b16 %v1301, %v1299
  %v1452 = vpack.c.b16 %v1302, %v1300
  %v1453 = vpack.c.b16 %v1305, %v1303
  %v1454 = vpack.c.b16 %v1306, %v1304
  %v1455 = vpack.c.b16 %v1309, %v1307
  %v1456 = vpack.c.b16 %v1310, %v1308
  %v1457 = vpack.c.b16 %v1313, %v1311
  %v1458 = vpack.c.b16 %v1314, %v1312
  %v1459 = vpack.c.b16 %v1317, %v1315
  %v1460 = vpack.c.b16 %v1318, %v1316
  %v1461 = vpack.c.b16 %v1321, %v1319
  %v1462 = vpack.c.b16 %v1322, %v1320
  %v1463 = vpack.c.b16 %v1325, %v1323
  %v1464 = vpack.c.b16 %v1326, %v1324
  %v1465 = vpack.c.b16 %v1329, %v1327
  %v1466 = vpack.c.b16 %v1330, %v1328
  %v1467 = vpack.c.b16 %v1333, %v1331
  %v1468 = vpack.c.b16 %v1334, %v1332
  %v1469 = vpack.c.b16 %v1337, %v1335
  %v1470 = vpack.c.b16 %v1338, %v1336
  %v1471 = vpack.c.b16 %v1341, %v1339
  %v1472 = vpack.c.b16 %v1342, %v1340
  %v1473 = vpack.c.b16 %v1345, %v1343
  %v1474 = vpack.c.b16 %v1346, %v1344
  %v1635 = vunpack.c.l.b16 %v163
  %v1636 = vunpack.c.l.b16 %v164
  %v1637 = vunpack.c.l.b16 %v165
  %v1638 = vunpack.c.l.b16 %v166
  %v1639 = vunpack.c.l.b16 %v167
  %v1640 = vunpack.c.l.b16 %v168
  %v1641 = vunpack.c.l.b16 %v169
  %v1642 = vunpack.c.l.b16 %v170
  %v1643 = vunpack.c.l.b16 %v171
  %v1644 = vunpack.c.l.b16 %v172
  %v1645 = vunpack.c.l.b16 %v173
  %v1646 = vunpack.c.l.b16 %v174
  %v1647 = vunpack.c.l.b16 %v175
  %v1648 = vunpack.c.l.b16 %v176
  %v1649 = vunpack.c.l.b16 %v177
  %v1650 = vunpack.c.l.b16 %v178
  %v1651 = vunpack.c.l.b16 %v179
  %v1652 = vunpack.c.l.b16 %v180
  %v1653 = vunpack.c.l.b16 %v181
  %v1654 = vunpack.c.l.b16 %v182
  %v1655 = vunpack.c.l.b16 %v183
  %v1656 = vunpack.c.l.b16 %v184
  %v1657 = vunpack.c.l.b16 %v185
  %v1658 = vunpack.c.l.b16 %v186
  %v1659 = vunpack.c.l.b16 %v187
  %v1660 = vunpack.c.l.b16 %v188
  %v1661 = vunpack.c.l.b16 %v189
  %v1662 = vunpack.c.l.b16 %v190
  %v1663 = vunpack.c.l.b16 %v191
  %v1664 = vunpack.c.l.b16 %v192
  %v1665 = vunpack.c.l.b16 %v193
  %v1666 = vunpack.c.l.b16 %v194
  %v1667 = vpack.c.b16 %v1636, %v1635
  %v1668 = vpack.c.b16 %v1638, %v1637
  %v1669 = vpack.c.b16 %v1640, %v1639
  %v1670 = vpack.c.b16 %v1642, %v1641
  %v1671 = vpack.c.b16 %v1644, %v1643
  %v1672 = vpack.c.b16 %v1646, %v1645
  %v1673 = vpack.c.b16 %v1648, %v1647
  %v1674 = vpack.c.b16 %v1650, %v1649
  %v1675 = vpack.c.b16 %v1652, %v1651
  %v1676 = vpack.c.b16 %v1654, %v1653
  %v1677 = vpack.c.b16 %v1656, %v1655
  %v1678 = vpack.c.b16 %v1658, %v1657
  %v1679 = vpack.c.b16 %v1660, %v1659
  %v1680 = vpack.c.b16 %v1662, %v1661
  %v1681 = vpack.c.b16 %v1664, %v1663
  %v1682 = vpack.c.b16 %v1666, %v1665
  %1699 = vmatprep.subr.bf16.mxu0 0
  %1700 = vmatpush1.bf16.msra.mxu0 %v1674
  %1701 = vmatprep.subr.bf16.mxu0 0
  %1702 = vmatpush1.bf16.msra.mxu0 %v1673
  %1703 = vmatprep.subr.bf16.mxu0 0
  %1704 = vmatpush1.bf16.msra.mxu0 %v1672
  %1705 = vmatprep.subr.bf16.mxu0 0
  %1706 = vmatpush1.bf16.msra.mxu0 %v1671
  %1707 = vmatprep.subr.bf16.mxu0 0
  %1708 = vmatpush1.bf16.msra.mxu0 %v1670
  %1709 = vmatprep.subr.bf16.mxu0 0
  %1710 = vmatpush1.bf16.msra.mxu0 %v1669
  %1711 = vmatprep.subr.bf16.mxu0 0
  %1712 = vmatpush1.bf16.msra.mxu0 %v1668
  %1713 = vmatprep.subr.bf16.mxu0 0
  %1714 = vmatpush1.bf16.msra.mxu0 %v1667
  %1715 = vmatprep.subr.bf16.mxu0 0
  %1716 = vmatpush2.bf16.msra.mxu0 %v1682
  %1717 = vmatprep.subr.bf16.mxu0 0
  %1718 = vmatpush2.bf16.msra.mxu0 %v1681
  %1719 = vmatprep.subr.bf16.mxu0 0
  %1720 = vmatpush2.bf16.msra.mxu0 %v1680
  %1721 = vmatprep.subr.bf16.mxu0 0
  %1722 = vmatpush2.bf16.msra.mxu0 %v1679
  %1723 = vmatprep.subr.bf16.mxu0 0
  %1724 = vmatpush2.bf16.msra.mxu0 %v1678
  %1725 = vmatprep.subr.bf16.mxu0 0
  %1726 = vmatpush2.bf16.msra.mxu0 %v1677
  %1727 = vmatprep.subr.bf16.mxu0 0
  %1728 = vmatpush2.bf16.msra.mxu0 %v1676
  %1729 = vmatprep.subr.bf16.mxu0 0
  %1730 = vmatpush2.bf16.msra.mxu0 %v1675
  %1731 = vmatprep.mubr.bf16.mxu0 %v1348
  %1732 = vmatmul.mubr.bf16.gmra.mxu0 %v1347
  %v1733 = vpop.f32.mrf.mxu0
  %v1734 = vadd.f32 %v326, %v1733
  %v1735 = vpop.f32.mrf.mxu0
  %v1736 = vpop.f32.mrf.mxu0
  %v1737 = vadd.f32 %v331, %v1736
  %v1738 = vpop.f32.mrf.mxu0
  %1739 = vmatprep.mubr.bf16.mxu0 %v1350
  %1740 = vmatmul.mubr.bf16.gmra.mxu0 %v1349
  %v1741 = vpop.f32.mrf.mxu0
  %v1742 = vadd.f32 %v336, %v1741
  %v1743 = vpop.f32.mrf.mxu0
  %v1744 = vpop.f32.mrf.mxu0
  %v1745 = vadd.f32 %v341, %v1744
  %v1746 = vpop.f32.mrf.mxu0
  %1747 = vmatprep.mubr.bf16.mxu0 %v1352
  %1748 = vmatmul.mubr.bf16.gmra.mxu0 %v1351
  %v1749 = vpop.f32.mrf.mxu0
  %v1750 = vadd.f32 %v346, %v1749
  %v1751 = vpop.f32.mrf.mxu0
  %v1752 = vpop.f32.mrf.mxu0
  %v1753 = vadd.f32 %v351, %v1752
  %v1754 = vpop.f32.mrf.mxu0
  %1755 = vmatprep.mubr.bf16.mxu0 %v1354
  %1756 = vmatmul.mubr.bf16.gmra.mxu0 %v1353
  %v1757 = vpop.f32.mrf.mxu0
  %v1758 = vadd.f32 %v356, %v1757
  %v1759 = vpop.f32.mrf.mxu0
  %v1760 = vpop.f32.mrf.mxu0
  %v1761 = vadd.f32 %v361, %v1760
  %v1762 = vpop.f32.mrf.mxu0
  %1763 = vmatprep.mubr.bf16.mxu0 %v1356
  %1764 = vmatmul.mubr.bf16.gmra.mxu0 %v1355
  %v1765 = vpop.f32.mrf.mxu0
  %v1766 = vadd.f32 %v366, %v1765
  %v1767 = vpop.f32.mrf.mxu0
  %v1768 = vpop.f32.mrf.mxu0
  %v1769 = vadd.f32 %v371, %v1768
  %v1770 = vpop.f32.mrf.mxu0
  %1771 = vmatprep.mubr.bf16.mxu0 %v1358
  %1772 = vmatmul.mubr.bf16.gmra.mxu0 %v1357
  %v1773 = vpop.f32.mrf.mxu0
  %v1774 = vadd.f32 %v376, %v1773
  %v1775 = vpop.f32.mrf.mxu0
  %v1776 = vpop.f32.mrf.mxu0
  %v1777 = vadd.f32 %v381, %v1776
  %v1778 = vpop.f32.mrf.mxu0
  %1779 = vmatprep.mubr.bf16.mxu0 %v1360
  %1780 = vmatmul.mubr.bf16.gmra.mxu0 %v1359
  %v1781 = vpop.f32.mrf.mxu0
  %v1782 = vadd.f32 %v386, %v1781
  %v1783 = vpop.f32.mrf.mxu0
  %v1784 = vpop.f32.mrf.mxu0
  %v1785 = vadd.f32 %v391, %v1784
  %v1786 = vpop.f32.mrf.mxu0
  %1787 = vmatprep.mubr.bf16.mxu0 %v1362
  %1788 = vmatmul.mubr.bf16.gmra.mxu0 %v1361
  %v1789 = vpop.f32.mrf.mxu0
  %v1790 = vadd.f32 %v396, %v1789
  %v1791 = vpop.f32.mrf.mxu0
  %v1792 = vpop.f32.mrf.mxu0
  %v1793 = vadd.f32 %v401, %v1792
  %v1794 = vpop.f32.mrf.mxu0
  %1795 = vmatprep.mubr.bf16.mxu0 %v1364
  %1796 = vmatmul.mubr.bf16.gmra.mxu0 %v1363
  %v1797 = vpop.f32.mrf.mxu0
  %v1798 = vadd.f32 %v406, %v1797
  %v1799 = vpop.f32.mrf.mxu0
  %v1800 = vpop.f32.mrf.mxu0
  %v1801 = vadd.f32 %v411, %v1800
  %v1802 = vpop.f32.mrf.mxu0
  %1803 = vmatprep.mubr.bf16.mxu0 %v1366
  %1804 = vmatmul.mubr.bf16.gmra.mxu0 %v1365
  %v1805 = vpop.f32.mrf.mxu0
  %v1806 = vadd.f32 %v416, %v1805
  %v1807 = vpop.f32.mrf.mxu0
  %v1808 = vpop.f32.mrf.mxu0
  %v1809 = vadd.f32 %v421, %v1808
  %v1810 = vpop.f32.mrf.mxu0
  %1811 = vmatprep.mubr.bf16.mxu0 %v1368
  %1812 = vmatmul.mubr.bf16.gmra.mxu0 %v1367
  %v1813 = vpop.f32.mrf.mxu0
  %v1814 = vadd.f32 %v426, %v1813
  %v1815 = vpop.f32.mrf.mxu0
  %v1816 = vpop.f32.mrf.mxu0
  %v1817 = vadd.f32 %v431, %v1816
  %v1818 = vpop.f32.mrf.mxu0
  %1819 = vmatprep.mubr.bf16.mxu0 %v1370
  %1820 = vmatmul.mubr.bf16.gmra.mxu0 %v1369
  %v1821 = vpop.f32.mrf.mxu0
  %v1822 = vadd.f32 %v436, %v1821
  %v1823 = vpop.f32.mrf.mxu0
  %v1824 = vpop.f32.mrf.mxu0
  %v1825 = vadd.f32 %v441, %v1824
  %v1826 = vpop.f32.mrf.mxu0
  %1827 = vmatprep.mubr.bf16.mxu0 %v1372
  %1828 = vmatmul.mubr.bf16.gmra.mxu0 %v1371
  %v1829 = vpop.f32.mrf.mxu0
  %v1830 = vadd.f32 %v446, %v1829
  %v1831 = vpop.f32.mrf.mxu0
  %v1832 = vpop.f32.mrf.mxu0
  %v1833 = vadd.f32 %v451, %v1832
  %v1834 = vpop.f32.mrf.mxu0
  %1835 = vmatprep.mubr.bf16.mxu0 %v1374
  %1836 = vmatmul.mubr.bf16.gmra.mxu0 %v1373
  %v1837 = vpop.f32.mrf.mxu0
  %v1838 = vadd.f32 %v456, %v1837
  %v1839 = vpop.f32.mrf.mxu0
  %v1840 = vpop.f32.mrf.mxu0
  %v1841 = vadd.f32 %v461, %v1840
  %v1842 = vpop.f32.mrf.mxu0
  %1843 = vmatprep.mubr.bf16.mxu0 %v1376
  %1844 = vmatmul.mubr.bf16.gmra.mxu0 %v1375
  %v1845 = vpop.f32.mrf.mxu0
  %v1846 = vadd.f32 %v466, %v1845
  %v1847 = vpop.f32.mrf.mxu0
  %v1848 = vpop.f32.mrf.mxu0
  %v1849 = vadd.f32 %v471, %v1848
  %v1850 = vpop.f32.mrf.mxu0
  %1851 = vmatprep.mubr.bf16.mxu0 %v1378
  %1852 = vmatmul.mubr.bf16.gmra.mxu0 %v1377
  %v1853 = vpop.f32.mrf.mxu0
  %v1854 = vadd.f32 %v476, %v1853
  %v1855 = vpop.f32.mrf.mxu0
  %v1856 = vpop.f32.mrf.mxu0
  %v1857 = vadd.f32 %v481, %v1856
  %v1858 = vpop.f32.mrf.mxu0
  %1859 = vmatprep.mubr.bf16.mxu0 %v1380
  %1860 = vmatmul.mubr.bf16.gmra.mxu0 %v1379
  %v1861 = vpop.f32.mrf.mxu0
  %v1862 = vadd.f32 %v486, %v1861
  %v1863 = vpop.f32.mrf.mxu0
  %v1864 = vpop.f32.mrf.mxu0
  %v1865 = vadd.f32 %v491, %v1864
  %v1866 = vpop.f32.mrf.mxu0
  %1867 = vmatprep.mubr.bf16.mxu0 %v1382
  %1868 = vmatmul.mubr.bf16.gmra.mxu0 %v1381
  %v1869 = vpop.f32.mrf.mxu0
  %v1870 = vadd.f32 %v496, %v1869
  %v1871 = vpop.f32.mrf.mxu0
  %v1872 = vpop.f32.mrf.mxu0
  %v1873 = vadd.f32 %v501, %v1872
  %v1874 = vpop.f32.mrf.mxu0
  %1875 = vmatprep.mubr.bf16.mxu0 %v1384
  %1876 = vmatmul.mubr.bf16.gmra.mxu0 %v1383
  %v1877 = vpop.f32.mrf.mxu0
  %v1878 = vadd.f32 %v506, %v1877
  %v1879 = vpop.f32.mrf.mxu0
  %v1880 = vpop.f32.mrf.mxu0
  %v1881 = vadd.f32 %v511, %v1880
  %v1882 = vpop.f32.mrf.mxu0
  %1883 = vmatprep.mubr.bf16.mxu0 %v1386
  %1884 = vmatmul.mubr.bf16.gmra.mxu0 %v1385
  %v1885 = vpop.f32.mrf.mxu0
  %v1886 = vadd.f32 %v516, %v1885
  %v1887 = vpop.f32.mrf.mxu0
  %v1888 = vpop.f32.mrf.mxu0
  %v1889 = vadd.f32 %v521, %v1888
  %v1890 = vpop.f32.mrf.mxu0
  %1891 = vmatprep.mubr.bf16.mxu0 %v1388
  %1892 = vmatmul.mubr.bf16.gmra.mxu0 %v1387
  %v1893 = vpop.f32.mrf.mxu0
  %v1894 = vadd.f32 %v526, %v1893
  %v1895 = vpop.f32.mrf.mxu0
  %v1896 = vpop.f32.mrf.mxu0
  %v1897 = vadd.f32 %v531, %v1896
  %v1898 = vpop.f32.mrf.mxu0
  %1899 = vmatprep.mubr.bf16.mxu0 %v1390
  %1900 = vmatmul.mubr.bf16.gmra.mxu0 %v1389
  %v1901 = vpop.f32.mrf.mxu0
  %v1902 = vadd.f32 %v536, %v1901
  %v1903 = vpop.f32.mrf.mxu0
  %v1904 = vpop.f32.mrf.mxu0
  %v1905 = vadd.f32 %v541, %v1904
  %v1906 = vpop.f32.mrf.mxu0
  %1907 = vmatprep.mubr.bf16.mxu0 %v1392
  %1908 = vmatmul.mubr.bf16.gmra.mxu0 %v1391
  %v1909 = vpop.f32.mrf.mxu0
  %v1910 = vadd.f32 %v546, %v1909
  %v1911 = vpop.f32.mrf.mxu0
  %v1912 = vpop.f32.mrf.mxu0
  %v1913 = vadd.f32 %v551, %v1912
  %v1914 = vpop.f32.mrf.mxu0
  %1915 = vmatprep.mubr.bf16.mxu0 %v1394
  %1916 = vmatmul.mubr.bf16.gmra.mxu0 %v1393
  %v1917 = vpop.f32.mrf.mxu0
  %v1918 = vadd.f32 %v556, %v1917
  %v1919 = vpop.f32.mrf.mxu0
  %v1920 = vpop.f32.mrf.mxu0
  %v1921 = vadd.f32 %v561, %v1920
  %v1922 = vpop.f32.mrf.mxu0
  %1923 = vmatprep.mubr.bf16.mxu0 %v1396
  %1924 = vmatmul.mubr.bf16.gmra.mxu0 %v1395
  %v1925 = vpop.f32.mrf.mxu0
  %v1926 = vadd.f32 %v566, %v1925
  %v1927 = vpop.f32.mrf.mxu0
  %v1928 = vpop.f32.mrf.mxu0
  %v1929 = vadd.f32 %v571, %v1928
  %v1930 = vpop.f32.mrf.mxu0
  %1931 = vmatprep.mubr.bf16.mxu0 %v1398
  %1932 = vmatmul.mubr.bf16.gmra.mxu0 %v1397
  %v1933 = vpop.f32.mrf.mxu0
  %v1934 = vadd.f32 %v576, %v1933
  %v1935 = vpop.f32.mrf.mxu0
  %v1936 = vpop.f32.mrf.mxu0
  %v1937 = vadd.f32 %v581, %v1936
  %v1938 = vpop.f32.mrf.mxu0
  %1939 = vmatprep.mubr.bf16.mxu0 %v1400
  %1940 = vmatmul.mubr.bf16.gmra.mxu0 %v1399
  %v1941 = vpop.f32.mrf.mxu0
  %v1942 = vadd.f32 %v586, %v1941
  %v1943 = vpop.f32.mrf.mxu0
  %v1944 = vpop.f32.mrf.mxu0
  %v1945 = vadd.f32 %v591, %v1944
  %v1946 = vpop.f32.mrf.mxu0
  %1947 = vmatprep.mubr.bf16.mxu0 %v1402
  %1948 = vmatmul.mubr.bf16.gmra.mxu0 %v1401
  %v1949 = vpop.f32.mrf.mxu0
  %v1950 = vadd.f32 %v596, %v1949
  %v1951 = vpop.f32.mrf.mxu0
  %v1952 = vpop.f32.mrf.mxu0
  %v1953 = vadd.f32 %v601, %v1952
  %v1954 = vpop.f32.mrf.mxu0
  %1955 = vmatprep.mubr.bf16.mxu0 %v1404
  %1956 = vmatmul.mubr.bf16.gmra.mxu0 %v1403
  %v1957 = vpop.f32.mrf.mxu0
  %v1958 = vadd.f32 %v606, %v1957
  %v1959 = vpop.f32.mrf.mxu0
  %v1960 = vpop.f32.mrf.mxu0
  %v1961 = vadd.f32 %v611, %v1960
  %v1962 = vpop.f32.mrf.mxu0
  %1963 = vmatprep.mubr.bf16.mxu0 %v1406
  %1964 = vmatmul.mubr.bf16.gmra.mxu0 %v1405
  %v1965 = vpop.f32.mrf.mxu0
  %v1966 = vadd.f32 %v616, %v1965
  %v1967 = vpop.f32.mrf.mxu0
  %v1968 = vpop.f32.mrf.mxu0
  %v1969 = vadd.f32 %v621, %v1968
  %v1970 = vpop.f32.mrf.mxu0
  %1971 = vmatprep.mubr.bf16.mxu0 %v1408
  %1972 = vmatmul.mubr.bf16.gmra.mxu0 %v1407
  %v1973 = vpop.f32.mrf.mxu0
  %v1974 = vadd.f32 %v626, %v1973
  %v1975 = vpop.f32.mrf.mxu0
  %v1976 = vpop.f32.mrf.mxu0
  %v1977 = vadd.f32 %v631, %v1976
  %v1978 = vpop.f32.mrf.mxu0
  %1979 = vmatprep.mubr.bf16.mxu0 %v1410
  %1980 = vmatmul.mubr.bf16.gmra.mxu0 %v1409
  %v1981 = vpop.f32.mrf.mxu0
  %v1982 = vadd.f32 %v636, %v1981
  %v1983 = vpop.f32.mrf.mxu0
  %v1984 = vpop.f32.mrf.mxu0
  %v1985 = vadd.f32 %v641, %v1984
  %v1986 = vpop.f32.mrf.mxu0
  %1987 = vmatprep.mubr.bf16.mxu0 %v1412
  %1988 = vmatmul.mubr.bf16.gmra.mxu0 %v1411
  %v1989 = vpop.f32.mrf.mxu0
  %v1990 = vadd.f32 %v646, %v1989
  %v1991 = vpop.f32.mrf.mxu0
  %v1992 = vpop.f32.mrf.mxu0
  %v1993 = vadd.f32 %v651, %v1992
  %v1994 = vpop.f32.mrf.mxu0
  %1995 = vmatprep.mubr.bf16.mxu0 %v1414
  %1996 = vmatmul.mubr.bf16.gmra.mxu0 %v1413
  %v1997 = vpop.f32.mrf.mxu0
  %v1998 = vadd.f32 %v656, %v1997
  %v1999 = vpop.f32.mrf.mxu0
  %v2000 = vpop.f32.mrf.mxu0
  %v2001 = vadd.f32 %v661, %v2000
  %v2002 = vpop.f32.mrf.mxu0
  %2003 = vmatprep.mubr.bf16.mxu0 %v1416
  %2004 = vmatmul.mubr.bf16.gmra.mxu0 %v1415
  %v2005 = vpop.f32.mrf.mxu0
  %v2006 = vadd.f32 %v666, %v2005
  %v2007 = vpop.f32.mrf.mxu0
  %v2008 = vpop.f32.mrf.mxu0
  %v2009 = vadd.f32 %v671, %v2008
  %v2010 = vpop.f32.mrf.mxu0
  %2011 = vmatprep.mubr.bf16.mxu0 %v1418
  %2012 = vmatmul.mubr.bf16.gmra.mxu0 %v1417
  %v2013 = vpop.f32.mrf.mxu0
  %v2014 = vadd.f32 %v676, %v2013
  %v2015 = vpop.f32.mrf.mxu0
  %v2016 = vpop.f32.mrf.mxu0
  %v2017 = vadd.f32 %v681, %v2016
  %v2018 = vpop.f32.mrf.mxu0
  %2019 = vmatprep.mubr.bf16.mxu0 %v1420
  %2020 = vmatmul.mubr.bf16.gmra.mxu0 %v1419
  %v2021 = vpop.f32.mrf.mxu0
  %v2022 = vadd.f32 %v686, %v2021
  %v2023 = vpop.f32.mrf.mxu0
  %v2024 = vpop.f32.mrf.mxu0
  %v2025 = vadd.f32 %v691, %v2024
  %v2026 = vpop.f32.mrf.mxu0
  %2027 = vmatprep.mubr.bf16.mxu0 %v1422
  %2028 = vmatmul.mubr.bf16.gmra.mxu0 %v1421
  %v2029 = vpop.f32.mrf.mxu0
  %v2030 = vadd.f32 %v696, %v2029
  %v2031 = vpop.f32.mrf.mxu0
  %v2032 = vpop.f32.mrf.mxu0
  %v2033 = vadd.f32 %v701, %v2032
  %v2034 = vpop.f32.mrf.mxu0
  %2035 = vmatprep.mubr.bf16.mxu0 %v1424
  %2036 = vmatmul.mubr.bf16.gmra.mxu0 %v1423
  %v2037 = vpop.f32.mrf.mxu0
  %v2038 = vadd.f32 %v706, %v2037
  %v2039 = vpop.f32.mrf.mxu0
  %v2040 = vpop.f32.mrf.mxu0
  %v2041 = vadd.f32 %v711, %v2040
  %v2042 = vpop.f32.mrf.mxu0
  %2043 = vmatprep.mubr.bf16.mxu0 %v1426
  %2044 = vmatmul.mubr.bf16.gmra.mxu0 %v1425
  %v2045 = vpop.f32.mrf.mxu0
  %v2046 = vadd.f32 %v716, %v2045
  %v2047 = vpop.f32.mrf.mxu0
  %v2048 = vpop.f32.mrf.mxu0
  %v2049 = vadd.f32 %v721, %v2048
  %v2050 = vpop.f32.mrf.mxu0
  %2051 = vmatprep.mubr.bf16.mxu0 %v1428
  %2052 = vmatmul.mubr.bf16.gmra.mxu0 %v1427
  %v2053 = vpop.f32.mrf.mxu0
  %v2054 = vadd.f32 %v726, %v2053
  %v2055 = vpop.f32.mrf.mxu0
  %v2056 = vpop.f32.mrf.mxu0
  %v2057 = vadd.f32 %v731, %v2056
  %v2058 = vpop.f32.mrf.mxu0
  %2059 = vmatprep.mubr.bf16.mxu0 %v1430
  %2060 = vmatmul.mubr.bf16.gmra.mxu0 %v1429
  %v2061 = vpop.f32.mrf.mxu0
  %v2062 = vadd.f32 %v736, %v2061
  %v2063 = vpop.f32.mrf.mxu0
  %v2064 = vpop.f32.mrf.mxu0
  %v2065 = vadd.f32 %v741, %v2064
  %v2066 = vpop.f32.mrf.mxu0
  %2067 = vmatprep.mubr.bf16.mxu0 %v1432
  %2068 = vmatmul.mubr.bf16.gmra.mxu0 %v1431
  %v2069 = vpop.f32.mrf.mxu0
  %v2070 = vadd.f32 %v746, %v2069
  %v2071 = vpop.f32.mrf.mxu0
  %v2072 = vpop.f32.mrf.mxu0
  %v2073 = vadd.f32 %v751, %v2072
  %v2074 = vpop.f32.mrf.mxu0
  %2075 = vmatprep.mubr.bf16.mxu0 %v1434
  %2076 = vmatmul.mubr.bf16.gmra.mxu0 %v1433
  %v2077 = vpop.f32.mrf.mxu0
  %v2078 = vadd.f32 %v756, %v2077
  %v2079 = vpop.f32.mrf.mxu0
  %v2080 = vpop.f32.mrf.mxu0
  %v2081 = vadd.f32 %v761, %v2080
  %v2082 = vpop.f32.mrf.mxu0
  %2083 = vmatprep.mubr.bf16.mxu0 %v1436
  %2084 = vmatmul.mubr.bf16.gmra.mxu0 %v1435
  %v2085 = vpop.f32.mrf.mxu0
  %v2086 = vadd.f32 %v766, %v2085
  %v2087 = vpop.f32.mrf.mxu0
  %v2088 = vpop.f32.mrf.mxu0
  %v2089 = vadd.f32 %v771, %v2088
  %v2090 = vpop.f32.mrf.mxu0
  %2091 = vmatprep.mubr.bf16.mxu0 %v1438
  %2092 = vmatmul.mubr.bf16.gmra.mxu0 %v1437
  %v2093 = vpop.f32.mrf.mxu0
  %v2094 = vadd.f32 %v776, %v2093
  %v2095 = vpop.f32.mrf.mxu0
  %v2096 = vpop.f32.mrf.mxu0
  %v2097 = vadd.f32 %v781, %v2096
  %v2098 = vpop.f32.mrf.mxu0
  %2099 = vmatprep.mubr.bf16.mxu0 %v1440
  %2100 = vmatmul.mubr.bf16.gmra.mxu0 %v1439
  %v2101 = vpop.f32.mrf.mxu0
  %v2102 = vadd.f32 %v786, %v2101
  %v2103 = vpop.f32.mrf.mxu0
  %v2104 = vpop.f32.mrf.mxu0
  %v2105 = vadd.f32 %v791, %v2104
  %v2106 = vpop.f32.mrf.mxu0
  %2107 = vmatprep.mubr.bf16.mxu0 %v1442
  %2108 = vmatmul.mubr.bf16.gmra.mxu0 %v1441
  %v2109 = vpop.f32.mrf.mxu0
  %v2110 = vadd.f32 %v796, %v2109
  %v2111 = vpop.f32.mrf.mxu0
  %v2112 = vpop.f32.mrf.mxu0
  %v2113 = vadd.f32 %v801, %v2112
  %v2114 = vpop.f32.mrf.mxu0
  %2115 = vmatprep.mubr.bf16.mxu0 %v1444
  %2116 = vmatmul.mubr.bf16.gmra.mxu0 %v1443
  %v2117 = vpop.f32.mrf.mxu0
  %v2118 = vadd.f32 %v806, %v2117
  %v2119 = vpop.f32.mrf.mxu0
  %v2120 = vpop.f32.mrf.mxu0
  %v2121 = vadd.f32 %v811, %v2120
  %v2122 = vpop.f32.mrf.mxu0
  %2123 = vmatprep.mubr.bf16.mxu0 %v1446
  %2124 = vmatmul.mubr.bf16.gmra.mxu0 %v1445
  %v2125 = vpop.f32.mrf.mxu0
  %v2126 = vadd.f32 %v816, %v2125
  %v2127 = vpop.f32.mrf.mxu0
  %v2128 = vpop.f32.mrf.mxu0
  %v2129 = vadd.f32 %v821, %v2128
  %v2130 = vpop.f32.mrf.mxu0
  %2131 = vmatprep.mubr.bf16.mxu0 %v1448
  %2132 = vmatmul.mubr.bf16.gmra.mxu0 %v1447
  %v2133 = vpop.f32.mrf.mxu0
  %v2134 = vadd.f32 %v826, %v2133
  %v2135 = vpop.f32.mrf.mxu0
  %v2136 = vpop.f32.mrf.mxu0
  %v2137 = vadd.f32 %v831, %v2136
  %v2138 = vpop.f32.mrf.mxu0
  %2139 = vmatprep.mubr.bf16.mxu0 %v1450
  %2140 = vmatmul.mubr.bf16.gmra.mxu0 %v1449
  %v2141 = vpop.f32.mrf.mxu0
  %v2142 = vadd.f32 %v836, %v2141
  %v2143 = vpop.f32.mrf.mxu0
  %v2144 = vpop.f32.mrf.mxu0
  %v2145 = vadd.f32 %v841, %v2144
  %v2146 = vpop.f32.mrf.mxu0
  %2147 = vmatprep.mubr.bf16.mxu0 %v1452
  %2148 = vmatmul.mubr.bf16.gmra.mxu0 %v1451
  %v2149 = vpop.f32.mrf.mxu0
  %v2150 = vadd.f32 %v846, %v2149
  %v2151 = vpop.f32.mrf.mxu0
  %v2152 = vpop.f32.mrf.mxu0
  %v2153 = vadd.f32 %v851, %v2152
  %v2154 = vpop.f32.mrf.mxu0
  %2155 = vmatprep.mubr.bf16.mxu0 %v1454
  %2156 = vmatmul.mubr.bf16.gmra.mxu0 %v1453
  %v2157 = vpop.f32.mrf.mxu0
  %v2158 = vadd.f32 %v856, %v2157
  %v2159 = vpop.f32.mrf.mxu0
  %v2160 = vpop.f32.mrf.mxu0
  %v2161 = vadd.f32 %v861, %v2160
  %v2162 = vpop.f32.mrf.mxu0
  %2163 = vmatprep.mubr.bf16.mxu0 %v1456
  %2164 = vmatmul.mubr.bf16.gmra.mxu0 %v1455
  %v2165 = vpop.f32.mrf.mxu0
  %v2166 = vadd.f32 %v866, %v2165
  %v2167 = vpop.f32.mrf.mxu0
  %v2168 = vpop.f32.mrf.mxu0
  %v2169 = vadd.f32 %v871, %v2168
  %v2170 = vpop.f32.mrf.mxu0
  %2171 = vmatprep.mubr.bf16.mxu0 %v1458
  %2172 = vmatmul.mubr.bf16.gmra.mxu0 %v1457
  %v2173 = vpop.f32.mrf.mxu0
  %v2174 = vadd.f32 %v876, %v2173
  %v2175 = vpop.f32.mrf.mxu0
  %v2176 = vpop.f32.mrf.mxu0
  %v2177 = vadd.f32 %v881, %v2176
  %v2178 = vpop.f32.mrf.mxu0
  %2179 = vmatprep.mubr.bf16.mxu0 %v1460
  %2180 = vmatmul.mubr.bf16.gmra.mxu0 %v1459
  %v2181 = vpop.f32.mrf.mxu0
  %v2182 = vadd.f32 %v886, %v2181
  %v2183 = vpop.f32.mrf.mxu0
  %v2184 = vpop.f32.mrf.mxu0
  %v2185 = vadd.f32 %v891, %v2184
  %v2186 = vpop.f32.mrf.mxu0
  %2187 = vmatprep.mubr.bf16.mxu0 %v1462
  %2188 = vmatmul.mubr.bf16.gmra.mxu0 %v1461
  %v2189 = vpop.f32.mrf.mxu0
  %v2190 = vadd.f32 %v896, %v2189
  %v2191 = vpop.f32.mrf.mxu0
  %v2192 = vpop.f32.mrf.mxu0
  %v2193 = vadd.f32 %v901, %v2192
  %v2194 = vpop.f32.mrf.mxu0
  %2195 = vmatprep.mubr.bf16.mxu0 %v1464
  %2196 = vmatmul.mubr.bf16.gmra.mxu0 %v1463
  %v2197 = vpop.f32.mrf.mxu0
  %v2198 = vadd.f32 %v906, %v2197
  %v2199 = vpop.f32.mrf.mxu0
  %v2200 = vpop.f32.mrf.mxu0
  %v2201 = vadd.f32 %v911, %v2200
  %v2202 = vpop.f32.mrf.mxu0
  %2203 = vmatprep.mubr.bf16.mxu0 %v1466
  %2204 = vmatmul.mubr.bf16.gmra.mxu0 %v1465
  %v2205 = vpop.f32.mrf.mxu0
  %v2206 = vadd.f32 %v916, %v2205
  %v2207 = vpop.f32.mrf.mxu0
  %v2208 = vpop.f32.mrf.mxu0
  %v2209 = vadd.f32 %v921, %v2208
  %v2210 = vpop.f32.mrf.mxu0
  %2211 = vmatprep.mubr.bf16.mxu0 %v1468
  %2212 = vmatmul.mubr.bf16.gmra.mxu0 %v1467
  %v2213 = vpop.f32.mrf.mxu0
  %v2214 = vadd.f32 %v926, %v2213
  %v2215 = vpop.f32.mrf.mxu0
  %v2216 = vpop.f32.mrf.mxu0
  %v2217 = vadd.f32 %v931, %v2216
  %v2218 = vpop.f32.mrf.mxu0
  %2219 = vmatprep.mubr.bf16.mxu0 %v1470
  %2220 = vmatmul.mubr.bf16.gmra.mxu0 %v1469
  %v2221 = vpop.f32.mrf.mxu0
  %v2222 = vadd.f32 %v936, %v2221
  %v2223 = vpop.f32.mrf.mxu0
  %v2224 = vpop.f32.mrf.mxu0
  %v2225 = vadd.f32 %v941, %v2224
  %v2226 = vpop.f32.mrf.mxu0
  %2227 = vmatprep.mubr.bf16.mxu0 %v1472
  %2228 = vmatmul.mubr.bf16.gmra.mxu0 %v1471
  %v2229 = vpop.f32.mrf.mxu0
  %v2230 = vadd.f32 %v946, %v2229
  %v2231 = vpop.f32.mrf.mxu0
  %v2232 = vpop.f32.mrf.mxu0
  %v2233 = vadd.f32 %v951, %v2232
  %v2234 = vpop.f32.mrf.mxu0
  %2235 = vmatprep.mubr.bf16.mxu0 %v1474
  %2236 = vmatmul.mubr.bf16.gmra.mxu0 %v1473
  %v2237 = vpop.f32.mrf.mxu0
  %v2238 = vadd.f32 %v956, %v2237
  %v2239 = vpop.f32.mrf.mxu0
  %v2240 = vpop.f32.mrf.mxu0
  %v2241 = vadd.f32 %v961, %v2240
  %v2242 = vpop.f32.mrf.mxu0
  %2243 = vdwg.mxu0
  %vm2244 = vcmp.gt.f32.partialorder %v1734, 0.0
  %vm2245 = vcmp.gt.f32.partialorder %v1737, 0.0
  %vm2246 = vcmp.gt.f32.partialorder %v1742, 0.0
  %vm2247 = vcmp.gt.f32.partialorder %v1745, 0.0
  %vm2248 = vcmp.gt.f32.partialorder %v1750, 0.0
  %vm2249 = vcmp.gt.f32.partialorder %v1753, 0.0
  %vm2250 = vcmp.gt.f32.partialorder %v1758, 0.0
  %vm2251 = vcmp.gt.f32.partialorder %v1761, 0.0
  %vm2252 = vcmp.gt.f32.partialorder %v1766, 0.0
  %vm2253 = vcmp.gt.f32.partialorder %v1769, 0.0
  %vm2254 = vcmp.gt.f32.partialorder %v1774, 0.0
  %vm2255 = vcmp.gt.f32.partialorder %v1777, 0.0
  %vm2256 = vcmp.gt.f32.partialorder %v1782, 0.0
  %vm2257 = vcmp.gt.f32.partialorder %v1785, 0.0
  %vm2258 = vcmp.gt.f32.partialorder %v1790, 0.0
  %vm2259 = vcmp.gt.f32.partialorder %v1793, 0.0
  %vm2260 = vcmp.gt.f32.partialorder %v1798, 0.0
  %vm2261 = vcmp.gt.f32.partialorder %v1801, 0.0
  %vm2262 = vcmp.gt.f32.partialorder %v1806, 0.0
  %vm2263 = vcmp.gt.f32.partialorder %v1809, 0.0
  %vm2264 = vcmp.gt.f32.partialorder %v1814, 0.0
  %vm2265 = vcmp.gt.f32.partialorder %v1817, 0.0
  %vm2266 = vcmp.gt.f32.partialorder %v1822, 0.0
  %vm2267 = vcmp.gt.f32.partialorder %v1825, 0.0
  %vm2268 = vcmp.gt.f32.partialorder %v1830, 0.0
  %vm2269 = vcmp.gt.f32.partialorder %v1833, 0.0
  %vm2270 = vcmp.gt.f32.partialorder %v1838, 0.0
  %vm2271 = vcmp.gt.f32.partialorder %v1841, 0.0
  %vm2272 = vcmp.gt.f32.partialorder %v1846, 0.0
  %vm2273 = vcmp.gt.f32.partialorder %v1849, 0.0
  %vm2274 = vcmp.gt.f32.partialorder %v1854, 0.0
  %vm2275 = vcmp.gt.f32.partialorder %v1857, 0.0
  %vm2276 = vcmp.gt.f32.partialorder %v1862, 0.0
  %vm2277 = vcmp.gt.f32.partialorder %v1865, 0.0
  %vm2278 = vcmp.gt.f32.partialorder %v1870, 0.0
  %vm2279 = vcmp.gt.f32.partialorder %v1873, 0.0
  %vm2280 = vcmp.gt.f32.partialorder %v1878, 0.0
  %vm2281 = vcmp.gt.f32.partialorder %v1881, 0.0
  %vm2282 = vcmp.gt.f32.partialorder %v1886, 0.0
  %vm2283 = vcmp.gt.f32.partialorder %v1889, 0.0
  %vm2284 = vcmp.gt.f32.partialorder %v1894, 0.0
  %vm2285 = vcmp.gt.f32.partialorder %v1897, 0.0
  %vm2286 = vcmp.gt.f32.partialorder %v1902, 0.0
  %vm2287 = vcmp.gt.f32.partialorder %v1905, 0.0
  %vm2288 = vcmp.gt.f32.partialorder %v1910, 0.0
  %vm2289 = vcmp.gt.f32.partialorder %v1913, 0.0
  %vm2290 = vcmp.gt.f32.partialorder %v1918, 0.0
  %vm2291 = vcmp.gt.f32.partialorder %v1921, 0.0
  %vm2292 = vcmp.gt.f32.partialorder %v1926, 0.0
  %vm2293 = vcmp.gt.f32.partialorder %v1929, 0.0
  %vm2294 = vcmp.gt.f32.partialorder %v1934, 0.0
  %vm2295 = vcmp.gt.f32.partialorder %v1937, 0.0
  %vm2296 = vcmp.gt.f32.partialorder %v1942, 0.0
  %vm2297 = vcmp.gt.f32.partialorder %v1945, 0.0
  %vm2298 = vcmp.gt.f32.partialorder %v1950, 0.0
  %vm2299 = vcmp.gt.f32.partialorder %v1953, 0.0
  %vm2300 = vcmp.gt.f32.partialorder %v1958, 0.0
  %vm2301 = vcmp.gt.f32.partialorder %v1961, 0.0
  %vm2302 = vcmp.gt.f32.partialorder %v1966, 0.0
  %vm2303 = vcmp.gt.f32.partialorder %v1969, 0.0
  %vm2304 = vcmp.gt.f32.partialorder %v1974, 0.0
  %vm2305 = vcmp.gt.f32.partialorder %v1977, 0.0
  %vm2306 = vcmp.gt.f32.partialorder %v1982, 0.0
  %vm2307 = vcmp.gt.f32.partialorder %v1985, 0.0
  %vm2308 = vcmp.gt.f32.partialorder %v1990, 0.0
  %vm2309 = vcmp.gt.f32.partialorder %v1993, 0.0
  %vm2310 = vcmp.gt.f32.partialorder %v1998, 0.0
  %vm2311 = vcmp.gt.f32.partialorder %v2001, 0.0
  %vm2312 = vcmp.gt.f32.partialorder %v2006, 0.0
  %vm2313 = vcmp.gt.f32.partialorder %v2009, 0.0
  %vm2314 = vcmp.gt.f32.partialorder %v2014, 0.0
  %vm2315 = vcmp.gt.f32.partialorder %v2017, 0.0
  %vm2316 = vcmp.gt.f32.partialorder %v2022, 0.0
  %vm2317 = vcmp.gt.f32.partialorder %v2025, 0.0
  %vm2318 = vcmp.gt.f32.partialorder %v2030, 0.0
  %vm2319 = vcmp.gt.f32.partialorder %v2033, 0.0
  %vm2320 = vcmp.gt.f32.partialorder %v2038, 0.0
  %vm2321 = vcmp.gt.f32.partialorder %v2041, 0.0
  %vm2322 = vcmp.gt.f32.partialorder %v2046, 0.0
  %vm2323 = vcmp.gt.f32.partialorder %v2049, 0.0
  %vm2324 = vcmp.gt.f32.partialorder %v2054, 0.0
  %vm2325 = vcmp.gt.f32.partialorder %v2057, 0.0
  %vm2326 = vcmp.gt.f32.partialorder %v2062, 0.0
  %vm2327 = vcmp.gt.f32.partialorder %v2065, 0.0
  %vm2328 = vcmp.gt.f32.partialorder %v2070, 0.0
  %vm2329 = vcmp.gt.f32.partialorder %v2073, 0.0
  %vm2330 = vcmp.gt.f32.partialorder %v2078, 0.0
  %vm2331 = vcmp.gt.f32.partialorder %v2081, 0.0
  %vm2332 = vcmp.gt.f32.partialorder %v2086, 0.0
  %vm2333 = vcmp.gt.f32.partialorder %v2089, 0.0
  %vm2334 = vcmp.gt.f32.partialorder %v2094, 0.0
  %vm2335 = vcmp.gt.f32.partialorder %v2097, 0.0
  %vm2336 = vcmp.gt.f32.partialorder %v2102, 0.0
  %vm2337 = vcmp.gt.f32.partialorder %v2105, 0.0
  %vm2338 = vcmp.gt.f32.partialorder %v2110, 0.0
  %vm2339 = vcmp.gt.f32.partialorder %v2113, 0.0
  %vm2340 = vcmp.gt.f32.partialorder %v2118, 0.0
  %vm2341 = vcmp.gt.f32.partialorder %v2121, 0.0
  %vm2342 = vcmp.gt.f32.partialorder %v2126, 0.0
  %vm2343 = vcmp.gt.f32.partialorder %v2129, 0.0
  %vm2344 = vcmp.gt.f32.partialorder %v2134, 0.0
  %vm2345 = vcmp.gt.f32.partialorder %v2137, 0.0
  %vm2346 = vcmp.gt.f32.partialorder %v2142, 0.0
  %vm2347 = vcmp.gt.f32.partialorder %v2145, 0.0
  %vm2348 = vcmp.gt.f32.partialorder %v2150, 0.0
  %vm2349 = vcmp.gt.f32.partialorder %v2153, 0.0
  %vm2350 = vcmp.gt.f32.partialorder %v2158, 0.0
  %vm2351 = vcmp.gt.f32.partialorder %v2161, 0.0
  %vm2352 = vcmp.gt.f32.partialorder %v2166, 0.0
  %vm2353 = vcmp.gt.f32.partialorder %v2169, 0.0
  %vm2354 = vcmp.gt.f32.partialorder %v2174, 0.0
  %vm2355 = vcmp.gt.f32.partialorder %v2177, 0.0
  %vm2356 = vcmp.gt.f32.partialorder %v2182, 0.0
  %vm2357 = vcmp.gt.f32.partialorder %v2185, 0.0
  %vm2358 = vcmp.gt.f32.partialorder %v2190, 0.0
  %vm2359 = vcmp.gt.f32.partialorder %v2193, 0.0
  %vm2360 = vcmp.gt.f32.partialorder %v2198, 0.0
  %vm2361 = vcmp.gt.f32.partialorder %v2201, 0.0
  %vm2362 = vcmp.gt.f32.partialorder %v2206, 0.0
  %vm2363 = vcmp.gt.f32.partialorder %v2209, 0.0
  %vm2364 = vcmp.gt.f32.partialorder %v2214, 0.0
  %vm2365 = vcmp.gt.f32.partialorder %v2217, 0.0
  %vm2366 = vcmp.gt.f32.partialorder %v2222, 0.0
  %vm2367 = vcmp.gt.f32.partialorder %v2225, 0.0
  %vm2368 = vcmp.gt.f32.partialorder %v2230, 0.0
  %vm2369 = vcmp.gt.f32.partialorder %v2233, 0.0
  %vm2370 = vcmp.gt.f32.partialorder %v2238, 0.0
  %vm2371 = vcmp.gt.f32.partialorder %v2241, 0.0
  %v2372 = vmin.f32 %v1734, 0.0
  %v2373 = vmin.f32 %v1737, 0.0
  %v2374 = vmin.f32 %v1742, 0.0
  %v2375 = vmin.f32 %v1745, 0.0
  %v2376 = vmin.f32 %v1750, 0.0
  %v2377 = vmin.f32 %v1753, 0.0
  %v2378 = vmin.f32 %v1758, 0.0
  %v2379 = vmin.f32 %v1761, 0.0
  %v2380 = vmin.f32 %v1766, 0.0
  %v2381 = vmin.f32 %v1769, 0.0
  %v2382 = vmin.f32 %v1774, 0.0
  %v2383 = vmin.f32 %v1777, 0.0
  %v2384 = vmin.f32 %v1782, 0.0
  %v2385 = vmin.f32 %v1785, 0.0
  %v2386 = vmin.f32 %v1790, 0.0
  %v2387 = vmin.f32 %v1793, 0.0
  %v2388 = vmin.f32 %v1798, 0.0
  %v2389 = vmin.f32 %v1801, 0.0
  %v2390 = vmin.f32 %v1806, 0.0
  %v2391 = vmin.f32 %v1809, 0.0
  %v2392 = vmin.f32 %v1814, 0.0
  %v2393 = vmin.f32 %v1817, 0.0
  %v2394 = vmin.f32 %v1822, 0.0
  %v2395 = vmin.f32 %v1825, 0.0
  %v2396 = vmin.f32 %v1830, 0.0
  %v2397 = vmin.f32 %v1833, 0.0
  %v2398 = vmin.f32 %v1838, 0.0
  %v2399 = vmin.f32 %v1841, 0.0
  %v2400 = vmin.f32 %v1846, 0.0
  %v2401 = vmin.f32 %v1849, 0.0
  %v2402 = vmin.f32 %v1854, 0.0
  %v2403 = vmin.f32 %v1857, 0.0
  %v2404 = vmin.f32 %v1862, 0.0
  %v2405 = vmin.f32 %v1865, 0.0
  %v2406 = vmin.f32 %v1870, 0.0
  %v2407 = vmin.f32 %v1873, 0.0
  %v2408 = vmin.f32 %v1878, 0.0
  %v2409 = vmin.f32 %v1881, 0.0
  %v2410 = vmin.f32 %v1886, 0.0
  %v2411 = vmin.f32 %v1889, 0.0
  %v2412 = vmin.f32 %v1894, 0.0
  %v2413 = vmin.f32 %v1897, 0.0
  %v2414 = vmin.f32 %v1902, 0.0
  %v2415 = vmin.f32 %v1905, 0.0
  %v2416 = vmin.f32 %v1910, 0.0
  %v2417 = vmin.f32 %v1913, 0.0
  %v2418 = vmin.f32 %v1918, 0.0
  %v2419 = vmin.f32 %v1921, 0.0
  %v2420 = vmin.f32 %v1926, 0.0
  %v2421 = vmin.f32 %v1929, 0.0
  %v2422 = vmin.f32 %v1934, 0.0
  %v2423 = vmin.f32 %v1937, 0.0
  %v2424 = vmin.f32 %v1942, 0.0
  %v2425 = vmin.f32 %v1945, 0.0
  %v2426 = vmin.f32 %v1950, 0.0
  %v2427 = vmin.f32 %v1953, 0.0
  %v2428 = vmin.f32 %v1958, 0.0
  %v2429 = vmin.f32 %v1961, 0.0
  %v2430 = vmin.f32 %v1966, 0.0
  %v2431 = vmin.f32 %v1969, 0.0
  %v2432 = vmin.f32 %v1974, 0.0
  %v2433 = vmin.f32 %v1977, 0.0
  %v2434 = vmin.f32 %v1982, 0.0
  %v2435 = vmin.f32 %v1985, 0.0
  %v2436 = vmin.f32 %v1990, 0.0
  %v2437 = vmin.f32 %v1993, 0.0
  %v2438 = vmin.f32 %v1998, 0.0
  %v2439 = vmin.f32 %v2001, 0.0
  %v2440 = vmin.f32 %v2006, 0.0
  %v2441 = vmin.f32 %v2009, 0.0
  %v2442 = vmin.f32 %v2014, 0.0
  %v2443 = vmin.f32 %v2017, 0.0
  %v2444 = vmin.f32 %v2022, 0.0
  %v2445 = vmin.f32 %v2025, 0.0
  %v2446 = vmin.f32 %v2030, 0.0
  %v2447 = vmin.f32 %v2033, 0.0
  %v2448 = vmin.f32 %v2038, 0.0
  %v2449 = vmin.f32 %v2041, 0.0
  %v2450 = vmin.f32 %v2046, 0.0
  %v2451 = vmin.f32 %v2049, 0.0
  %v2452 = vmin.f32 %v2054, 0.0
  %v2453 = vmin.f32 %v2057, 0.0
  %v2454 = vmin.f32 %v2062, 0.0
  %v2455 = vmin.f32 %v2065, 0.0
  %v2456 = vmin.f32 %v2070, 0.0
  %v2457 = vmin.f32 %v2073, 0.0
  %v2458 = vmin.f32 %v2078, 0.0
  %v2459 = vmin.f32 %v2081, 0.0
  %v2460 = vmin.f32 %v2086, 0.0
  %v2461 = vmin.f32 %v2089, 0.0
  %v2462 = vmin.f32 %v2094, 0.0
  %v2463 = vmin.f32 %v2097, 0.0
  %v2464 = vmin.f32 %v2102, 0.0
  %v2465 = vmin.f32 %v2105, 0.0
  %v2466 = vmin.f32 %v2110, 0.0
  %v2467 = vmin.f32 %v2113, 0.0
  %v2468 = vmin.f32 %v2118, 0.0
  %v2469 = vmin.f32 %v2121, 0.0
  %v2470 = vmin.f32 %v2126, 0.0
  %v2471 = vmin.f32 %v2129, 0.0
  %v2472 = vmin.f32 %v2134, 0.0
  %v2473 = vmin.f32 %v2137, 0.0
  %v2474 = vmin.f32 %v2142, 0.0
  %v2475 = vmin.f32 %v2145, 0.0
  %v2476 = vmin.f32 %v2150, 0.0
  %v2477 = vmin.f32 %v2153, 0.0
  %v2478 = vmin.f32 %v2158, 0.0
  %v2479 = vmin.f32 %v2161, 0.0
  %v2480 = vmin.f32 %v2166, 0.0
  %v2481 = vmin.f32 %v2169, 0.0
  %v2482 = vmin.f32 %v2174, 0.0
  %v2483 = vmin.f32 %v2177, 0.0
  %v2484 = vmin.f32 %v2182, 0.0
  %v2485 = vmin.f32 %v2185, 0.0
  %v2486 = vmin.f32 %v2190, 0.0
  %v2487 = vmin.f32 %v2193, 0.0
  %v2488 = vmin.f32 %v2198, 0.0
  %v2489 = vmin.f32 %v2201, 0.0
  %v2490 = vmin.f32 %v2206, 0.0
  %v2491 = vmin.f32 %v2209, 0.0
  %v2492 = vmin.f32 %v2214, 0.0
  %v2493 = vmin.f32 %v2217, 0.0
  %v2494 = vmin.f32 %v2222, 0.0
  %v2495 = vmin.f32 %v2225, 0.0
  %v2496 = vmin.f32 %v2230, 0.0
  %v2497 = vmin.f32 %v2233, 0.0
  %v2498 = vmin.f32 %v2238, 0.0
  %v2499 = vmin.f32 %v2241, 0.0
  %v2500 = vmul.f32 %v2372, 1.442695
  %v2501 = vpow.pop %v2500
  %v2502 = vmul.f32 %v2373, 1.442695
  %v2503 = vpow.pop %v2502
  %v2504 = vmul.f32 %v2374, 1.442695
  %v2505 = vpow.pop %v2504
  %v2506 = vmul.f32 %v2375, 1.442695
  %v2507 = vpow.pop %v2506
  %v2508 = vmul.f32 %v2376, 1.442695
  %v2509 = vpow.pop %v2508
  %v2510 = vmul.f32 %v2377, 1.442695
  %v2511 = vpow.pop %v2510
  %v2512 = vmul.f32 %v2378, 1.442695
  %v2513 = vpow.pop %v2512
  %v2514 = vmul.f32 %v2379, 1.442695
  %v2515 = vpow.pop %v2514
  %v2516 = vmul.f32 %v2380, 1.442695
  %v2517 = vpow.pop %v2516
  %v2518 = vmul.f32 %v2381, 1.442695
  %v2519 = vpow.pop %v2518
  %v2520 = vmul.f32 %v2382, 1.442695
  %v2521 = vpow.pop %v2520
  %v2522 = vmul.f32 %v2383, 1.442695
  %v2523 = vpow.pop %v2522
  %v2524 = vmul.f32 %v2384, 1.442695
  %v2525 = vpow.pop %v2524
  %v2526 = vmul.f32 %v2385, 1.442695
  %v2527 = vpow.pop %v2526
  %v2528 = vmul.f32 %v2386, 1.442695
  %v2529 = vpow.pop %v2528
  %v2530 = vmul.f32 %v2387, 1.442695
  %v2531 = vpow.pop %v2530
  %v2532 = vmul.f32 %v2388, 1.442695
  %v2533 = vpow.pop %v2532
  %v2534 = vmul.f32 %v2389, 1.442695
  %v2535 = vpow.pop %v2534
  %v2536 = vmul.f32 %v2390, 1.442695
  %v2537 = vpow.pop %v2536
  %v2538 = vmul.f32 %v2391, 1.442695
  %v2539 = vpow.pop %v2538
  %v2540 = vmul.f32 %v2392, 1.442695
  %v2541 = vpow.pop %v2540
  %v2542 = vmul.f32 %v2393, 1.442695
  %v2543 = vpow.pop %v2542
  %v2544 = vmul.f32 %v2394, 1.442695
  %v2545 = vpow.pop %v2544
  %v2546 = vmul.f32 %v2395, 1.442695
  %v2547 = vpow.pop %v2546
  %v2548 = vmul.f32 %v2396, 1.442695
  %v2549 = vpow.pop %v2548
  %v2550 = vmul.f32 %v2397, 1.442695
  %v2551 = vpow.pop %v2550
  %v2552 = vmul.f32 %v2398, 1.442695
  %v2553 = vpow.pop %v2552
  %v2554 = vmul.f32 %v2399, 1.442695
  %v2555 = vpow.pop %v2554
  %v2556 = vmul.f32 %v2400, 1.442695
  %v2557 = vpow.pop %v2556
  %v2558 = vmul.f32 %v2401, 1.442695
  %v2559 = vpow.pop %v2558
  %v2560 = vmul.f32 %v2402, 1.442695
  %v2561 = vpow.pop %v2560
  %v2562 = vmul.f32 %v2403, 1.442695
  %v2563 = vpow.pop %v2562
  %v2564 = vmul.f32 %v2404, 1.442695
  %v2565 = vpow.pop %v2564
  %v2566 = vmul.f32 %v2405, 1.442695
  %v2567 = vpow.pop %v2566
  %v2568 = vmul.f32 %v2406, 1.442695
  %v2569 = vpow.pop %v2568
  %v2570 = vmul.f32 %v2407, 1.442695
  %v2571 = vpow.pop %v2570
  %v2572 = vmul.f32 %v2408, 1.442695
  %v2573 = vpow.pop %v2572
  %v2574 = vmul.f32 %v2409, 1.442695
  %v2575 = vpow.pop %v2574
  %v2576 = vmul.f32 %v2410, 1.442695
  %v2577 = vpow.pop %v2576
  %v2578 = vmul.f32 %v2411, 1.442695
  %v2579 = vpow.pop %v2578
  %v2580 = vmul.f32 %v2412, 1.442695
  %v2581 = vpow.pop %v2580
  %v2582 = vmul.f32 %v2413, 1.442695
  %v2583 = vpow.pop %v2582
  %v2584 = vmul.f32 %v2414, 1.442695
  %v2585 = vpow.pop %v2584
  %v2586 = vmul.f32 %v2415, 1.442695
  %v2587 = vpow.pop %v2586
  %v2588 = vmul.f32 %v2416, 1.442695
  %v2589 = vpow.pop %v2588
  %v2590 = vmul.f32 %v2417, 1.442695
  %v2591 = vpow.pop %v2590
  %v2592 = vmul.f32 %v2418, 1.442695
  %v2593 = vpow.pop %v2592
  %v2594 = vmul.f32 %v2419, 1.442695
  %v2595 = vpow.pop %v2594
  %v2596 = vmul.f32 %v2420, 1.442695
  %v2597 = vpow.pop %v2596
  %v2598 = vmul.f32 %v2421, 1.442695
  %v2599 = vpow.pop %v2598
  %v2600 = vmul.f32 %v2422, 1.442695
  %v2601 = vpow.pop %v2600
  %v2602 = vmul.f32 %v2423, 1.442695
  %v2603 = vpow.pop %v2602
  %v2604 = vmul.f32 %v2424, 1.442695
  %v2605 = vpow.pop %v2604
  %v2606 = vmul.f32 %v2425, 1.442695
  %v2607 = vpow.pop %v2606
  %v2608 = vmul.f32 %v2426, 1.442695
  %v2609 = vpow.pop %v2608
  %v2610 = vmul.f32 %v2427, 1.442695
  %v2611 = vpow.pop %v2610
  %v2612 = vmul.f32 %v2428, 1.442695
  %v2613 = vpow.pop %v2612
  %v2614 = vmul.f32 %v2429, 1.442695
  %v2615 = vpow.pop %v2614
  %v2616 = vmul.f32 %v2430, 1.442695
  %v2617 = vpow.pop %v2616
  %v2618 = vmul.f32 %v2431, 1.442695
  %v2619 = vpow.pop %v2618
  %v2620 = vmul.f32 %v2432, 1.442695
  %v2621 = vpow.pop %v2620
  %v2622 = vmul.f32 %v2433, 1.442695
  %v2623 = vpow.pop %v2622
  %v2624 = vmul.f32 %v2434, 1.442695
  %v2625 = vpow.pop %v2624
  %v2626 = vmul.f32 %v2435, 1.442695
  %v2627 = vpow.pop %v2626
  %v2628 = vmul.f32 %v2436, 1.442695
  %v2629 = vpow.pop %v2628
  %v2630 = vmul.f32 %v2437, 1.442695
  %v2631 = vpow.pop %v2630
  %v2632 = vmul.f32 %v2438, 1.442695
  %v2633 = vpow.pop %v2632
  %v2634 = vmul.f32 %v2439, 1.442695
  %v2635 = vpow.pop %v2634
  %v2636 = vmul.f32 %v2440, 1.442695
  %v2637 = vpow.pop %v2636
  %v2638 = vmul.f32 %v2441, 1.442695
  %v2639 = vpow.pop %v2638
  %v2640 = vmul.f32 %v2442, 1.442695
  %v2641 = vpow.pop %v2640
  %v2642 = vmul.f32 %v2443, 1.442695
  %v2643 = vpow.pop %v2642
  %v2644 = vmul.f32 %v2444, 1.442695
  %v2645 = vpow.pop %v2644
  %v2646 = vmul.f32 %v2445, 1.442695
  %v2647 = vpow.pop %v2646
  %v2648 = vmul.f32 %v2446, 1.442695
  %v2649 = vpow.pop %v2648
  %v2650 = vmul.f32 %v2447, 1.442695
  %v2651 = vpow.pop %v2650
  %v2652 = vmul.f32 %v2448, 1.442695
  %v2653 = vpow.pop %v2652
  %v2654 = vmul.f32 %v2449, 1.442695
  %v2655 = vpow.pop %v2654
  %v2656 = vmul.f32 %v2450, 1.442695
  %v2657 = vpow.pop %v2656
  %v2658 = vmul.f32 %v2451, 1.442695
  %v2659 = vpow.pop %v2658
  %v2660 = vmul.f32 %v2452, 1.442695
  %v2661 = vpow.pop %v2660
  %v2662 = vmul.f32 %v2453, 1.442695
  %v2663 = vpow.pop %v2662
  %v2664 = vmul.f32 %v2454, 1.442695
  %v2665 = vpow.pop %v2664
  %v2666 = vmul.f32 %v2455, 1.442695
  %v2667 = vpow.pop %v2666
  %v2668 = vmul.f32 %v2456, 1.442695
  %v2669 = vpow.pop %v2668
  %v2670 = vmul.f32 %v2457, 1.442695
  %v2671 = vpow.pop %v2670
  %v2672 = vmul.f32 %v2458, 1.442695
  %v2673 = vpow.pop %v2672
  %v2674 = vmul.f32 %v2459, 1.442695
  %v2675 = vpow.pop %v2674
  %v2676 = vmul.f32 %v2460, 1.442695
  %v2677 = vpow.pop %v2676
  %v2678 = vmul.f32 %v2461, 1.442695
  %v2679 = vpow.pop %v2678
  %v2680 = vmul.f32 %v2462, 1.442695
  %v2681 = vpow.pop %v2680
  %v2682 = vmul.f32 %v2463, 1.442695
  %v2683 = vpow.pop %v2682
  %v2684 = vmul.f32 %v2464, 1.442695
  %v2685 = vpow.pop %v2684
  %v2686 = vmul.f32 %v2465, 1.442695
  %v2687 = vpow.pop %v2686
  %v2688 = vmul.f32 %v2466, 1.442695
  %v2689 = vpow.pop %v2688
  %v2690 = vmul.f32 %v2467, 1.442695
  %v2691 = vpow.pop %v2690
  %v2692 = vmul.f32 %v2468, 1.442695
  %v2693 = vpow.pop %v2692
  %v2694 = vmul.f32 %v2469, 1.442695
  %v2695 = vpow.pop %v2694
  %v2696 = vmul.f32 %v2470, 1.442695
  %v2697 = vpow.pop %v2696
  %v2698 = vmul.f32 %v2471, 1.442695
  %v2699 = vpow.pop %v2698
  %v2700 = vmul.f32 %v2472, 1.442695
  %v2701 = vpow.pop %v2700
  %v2702 = vmul.f32 %v2473, 1.442695
  %v2703 = vpow.pop %v2702
  %v2704 = vmul.f32 %v2474, 1.442695
  %v2705 = vpow.pop %v2704
  %v2706 = vmul.f32 %v2475, 1.442695
  %v2707 = vpow.pop %v2706
  %v2708 = vmul.f32 %v2476, 1.442695
  %v2709 = vpow.pop %v2708
  %v2710 = vmul.f32 %v2477, 1.442695
  %v2711 = vpow.pop %v2710
  %v2712 = vmul.f32 %v2478, 1.442695
  %v2713 = vpow.pop %v2712
  %v2714 = vmul.f32 %v2479, 1.442695
  %v2715 = vpow.pop %v2714
  %v2716 = vmul.f32 %v2480, 1.442695
  %v2717 = vpow.pop %v2716
  %v2718 = vmul.f32 %v2481, 1.442695
  %v2719 = vpow.pop %v2718
  %v2720 = vmul.f32 %v2482, 1.442695
  %v2721 = vpow.pop %v2720
  %v2722 = vmul.f32 %v2483, 1.442695
  %v2723 = vpow.pop %v2722
  %v2724 = vmul.f32 %v2484, 1.442695
  %v2725 = vpow.pop %v2724
  %v2726 = vmul.f32 %v2485, 1.442695
  %v2727 = vpow.pop %v2726
  %v2728 = vmul.f32 %v2486, 1.442695
  %v2729 = vpow.pop %v2728
  %v2730 = vmul.f32 %v2487, 1.442695
  %v2731 = vpow.pop %v2730
  %v2732 = vmul.f32 %v2488, 1.442695
  %v2733 = vpow.pop %v2732
  %v2734 = vmul.f32 %v2489, 1.442695
  %v2735 = vpow.pop %v2734
  %v2736 = vmul.f32 %v2490, 1.442695
  %v2737 = vpow.pop %v2736
  %v2738 = vmul.f32 %v2491, 1.442695
  %v2739 = vpow.pop %v2738
  %v2740 = vmul.f32 %v2492, 1.442695
  %v2741 = vpow.pop %v2740
  %v2742 = vmul.f32 %v2493, 1.442695
  %v2743 = vpow.pop %v2742
  %v2744 = vmul.f32 %v2494, 1.442695
  %v2745 = vpow.pop %v2744
  %v2746 = vmul.f32 %v2495, 1.442695
  %v2747 = vpow.pop %v2746
  %v2748 = vmul.f32 %v2496, 1.442695
  %v2749 = vpow.pop %v2748
  %v2750 = vmul.f32 %v2497, 1.442695
  %v2751 = vpow.pop %v2750
  %v2752 = vmul.f32 %v2498, 1.442695
  %v2753 = vpow.pop %v2752
  %v2754 = vmul.f32 %v2499, 1.442695
  %v2755 = vpow.pop %v2754
  %v2756 = vsub.f32 %v2501, 1.0
  %v2757 = vsub.f32 %v2503, 1.0
  %v2758 = vsub.f32 %v2505, 1.0
  %v2759 = vsub.f32 %v2507, 1.0
  %v2760 = vsub.f32 %v2509, 1.0
  %v2761 = vsub.f32 %v2511, 1.0
  %v2762 = vsub.f32 %v2513, 1.0
  %v2763 = vsub.f32 %v2515, 1.0
  %v2764 = vsub.f32 %v2517, 1.0
  %v2765 = vsub.f32 %v2519, 1.0
  %v2766 = vsub.f32 %v2521, 1.0
  %v2767 = vsub.f32 %v2523, 1.0
  %v2768 = vsub.f32 %v2525, 1.0
  %v2769 = vsub.f32 %v2527, 1.0
  %v2770 = vsub.f32 %v2529, 1.0
  %v2771 = vsub.f32 %v2531, 1.0
  %v2772 = vsub.f32 %v2533, 1.0
  %v2773 = vsub.f32 %v2535, 1.0
  %v2774 = vsub.f32 %v2537, 1.0
  %v2775 = vsub.f32 %v2539, 1.0
  %v2776 = vsub.f32 %v2541, 1.0
  %v2777 = vsub.f32 %v2543, 1.0
  %v2778 = vsub.f32 %v2545, 1.0
  %v2779 = vsub.f32 %v2547, 1.0
  %v2780 = vsub.f32 %v2549, 1.0
  %v2781 = vsub.f32 %v2551, 1.0
  %v2782 = vsub.f32 %v2553, 1.0
  %v2783 = vsub.f32 %v2555, 1.0
  %v2784 = vsub.f32 %v2557, 1.0
  %v2785 = vsub.f32 %v2559, 1.0
  %v2786 = vsub.f32 %v2561, 1.0
  %v2787 = vsub.f32 %v2563, 1.0
  %v2788 = vsub.f32 %v2565, 1.0
  %v2789 = vsub.f32 %v2567, 1.0
  %v2790 = vsub.f32 %v2569, 1.0
  %v2791 = vsub.f32 %v2571, 1.0
  %v2792 = vsub.f32 %v2573, 1.0
  %v2793 = vsub.f32 %v2575, 1.0
  %v2794 = vsub.f32 %v2577, 1.0
  %v2795 = vsub.f32 %v2579, 1.0
  %v2796 = vsub.f32 %v2581, 1.0
  %v2797 = vsub.f32 %v2583, 1.0
  %v2798 = vsub.f32 %v2585, 1.0
  %v2799 = vsub.f32 %v2587, 1.0
  %v2800 = vsub.f32 %v2589, 1.0
  %v2801 = vsub.f32 %v2591, 1.0
  %v2802 = vsub.f32 %v2593, 1.0
  %v2803 = vsub.f32 %v2595, 1.0
  %v2804 = vsub.f32 %v2597, 1.0
  %v2805 = vsub.f32 %v2599, 1.0
  %v2806 = vsub.f32 %v2601, 1.0
  %v2807 = vsub.f32 %v2603, 1.0
  %v2808 = vsub.f32 %v2605, 1.0
  %v2809 = vsub.f32 %v2607, 1.0
  %v2810 = vsub.f32 %v2609, 1.0
  %v2811 = vsub.f32 %v2611, 1.0
  %v2812 = vsub.f32 %v2613, 1.0
  %v2813 = vsub.f32 %v2615, 1.0
  %v2814 = vsub.f32 %v2617, 1.0
  %v2815 = vsub.f32 %v2619, 1.0
  %v2816 = vsub.f32 %v2621, 1.0
  %v2817 = vsub.f32 %v2623, 1.0
  %v2818 = vsub.f32 %v2625, 1.0
  %v2819 = vsub.f32 %v2627, 1.0
  %v2820 = vsub.f32 %v2629, 1.0
  %v2821 = vsub.f32 %v2631, 1.0
  %v2822 = vsub.f32 %v2633, 1.0
  %v2823 = vsub.f32 %v2635, 1.0
  %v2824 = vsub.f32 %v2637, 1.0
  %v2825 = vsub.f32 %v2639, 1.0
  %v2826 = vsub.f32 %v2641, 1.0
  %v2827 = vsub.f32 %v2643, 1.0
  %v2828 = vsub.f32 %v2645, 1.0
  %v2829 = vsub.f32 %v2647, 1.0
  %v2830 = vsub.f32 %v2649, 1.0
  %v2831 = vsub.f32 %v2651, 1.0
  %v2832 = vsub.f32 %v2653, 1.0
  %v2833 = vsub.f32 %v2655, 1.0
  %v2834 = vsub.f32 %v2657, 1.0
  %v2835 = vsub.f32 %v2659, 1.0
  %v2836 = vsub.f32 %v2661, 1.0
  %v2837 = vsub.f32 %v2663, 1.0
  %v2838 = vsub.f32 %v2665, 1.0
  %v2839 = vsub.f32 %v2667, 1.0
  %v2840 = vsub.f32 %v2669, 1.0
  %v2841 = vsub.f32 %v2671, 1.0
  %v2842 = vsub.f32 %v2673, 1.0
  %v2843 = vsub.f32 %v2675, 1.0
  %v2844 = vsub.f32 %v2677, 1.0
  %v2845 = vsub.f32 %v2679, 1.0
  %v2846 = vsub.f32 %v2681, 1.0
  %v2847 = vsub.f32 %v2683, 1.0
  %v2848 = vsub.f32 %v2685, 1.0
  %v2849 = vsub.f32 %v2687, 1.0
  %v2850 = vsub.f32 %v2689, 1.0
  %v2851 = vsub.f32 %v2691, 1.0
  %v2852 = vsub.f32 %v2693, 1.0
  %v2853 = vsub.f32 %v2695, 1.0
  %v2854 = vsub.f32 %v2697, 1.0
  %v2855 = vsub.f32 %v2699, 1.0
  %v2856 = vsub.f32 %v2701, 1.0
  %v2857 = vsub.f32 %v2703, 1.0
  %v2858 = vsub.f32 %v2705, 1.0
  %v2859 = vsub.f32 %v2707, 1.0
  %v2860 = vsub.f32 %v2709, 1.0
  %v2861 = vsub.f32 %v2711, 1.0
  %v2862 = vsub.f32 %v2713, 1.0
  %v2863 = vsub.f32 %v2715, 1.0
  %v2864 = vsub.f32 %v2717, 1.0
  %v2865 = vsub.f32 %v2719, 1.0
  %v2866 = vsub.f32 %v2721, 1.0
  %v2867 = vsub.f32 %v2723, 1.0
  %v2868 = vsub.f32 %v2725, 1.0
  %v2869 = vsub.f32 %v2727, 1.0
  %v2870 = vsub.f32 %v2729, 1.0
  %v2871 = vsub.f32 %v2731, 1.0
  %v2872 = vsub.f32 %v2733, 1.0
  %v2873 = vsub.f32 %v2735, 1.0
  %v2874 = vsub.f32 %v2737, 1.0
  %v2875 = vsub.f32 %v2739, 1.0
  %v2876 = vsub.f32 %v2741, 1.0
  %v2877 = vsub.f32 %v2743, 1.0
  %v2878 = vsub.f32 %v2745, 1.0
  %v2879 = vsub.f32 %v2747, 1.0
  %v2880 = vsub.f32 %v2749, 1.0
  %v2881 = vsub.f32 %v2751, 1.0
  %v2882 = vsub.f32 %v2753, 1.0
  %v2883 = vsub.f32 %v2755, 1.0
  %v2884 = vsel %vm2244, %v1734, %v2756
  %v2885 = vsel %vm2245, %v1737, %v2757
  %v2886 = vsel %vm2246, %v1742, %v2758
  %v2887 = vsel %vm2247, %v1745, %v2759
  %v2888 = vsel %vm2248, %v1750, %v2760
  %v2889 = vsel %vm2249, %v1753, %v2761
  %v2890 = vsel %vm2250, %v1758, %v2762
  %v2891 = vsel %vm2251, %v1761, %v2763
  %v2892 = vsel %vm2252, %v1766, %v2764
  %v2893 = vsel %vm2253, %v1769, %v2765
  %v2894 = vsel %vm2254, %v1774, %v2766
  %v2895 = vsel %vm2255, %v1777, %v2767
  %v2896 = vsel %vm2256, %v1782, %v2768
  %v2897 = vsel %vm2257, %v1785, %v2769
  %v2898 = vsel %vm2258, %v1790, %v2770
  %v2899 = vsel %vm2259, %v1793, %v2771
  %v2900 = vsel %vm2260, %v1798, %v2772
  %v2901 = vsel %vm2261, %v1801, %v2773
  %v2902 = vsel %vm2262, %v1806, %v2774
  %v2903 = vsel %vm2263, %v1809, %v2775
  %v2904 = vsel %vm2264, %v1814, %v2776
  %v2905 = vsel %vm2265, %v1817, %v2777
  %v2906 = vsel %vm2266, %v1822, %v2778
  %v2907 = vsel %vm2267, %v1825, %v2779
  %v2908 = vsel %vm2268, %v1830, %v2780
  %v2909 = vsel %vm2269, %v1833, %v2781
  %v2910 = vsel %vm2270, %v1838, %v2782
  %v2911 = vsel %vm2271, %v1841, %v2783
  %v2912 = vsel %vm2272, %v1846, %v2784
  %v2913 = vsel %vm2273, %v1849, %v2785
  %v2914 = vsel %vm2274, %v1854, %v2786
  %v2915 = vsel %vm2275, %v1857, %v2787
  %v2916 = vsel %vm2276, %v1862, %v2788
  %v2917 = vsel %vm2277, %v1865, %v2789
  %v2918 = vsel %vm2278, %v1870, %v2790
  %v2919 = vsel %vm2279, %v1873, %v2791
  %v2920 = vsel %vm2280, %v1878, %v2792
  %v2921 = vsel %vm2281, %v1881, %v2793
  %v2922 = vsel %vm2282, %v1886, %v2794
  %v2923 = vsel %vm2283, %v1889, %v2795
  %v2924 = vsel %vm2284, %v1894, %v2796
  %v2925 = vsel %vm2285, %v1897, %v2797
  %v2926 = vsel %vm2286, %v1902, %v2798
  %v2927 = vsel %vm2287, %v1905, %v2799
  %v2928 = vsel %vm2288, %v1910, %v2800
  %v2929 = vsel %vm2289, %v1913, %v2801
  %v2930 = vsel %vm2290, %v1918, %v2802
  %v2931 = vsel %vm2291, %v1921, %v2803
  %v2932 = vsel %vm2292, %v1926, %v2804
  %v2933 = vsel %vm2293, %v1929, %v2805
  %v2934 = vsel %vm2294, %v1934, %v2806
  %v2935 = vsel %vm2295, %v1937, %v2807
  %v2936 = vsel %vm2296, %v1942, %v2808
  %v2937 = vsel %vm2297, %v1945, %v2809
  %v2938 = vsel %vm2298, %v1950, %v2810
  %v2939 = vsel %vm2299, %v1953, %v2811
  %v2940 = vsel %vm2300, %v1958, %v2812
  %v2941 = vsel %vm2301, %v1961, %v2813
  %v2942 = vsel %vm2302, %v1966, %v2814
  %v2943 = vsel %vm2303, %v1969, %v2815
  %v2944 = vsel %vm2304, %v1974, %v2816
  %v2945 = vsel %vm2305, %v1977, %v2817
  %v2946 = vsel %vm2306, %v1982, %v2818
  %v2947 = vsel %vm2307, %v1985, %v2819
  %v2948 = vsel %vm2308, %v1990, %v2820
  %v2949 = vsel %vm2309, %v1993, %v2821
  %v2950 = vsel %vm2310, %v1998, %v2822
  %v2951 = vsel %vm2311, %v2001, %v2823
  %v2952 = vsel %vm2312, %v2006, %v2824
  %v2953 = vsel %vm2313, %v2009, %v2825
  %v2954 = vsel %vm2314, %v2014, %v2826
  %v2955 = vsel %vm2315, %v2017, %v2827
  %v2956 = vsel %vm2316, %v2022, %v2828
  %v2957 = vsel %vm2317, %v2025, %v2829
  %v2958 = vsel %vm2318, %v2030, %v2830
  %v2959 = vsel %vm2319, %v2033, %v2831
  %v2960 = vsel %vm2320, %v2038, %v2832
  %v2961 = vsel %vm2321, %v2041, %v2833
  %v2962 = vsel %vm2322, %v2046, %v2834
  %v2963 = vsel %vm2323, %v2049, %v2835
  %v2964 = vsel %vm2324, %v2054, %v2836
  %v2965 = vsel %vm2325, %v2057, %v2837
  %v2966 = vsel %vm2326, %v2062, %v2838
  %v2967 = vsel %vm2327, %v2065, %v2839
  %v2968 = vsel %vm2328, %v2070, %v2840
  %v2969 = vsel %vm2329, %v2073, %v2841
  %v2970 = vsel %vm2330, %v2078, %v2842
  %v2971 = vsel %vm2331, %v2081, %v2843
  %v2972 = vsel %vm2332, %v2086, %v2844
  %v2973 = vsel %vm2333, %v2089, %v2845
  %v2974 = vsel %vm2334, %v2094, %v2846
  %v2975 = vsel %vm2335, %v2097, %v2847
  %v2976 = vsel %vm2336, %v2102, %v2848
  %v2977 = vsel %vm2337, %v2105, %v2849
  %v2978 = vsel %vm2338, %v2110, %v2850
  %v2979 = vsel %vm2339, %v2113, %v2851
  %v2980 = vsel %vm2340, %v2118, %v2852
  %v2981 = vsel %vm2341, %v2121, %v2853
  %v2982 = vsel %vm2342, %v2126, %v2854
  %v2983 = vsel %vm2343, %v2129, %v2855
  %v2984 = vsel %vm2344, %v2134, %v2856
  %v2985 = vsel %vm2345, %v2137, %v2857
  %v2986 = vsel %vm2346, %v2142, %v2858
  %v2987 = vsel %vm2347, %v2145, %v2859
  %v2988 = vsel %vm2348, %v2150, %v2860
  %v2989 = vsel %vm2349, %v2153, %v2861
  %v2990 = vsel %vm2350, %v2158, %v2862
  %v2991 = vsel %vm2351, %v2161, %v2863
  %v2992 = vsel %vm2352, %v2166, %v2864
  %v2993 = vsel %vm2353, %v2169, %v2865
  %v2994 = vsel %vm2354, %v2174, %v2866
  %v2995 = vsel %vm2355, %v2177, %v2867
  %v2996 = vsel %vm2356, %v2182, %v2868
  %v2997 = vsel %vm2357, %v2185, %v2869
  %v2998 = vsel %vm2358, %v2190, %v2870
  %v2999 = vsel %vm2359, %v2193, %v2871
  %v3000 = vsel %vm2360, %v2198, %v2872
  %v3001 = vsel %vm2361, %v2201, %v2873
  %v3002 = vsel %vm2362, %v2206, %v2874
  %v3003 = vsel %vm2363, %v2209, %v2875
  %v3004 = vsel %vm2364, %v2214, %v2876
  %v3005 = vsel %vm2365, %v2217, %v2877
  %v3006 = vsel %vm2366, %v2222, %v2878
  %v3007 = vsel %vm2367, %v2225, %v2879
  %v3008 = vsel %vm2368, %v2230, %v2880
  %v3009 = vsel %vm2369, %v2233, %v2881
  %v3010 = vsel %vm2370, %v2238, %v2882
  %v3011 = vsel %vm2371, %v2241, %v2883
  %v3012 = vadd.f32 %v2884, %v2886
  %v3013 = vadd.f32 %v2885, %v2887
  %v3014 = vadd.f32 %v2892, %v2894
  %v3015 = vadd.f32 %v2893, %v2895
  %v3016 = vadd.f32 %v2900, %v2902
  %v3017 = vadd.f32 %v2901, %v2903
  %v3018 = vadd.f32 %v2908, %v2910
  %v3019 = vadd.f32 %v2909, %v2911
  %v3020 = vadd.f32 %v2916, %v2918
  %v3021 = vadd.f32 %v2917, %v2919
  %v3022 = vadd.f32 %v2924, %v2926
  %v3023 = vadd.f32 %v2925, %v2927
  %v3024 = vadd.f32 %v2932, %v2934
  %v3025 = vadd.f32 %v2933, %v2935
  %v3026 = vadd.f32 %v2940, %v2942
  %v3027 = vadd.f32 %v2941, %v2943
  %v3028 = vadd.f32 %v2948, %v2950
  %v3029 = vadd.f32 %v2949, %v2951
  %v3030 = vadd.f32 %v2956, %v2958
  %v3031 = vadd.f32 %v2957, %v2959
  %v3032 = vadd.f32 %v2964, %v2966
  %v3033 = vadd.f32 %v2965, %v2967
  %v3034 = vadd.f32 %v2972, %v2974
  %v3035 = vadd.f32 %v2973, %v2975
  %v3036 = vadd.f32 %v2980, %v2982
  %v3037 = vadd.f32 %v2981, %v2983
  %v3038 = vadd.f32 %v2988, %v2990
  %v3039 = vadd.f32 %v2989, %v2991
  %v3040 = vadd.f32 %v2996, %v2998
  %v3041 = vadd.f32 %v2997, %v2999
  %v3042 = vadd.f32 %v3004, %v3006
  %v3043 = vadd.f32 %v3005, %v3007
  %v3044 = vadd.f32 %v3012, %v2888
  %v3045 = vadd.f32 %v3013, %v2889
  %v3046 = vadd.f32 %v3014, %v2896
  %v3047 = vadd.f32 %v3015, %v2897
  %v3048 = vadd.f32 %v3016, %v2904
  %v3049 = vadd.f32 %v3017, %v2905
  %v3050 = vadd.f32 %v3018, %v2912
  %v3051 = vadd.f32 %v3019, %v2913
  %v3052 = vadd.f32 %v3020, %v2920
  %v3053 = vadd.f32 %v3021, %v2921
  %v3054 = vadd.f32 %v3022, %v2928
  %v3055 = vadd.f32 %v3023, %v2929
  %v3056 = vadd.f32 %v3024, %v2936
  %v3057 = vadd.f32 %v3025, %v2937
  %v3058 = vadd.f32 %v3026, %v2944
  %v3059 = vadd.f32 %v3027, %v2945
  %v3060 = vadd.f32 %v3028, %v2952
  %v3061 = vadd.f32 %v3029, %v2953
  %v3062 = vadd.f32 %v3030, %v2960
  %v3063 = vadd.f32 %v3031, %v2961
  %v3064 = vadd.f32 %v3032, %v2968
  %v3065 = vadd.f32 %v3033, %v2969
  %v3066 = vadd.f32 %v3034, %v2976
  %v3067 = vadd.f32 %v3035, %v2977
  %v3068 = vadd.f32 %v3036, %v2984
  %v3069 = vadd.f32 %v3037, %v2985
  %v3070 = vadd.f32 %v3038, %v2992
  %v3071 = vadd.f32 %v3039, %v2993
  %v3072 = vadd.f32 %v3040, %v3000
  %v3073 = vadd.f32 %v3041, %v3001
  %v3074 = vadd.f32 %v3042, %v3008
  %v3075 = vadd.f32 %v3043, %v3009
  %v3076 = vadd.f32 %v3044, %v2890
  %v3077 = vadd.f32 %v3045, %v2891
  %v3078 = vadd.f32 %v3046, %v2898
  %v3079 = vadd.f32 %v3047, %v2899
  %v3080 = vadd.f32 %v3048, %v2906
  %v3081 = vadd.f32 %v3049, %v2907
  %v3082 = vadd.f32 %v3050, %v2914
  %v3083 = vadd.f32 %v3051, %v2915
  %v3084 = vadd.f32 %v3052, %v2922
  %v3085 = vadd.f32 %v3053, %v2923
  %v3086 = vadd.f32 %v3054, %v2930
  %v3087 = vadd.f32 %v3055, %v2931
  %v3088 = vadd.f32 %v3056, %v2938
  %v3089 = vadd.f32 %v3057, %v2939
  %v3090 = vadd.f32 %v3058, %v2946
  %v3091 = vadd.f32 %v3059, %v2947
  %v3092 = vadd.f32 %v3060, %v2954
  %v3093 = vadd.f32 %v3061, %v2955
  %v3094 = vadd.f32 %v3062, %v2962
  %v3095 = vadd.f32 %v3063, %v2963
  %v3096 = vadd.f32 %v3064, %v2970
  %v3097 = vadd.f32 %v3065, %v2971
  %v3098 = vadd.f32 %v3066, %v2978
  %v3099 = vadd.f32 %v3067, %v2979
  %v3100 = vadd.f32 %v3068, %v2986
  %v3101 = vadd.f32 %v3069, %v2987
  %v3102 = vadd.f32 %v3070, %v2994
  %v3103 = vadd.f32 %v3071, %v2995
  %v3104 = vadd.f32 %v3072, %v3002
  %v3105 = vadd.f32 %v3073, %v3003
  %v3106 = vadd.f32 %v3074, %v3010
  %v3107 = vadd.f32 %v3075, %v3011
  %v3108 = vmul.f32 %v3076, 0.25
  %v3109 = vmul.f32 %v3077, 0.25
  %v3110 = vmul.f32 %v3078, 0.25
  %v3111 = vmul.f32 %v3079, 0.25
  %v3112 = vmul.f32 %v3080, 0.25
  %v3113 = vmul.f32 %v3081, 0.25
  %v3114 = vmul.f32 %v3082, 0.25
  %v3115 = vmul.f32 %v3083, 0.25
  %v3116 = vmul.f32 %v3084, 0.25
  %v3117 = vmul.f32 %v3085, 0.25
  %v3118 = vmul.f32 %v3086, 0.25
  %v3119 = vmul.f32 %v3087, 0.25
  %v3120 = vmul.f32 %v3088, 0.25
  %v3121 = vmul.f32 %v3089, 0.25
  %v3122 = vmul.f32 %v3090, 0.25
  %v3123 = vmul.f32 %v3091, 0.25
  %v3124 = vmul.f32 %v3092, 0.25
  %v3125 = vmul.f32 %v3093, 0.25
  %v3126 = vmul.f32 %v3094, 0.25
  %v3127 = vmul.f32 %v3095, 0.25
  %v3128 = vmul.f32 %v3096, 0.25
  %v3129 = vmul.f32 %v3097, 0.25
  %v3130 = vmul.f32 %v3098, 0.25
  %v3131 = vmul.f32 %v3099, 0.25
  %v3132 = vmul.f32 %v3100, 0.25
  %v3133 = vmul.f32 %v3101, 0.25
  %v3134 = vmul.f32 %v3102, 0.25
  %v3135 = vmul.f32 %v3103, 0.25
  %v3136 = vmul.f32 %v3104, 0.25
  %v3137 = vmul.f32 %v3105, 0.25
  %v3138 = vmul.f32 %v3106, 0.25
  %v3139 = vmul.f32 %v3107, 0.25
  %v3140 = vld [vmem:[%s3] sm:$0xff]
  %v3141 = vld [vmem:[%s3 + $0x8] sm:$0xff]
  %v3142 = vld [vmem:[%s3 + $0x10] sm:$0xff]
  %v3143 = vld [vmem:[%s3 + $0x18] sm:$0xff]
  %v3144 = vld [vmem:[%s3 + $0x20] sm:$0xff]
  %v3145 = vld [vmem:[%s3 + $0x28] sm:$0xff]
  %v3146 = vld [vmem:[%s3 + $0x30] sm:$0xff]
  %v3147 = vld [vmem:[%s3 + $0x38] sm:$0xff]
  %v3148 = vld [vmem:[%s3 + $0x40] sm:$0xff]
  %v3149 = vld [vmem:[%s3 + $0x48] sm:$0xff]
  %v3150 = vld [vmem:[%s3 + $0x50] sm:$0xff]
  %v3151 = vld [vmem:[%s3 + $0x58] sm:$0xff]
  %v3152 = vld [vmem:[%s3 + $0x60] sm:$0xff]
  %v3153 = vld [vmem:[%s3 + $0x68] sm:$0xff]
  %v3154 = vld [vmem:[%s3 + $0x70] sm:$0xff]
  %v3155 = vld [vmem:[%s3 + $0x78] sm:$0xff]
  %v3156 = vld [vmem:[%s3 + $0x80] sm:$0xff]
  %v3157 = vld [vmem:[%s3 + $0x88] sm:$0xff]
  %v3158 = vld [vmem:[%s3 + $0x90] sm:$0xff]
  %v3159 = vld [vmem:[%s3 + $0x98] sm:$0xff]
  %v3160 = vld [vmem:[%s3 + $0xa0] sm:$0xff]
  %v3161 = vld [vmem:[%s3 + $0xa8] sm:$0xff]
  %v3162 = vld [vmem:[%s3 + $0xb0] sm:$0xff]
  %v3163 = vld [vmem:[%s3 + $0xb8] sm:$0xff]
  %v3164 = vld [vmem:[%s3 + $0xc0] sm:$0xff]
  %v3165 = vld [vmem:[%s3 + $0xc8] sm:$0xff]
  %v3166 = vld [vmem:[%s3 + $0xd0] sm:$0xff]
  %v3167 = vld [vmem:[%s3 + $0xd8] sm:$0xff]
  %v3168 = vld [vmem:[%s3 + $0xe0] sm:$0xff]
  %v3169 = vld [vmem:[%s3 + $0xe8] sm:$0xff]
  %v3170 = vld [vmem:[%s3 + $0xf0] sm:$0xff]
  %v3171 = vld [vmem:[%s3 + $0xf8] sm:$0xff]
  %v3172 = vpack.c.bf16 %v3109, %v3108
  %v3173 = vpack.c.bf16 %v3111, %v3110
  %v3174 = vpack.c.bf16 %v3113, %v3112
  %v3175 = vpack.c.bf16 %v3115, %v3114
  %v3176 = vpack.c.bf16 %v3117, %v3116
  %v3177 = vpack.c.bf16 %v3119, %v3118
  %v3178 = vpack.c.bf16 %v3121, %v3120
  %v3179 = vpack.c.bf16 %v3123, %v3122
  %v3180 = vpack.c.bf16 %v3125, %v3124
  %v3181 = vpack.c.bf16 %v3127, %v3126
  %v3182 = vpack.c.bf16 %v3129, %v3128
  %v3183 = vpack.c.bf16 %v3131, %v3130
  %v3184 = vpack.c.bf16 %v3133, %v3132
  %v3185 = vpack.c.bf16 %v3135, %v3134
  %v3186 = vpack.c.bf16 %v3137, %v3136
  %v3187 = vpack.c.bf16 %v3139, %v3138
  %v3188 = vld [vmem:[%s4] sm:$0xff]
  %v3189 = vld [vmem:[%s4 + $0x8] sm:$0xff]
  %v3190 = vld [vmem:[%s4 + $0x10] sm:$0xff]
  %v3191 = vld [vmem:[%s4 + $0x18] sm:$0xff]
  %v3192 = vld [vmem:[%s4 + $0x20] sm:$0xff]
  %v3193 = vld [vmem:[%s4 + $0x28] sm:$0xff]
  %v3194 = vld [vmem:[%s4 + $0x30] sm:$0xff]
  %v3195 = vld [vmem:[%s4 + $0x38] sm:$0xff]
  %v3196 = vld [vmem:[%s4 + $0x40] sm:$0xff]
  %v3197 = vld [vmem:[%s4 + $0x48] sm:$0xff]
  %v3198 = vld [vmem:[%s4 + $0x50] sm:$0xff]
  %v3199 = vld [vmem:[%s4 + $0x58] sm:$0xff]
  %v3200 = vld [vmem:[%s4 + $0x60] sm:$0xff]
  %v3201 = vld [vmem:[%s4 + $0x68] sm:$0xff]
  %v3202 = vld [vmem:[%s4 + $0x70] sm:$0xff]
  %v3203 = vld [vmem:[%s4 + $0x78] sm:$0xff]
  %v3204 = vld [vmem:[%s4 + $0x80] sm:$0xff]
  %v3205 = vld [vmem:[%s4 + $0x88] sm:$0xff]
  %v3206 = vld [vmem:[%s4 + $0x90] sm:$0xff]
  %v3207 = vld [vmem:[%s4 + $0x98] sm:$0xff]
  %v3208 = vld [vmem:[%s4 + $0xa0] sm:$0xff]
  %v3209 = vld [vmem:[%s4 + $0xa8] sm:$0xff]
  %v3210 = vld [vmem:[%s4 + $0xb0] sm:$0xff]
  %v3211 = vld [vmem:[%s4 + $0xb8] sm:$0xff]
  %v3212 = vld [vmem:[%s4 + $0xc0] sm:$0xff]
  %v3213 = vld [vmem:[%s4 + $0xc8] sm:$0xff]
  %v3214 = vld [vmem:[%s4 + $0xd0] sm:$0xff]
  %v3215 = vld [vmem:[%s4 + $0xd8] sm:$0xff]
  %v3216 = vld [vmem:[%s4 + $0xe0] sm:$0xff]
  %v3217 = vld [vmem:[%s4 + $0xe8] sm:$0xff]
  %v3218 = vld [vmem:[%s4 + $0xf0] sm:$0xff]
  %v3219 = vld [vmem:[%s4 + $0xf8] sm:$0xff]
  %3221 = vset.pattern.permute.xlu0 0
  %3222 = vperm.xlu0 %3221, %v3188
  %v3223 = vpop.permute.xlu0 %3222
  %3226 = vset.pattern.permute.xlu0 0
  %3227 = vperm.xlu0 %3226, %v3189
  %v3228 = vpop.permute.xlu0 %3227
  %3231 = vset.pattern.permute.xlu0 0
  %3232 = vperm.xlu0 %3231, %v3190
  %v3233 = vpop.permute.xlu0 %3232
  %3236 = vset.pattern.permute.xlu0 0
  %3237 = vperm.xlu0 %3236, %v3191
  %v3238 = vpop.permute.xlu0 %3237
  %3241 = vset.pattern.permute.xlu0 0
  %3242 = vperm.xlu0 %3241, %v3192
  %v3243 = vpop.permute.xlu0 %3242
  %3246 = vset.pattern.permute.xlu0 0
  %3247 = vperm.xlu0 %3246, %v3193
  %v3248 = vpop.permute.xlu0 %3247
  %3251 = vset.pattern.permute.xlu0 0
  %3252 = vperm.xlu0 %3251, %v3194
  %v3253 = vpop.permute.xlu0 %3252
  %3256 = vset.pattern.permute.xlu0 0
  %3257 = vperm.xlu0 %3256, %v3195
  %v3258 = vpop.permute.xlu0 %3257
  %3261 = vset.pattern.permute.xlu0 0
  %3262 = vperm.xlu0 %3261, %v3196
  %v3263 = vpop.permute.xlu0 %3262
  %3266 = vset.pattern.permute.xlu0 0
  %3267 = vperm.xlu0 %3266, %v3197
  %v3268 = vpop.permute.xlu0 %3267
  %3271 = vset.pattern.permute.xlu0 0
  %3272 = vperm.xlu0 %3271, %v3198
  %v3273 = vpop.permute.xlu0 %3272
  %3276 = vset.pattern.permute.xlu0 0
  %3277 = vperm.xlu0 %3276, %v3199
  %v3278 = vpop.permute.xlu0 %3277
  %3281 = vset.pattern.permute.xlu0 0
  %3282 = vperm.xlu0 %3281, %v3200
  %v3283 = vpop.permute.xlu0 %3282
  %3286 = vset.pattern.permute.xlu0 0
  %3287 = vperm.xlu0 %3286, %v3201
  %v3288 = vpop.permute.xlu0 %3287
  %3291 = vset.pattern.permute.xlu0 0
  %3292 = vperm.xlu0 %3291, %v3202
  %v3293 = vpop.permute.xlu0 %3292
  %3296 = vset.pattern.permute.xlu0 0
  %3297 = vperm.xlu0 %3296, %v3203
  %v3298 = vpop.permute.xlu0 %3297
  %3301 = vset.pattern.permute.xlu0 0
  %3302 = vperm.xlu0 %3301, %v3204
  %v3303 = vpop.permute.xlu0 %3302
  %3306 = vset.pattern.permute.xlu0 0
  %3307 = vperm.xlu0 %3306, %v3205
  %v3308 = vpop.permute.xlu0 %3307
  %3311 = vset.pattern.permute.xlu0 0
  %3312 = vperm.xlu0 %3311, %v3206
  %v3313 = vpop.permute.xlu0 %3312
  %3316 = vset.pattern.permute.xlu0 0
  %3317 = vperm.xlu0 %3316, %v3207
  %v3318 = vpop.permute.xlu0 %3317
  %3321 = vset.pattern.permute.xlu0 0
  %3322 = vperm.xlu0 %3321, %v3208
  %v3323 = vpop.permute.xlu0 %3322
  %3326 = vset.pattern.permute.xlu0 0
  %3327 = vperm.xlu0 %3326, %v3209
  %v3328 = vpop.permute.xlu0 %3327
  %3331 = vset.pattern.permute.xlu0 0
  %3332 = vperm.xlu0 %3331, %v3210
  %v3333 = vpop.permute.xlu0 %3332
  %3336 = vset.pattern.permute.xlu0 0
  %3337 = vperm.xlu0 %3336, %v3211
  %v3338 = vpop.permute.xlu0 %3337
  %3341 = vset.pattern.permute.xlu0 0
  %3342 = vperm.xlu0 %3341, %v3212
  %v3343 = vpop.permute.xlu0 %3342
  %3346 = vset.pattern.permute.xlu0 0
  %3347 = vperm.xlu0 %3346, %v3213
  %v3348 = vpop.permute.xlu0 %3347
  %3351 = vset.pattern.permute.xlu0 0
  %3352 = vperm.xlu0 %3351, %v3214
  %v3353 = vpop.permute.xlu0 %3352
  %3356 = vset.pattern.permute.xlu0 0
  %3357 = vperm.xlu0 %3356, %v3215
  %v3358 = vpop.permute.xlu0 %3357
  %3361 = vset.pattern.permute.xlu0 0
  %3362 = vperm.xlu0 %3361, %v3216
  %v3363 = vpop.permute.xlu0 %3362
  %3366 = vset.pattern.permute.xlu0 0
  %3367 = vperm.xlu0 %3366, %v3217
  %v3368 = vpop.permute.xlu0 %3367
  %3371 = vset.pattern.permute.xlu0 0
  %3372 = vperm.xlu0 %3371, %v3218
  %v3373 = vpop.permute.xlu0 %3372
  %3376 = vset.pattern.permute.xlu0 0
  %3377 = vperm.xlu0 %3376, %v3219
  %v3378 = vpop.permute.xlu0 %3377
  %v3412 = vunpack.c.l.b16 %v3140
  %v3413 = vunpack.c.h.b16 %v3140
  %v3414 = vunpack.c.l.b16 %v3141
  %v3415 = vunpack.c.h.b16 %v3141
  %v3416 = vunpack.c.l.b16 %v3142
  %v3417 = vunpack.c.h.b16 %v3142
  %v3418 = vunpack.c.l.b16 %v3143
  %v3419 = vunpack.c.h.b16 %v3143
  %v3420 = vunpack.c.l.b16 %v3144
  %v3421 = vunpack.c.h.b16 %v3144
  %v3422 = vunpack.c.l.b16 %v3145
  %v3423 = vunpack.c.h.b16 %v3145
  %v3424 = vunpack.c.l.b16 %v3146
  %v3425 = vunpack.c.h.b16 %v3146
  %v3426 = vunpack.c.l.b16 %v3147
  %v3427 = vunpack.c.h.b16 %v3147
  %v3428 = vunpack.c.l.b16 %v3148
  %v3429 = vunpack.c.h.b16 %v3148
  %v3430 = vunpack.c.l.b16 %v3149
  %v3431 = vunpack.c.h.b16 %v3149
  %v3432 = vunpack.c.l.b16 %v3150
  %v3433 = vunpack.c.h.b16 %v3150
  %v3434 = vunpack.c.l.b16 %v3151
  %v3435 = vunpack.c.h.b16 %v3151
  %v3436 = vunpack.c.l.b16 %v3152
  %v3437 = vunpack.c.h.b16 %v3152
  %v3438 = vunpack.c.l.b16 %v3153
  %v3439 = vunpack.c.h.b16 %v3153
  %v3440 = vunpack.c.l.b16 %v3154
  %v3441 = vunpack.c.h.b16 %v3154
  %v3442 = vunpack.c.l.b16 %v3155
  %v3443 = vunpack.c.h.b16 %v3155
  %v3444 = vunpack.c.l.b16 %v3156
  %v3445 = vunpack.c.h.b16 %v3156
  %v3446 = vunpack.c.l.b16 %v3157
  %v3447 = vunpack.c.h.b16 %v3157
  %v3448 = vunpack.c.l.b16 %v3158
  %v3449 = vunpack.c.h.b16 %v3158
  %v3450 = vunpack.c.l.b16 %v3159
  %v3451 = vunpack.c.h.b16 %v3159
  %v3452 = vunpack.c.l.b16 %v3160
  %v3453 = vunpack.c.h.b16 %v3160
  %v3454 = vunpack.c.l.b16 %v3161
  %v3455 = vunpack.c.h.b16 %v3161
  %v3456 = vunpack.c.l.b16 %v3162
  %v3457 = vunpack.c.h.b16 %v3162
  %v3458 = vunpack.c.l.b16 %v3163
  %v3459 = vunpack.c.h.b16 %v3163
  %v3460 = vunpack.c.l.b16 %v3164
  %v3461 = vunpack.c.h.b16 %v3164
  %v3462 = vunpack.c.l.b16 %v3165
  %v3463 = vunpack.c.h.b16 %v3165
  %v3464 = vunpack.c.l.b16 %v3166
  %v3465 = vunpack.c.h.b16 %v3166
  %v3466 = vunpack.c.l.b16 %v3167
  %v3467 = vunpack.c.h.b16 %v3167
  %v3468 = vunpack.c.l.b16 %v3168
  %v3469 = vunpack.c.h.b16 %v3168
  %v3470 = vunpack.c.l.b16 %v3169
  %v3471 = vunpack.c.h.b16 %v3169
  %v3472 = vunpack.c.l.b16 %v3170
  %v3473 = vunpack.c.h.b16 %v3170
  %v3474 = vunpack.c.l.b16 %v3171
  %v3475 = vunpack.c.h.b16 %v3171
  %v3476 = vpack.c.b16 %v3414, %v3412
  %v3477 = vpack.c.b16 %v3415, %v3413
  %v3478 = vpack.c.b16 %v3418, %v3416
  %v3479 = vpack.c.b16 %v3419, %v3417
  %v3480 = vpack.c.b16 %v3422, %v3420
  %v3481 = vpack.c.b16 %v3423, %v3421
  %v3482 = vpack.c.b16 %v3426, %v3424
  %v3483 = vpack.c.b16 %v3427, %v3425
  %v3484 = vpack.c.b16 %v3430, %v3428
  %v3485 = vpack.c.b16 %v3431, %v3429
  %v3486 = vpack.c.b16 %v3434, %v3432
  %v3487 = vpack.c.b16 %v3435, %v3433
  %v3488 = vpack.c.b16 %v3438, %v3436
  %v3489 = vpack.c.b16 %v3439, %v3437
  %v3490 = vpack.c.b16 %v3442, %v3440
  %v3491 = vpack.c.b16 %v3443, %v3441
  %v3492 = vpack.c.b16 %v3446, %v3444
  %v3493 = vpack.c.b16 %v3447, %v3445
  %v3494 = vpack.c.b16 %v3450, %v3448
  %v3495 = vpack.c.b16 %v3451, %v3449
  %v3496 = vpack.c.b16 %v3454, %v3452
  %v3497 = vpack.c.b16 %v3455, %v3453
  %v3498 = vpack.c.b16 %v3458, %v3456
  %v3499 = vpack.c.b16 %v3459, %v3457
  %v3500 = vpack.c.b16 %v3462, %v3460
  %v3501 = vpack.c.b16 %v3463, %v3461
  %v3502 = vpack.c.b16 %v3466, %v3464
  %v3503 = vpack.c.b16 %v3467, %v3465
  %v3504 = vpack.c.b16 %v3470, %v3468
  %v3505 = vpack.c.b16 %v3471, %v3469
  %v3506 = vpack.c.b16 %v3474, %v3472
  %v3507 = vpack.c.b16 %v3475, %v3473
  %3540 = vmatprep.subr.bf16.mxu0 0
  %3541 = vmatpush1.bf16.msra.mxu0 %v3179
  %3542 = vmatprep.subr.bf16.mxu0 0
  %3543 = vmatpush1.bf16.msra.mxu0 %v3178
  %3544 = vmatprep.subr.bf16.mxu0 0
  %3545 = vmatpush1.bf16.msra.mxu0 %v3177
  %3546 = vmatprep.subr.bf16.mxu0 0
  %3547 = vmatpush1.bf16.msra.mxu0 %v3176
  %3548 = vmatprep.subr.bf16.mxu0 0
  %3549 = vmatpush1.bf16.msra.mxu0 %v3175
  %3550 = vmatprep.subr.bf16.mxu0 0
  %3551 = vmatpush1.bf16.msra.mxu0 %v3174
  %3552 = vmatprep.subr.bf16.mxu0 0
  %3553 = vmatpush1.bf16.msra.mxu0 %v3173
  %3554 = vmatprep.subr.bf16.mxu0 0
  %3555 = vmatpush1.bf16.msra.mxu0 %v3172
  %3556 = vmatprep.subr.bf16.mxu0 0
  %3557 = vmatpush2.bf16.msra.mxu0 %v3187
  %3558 = vmatprep.subr.bf16.mxu0 0
  %3559 = vmatpush2.bf16.msra.mxu0 %v3186
  %3560 = vmatprep.subr.bf16.mxu0 0
  %3561 = vmatpush2.bf16.msra.mxu0 %v3185
  %3562 = vmatprep.subr.bf16.mxu0 0
  %3563 = vmatpush2.bf16.msra.mxu0 %v3184
  %3564 = vmatprep.subr.bf16.mxu0 0
  %3565 = vmatpush2.bf16.msra.mxu0 %v3183
  %3566 = vmatprep.subr.bf16.mxu0 0
  %3567 = vmatpush2.bf16.msra.mxu0 %v3182
  %3568 = vmatprep.subr.bf16.mxu0 0
  %3569 = vmatpush2.bf16.msra.mxu0 %v3181
  %3570 = vmatprep.subr.bf16.mxu0 0
  %3571 = vmatpush2.bf16.msra.mxu0 %v3180
  %3572 = vmatprep.mubr.bf16.mxu0 %v3477
  %3573 = vmatmul.mubr.bf16.gmra.mxu0 %v3476
  %v3574 = vpop.f32.mrf.mxu0
  %v3575 = vadd.f32 %v3223, %v3574
  %v3576 = vpop.f32.mrf.mxu0
  %v3577 = vpop.f32.mrf.mxu0
  %v3578 = vadd.f32 %v3228, %v3577
  %v3579 = vpop.f32.mrf.mxu0
  %3580 = vmatprep.mubr.bf16.mxu0 %v3479
  %3581 = vmatmul.mubr.bf16.gmra.mxu0 %v3478
  %v3582 = vpop.f32.mrf.mxu0
  %v3583 = vadd.f32 %v3233, %v3582
  %v3584 = vpop.f32.mrf.mxu0
  %v3585 = vpop.f32.mrf.mxu0
  %v3586 = vadd.f32 %v3238, %v3585
  %v3587 = vpop.f32.mrf.mxu0
  %3588 = vmatprep.mubr.bf16.mxu0 %v3481
  %3589 = vmatmul.mubr.bf16.gmra.mxu0 %v3480
  %v3590 = vpop.f32.mrf.mxu0
  %v3591 = vadd.f32 %v3243, %v3590
  %v3592 = vpop.f32.mrf.mxu0
  %v3593 = vpop.f32.mrf.mxu0
  %v3594 = vadd.f32 %v3248, %v3593
  %v3595 = vpop.f32.mrf.mxu0
  %3596 = vmatprep.mubr.bf16.mxu0 %v3483
  %3597 = vmatmul.mubr.bf16.gmra.mxu0 %v3482
  %v3598 = vpop.f32.mrf.mxu0
  %v3599 = vadd.f32 %v3253, %v3598
  %v3600 = vpop.f32.mrf.mxu0
  %v3601 = vpop.f32.mrf.mxu0
  %v3602 = vadd.f32 %v3258, %v3601
  %v3603 = vpop.f32.mrf.mxu0
  %3604 = vmatprep.mubr.bf16.mxu0 %v3485
  %3605 = vmatmul.mubr.bf16.gmra.mxu0 %v3484
  %v3606 = vpop.f32.mrf.mxu0
  %v3607 = vadd.f32 %v3263, %v3606
  %v3608 = vpop.f32.mrf.mxu0
  %v3609 = vpop.f32.mrf.mxu0
  %v3610 = vadd.f32 %v3268, %v3609
  %v3611 = vpop.f32.mrf.mxu0
  %3612 = vmatprep.mubr.bf16.mxu0 %v3487
  %3613 = vmatmul.mubr.bf16.gmra.mxu0 %v3486
  %v3614 = vpop.f32.mrf.mxu0
  %v3615 = vadd.f32 %v3273, %v3614
  %v3616 = vpop.f32.mrf.mxu0
  %v3617 = vpop.f32.mrf.mxu0
  %v3618 = vadd.f32 %v3278, %v3617
  %v3619 = vpop.f32.mrf.mxu0
  %3620 = vmatprep.mubr.bf16.mxu0 %v3489
  %3621 = vmatmul.mubr.bf16.gmra.mxu0 %v3488
  %v3622 = vpop.f32.mrf.mxu0
  %v3623 = vadd.f32 %v3283, %v3622
  %v3624 = vpop.f32.mrf.mxu0
  %v3625 = vpop.f32.mrf.mxu0
  %v3626 = vadd.f32 %v3288, %v3625
  %v3627 = vpop.f32.mrf.mxu0
  %3628 = vmatprep.mubr.bf16.mxu0 %v3491
  %3629 = vmatmul.mubr.bf16.gmra.mxu0 %v3490
  %v3630 = vpop.f32.mrf.mxu0
  %v3631 = vadd.f32 %v3293, %v3630
  %v3632 = vpop.f32.mrf.mxu0
  %v3633 = vpop.f32.mrf.mxu0
  %v3634 = vadd.f32 %v3298, %v3633
  %v3635 = vpop.f32.mrf.mxu0
  %3636 = vmatprep.mubr.bf16.mxu0 %v3493
  %3637 = vmatmul.mubr.bf16.gmra.mxu0 %v3492
  %v3638 = vpop.f32.mrf.mxu0
  %v3639 = vadd.f32 %v3303, %v3638
  %v3640 = vpop.f32.mrf.mxu0
  %v3641 = vpop.f32.mrf.mxu0
  %v3642 = vadd.f32 %v3308, %v3641
  %v3643 = vpop.f32.mrf.mxu0
  %3644 = vmatprep.mubr.bf16.mxu0 %v3495
  %3645 = vmatmul.mubr.bf16.gmra.mxu0 %v3494
  %v3646 = vpop.f32.mrf.mxu0
  %v3647 = vadd.f32 %v3313, %v3646
  %v3648 = vpop.f32.mrf.mxu0
  %v3649 = vpop.f32.mrf.mxu0
  %v3650 = vadd.f32 %v3318, %v3649
  %v3651 = vpop.f32.mrf.mxu0
  %3652 = vmatprep.mubr.bf16.mxu0 %v3497
  %3653 = vmatmul.mubr.bf16.gmra.mxu0 %v3496
  %v3654 = vpop.f32.mrf.mxu0
  %v3655 = vadd.f32 %v3323, %v3654
  %v3656 = vpop.f32.mrf.mxu0
  %v3657 = vpop.f32.mrf.mxu0
  %v3658 = vadd.f32 %v3328, %v3657
  %v3659 = vpop.f32.mrf.mxu0
  %3660 = vmatprep.mubr.bf16.mxu0 %v3499
  %3661 = vmatmul.mubr.bf16.gmra.mxu0 %v3498
  %v3662 = vpop.f32.mrf.mxu0
  %v3663 = vadd.f32 %v3333, %v3662
  %v3664 = vpop.f32.mrf.mxu0
  %v3665 = vpop.f32.mrf.mxu0
  %v3666 = vadd.f32 %v3338, %v3665
  %v3667 = vpop.f32.mrf.mxu0
  %3668 = vmatprep.mubr.bf16.mxu0 %v3501
  %3669 = vmatmul.mubr.bf16.gmra.mxu0 %v3500
  %v3670 = vpop.f32.mrf.mxu0
  %v3671 = vadd.f32 %v3343, %v3670
  %v3672 = vpop.f32.mrf.mxu0
  %v3673 = vpop.f32.mrf.mxu0
  %v3674 = vadd.f32 %v3348, %v3673
  %v3675 = vpop.f32.mrf.mxu0
  %3676 = vmatprep.mubr.bf16.mxu0 %v3503
  %3677 = vmatmul.mubr.bf16.gmra.mxu0 %v3502
  %v3678 = vpop.f32.mrf.mxu0
  %v3679 = vadd.f32 %v3353, %v3678
  %v3680 = vpop.f32.mrf.mxu0
  %v3681 = vpop.f32.mrf.mxu0
  %v3682 = vadd.f32 %v3358, %v3681
  %v3683 = vpop.f32.mrf.mxu0
  %3684 = vmatprep.mubr.bf16.mxu0 %v3505
  %3685 = vmatmul.mubr.bf16.gmra.mxu0 %v3504
  %v3686 = vpop.f32.mrf.mxu0
  %v3687 = vadd.f32 %v3363, %v3686
  %v3688 = vpop.f32.mrf.mxu0
  %v3689 = vpop.f32.mrf.mxu0
  %v3690 = vadd.f32 %v3368, %v3689
  %v3691 = vpop.f32.mrf.mxu0
  %3692 = vmatprep.mubr.bf16.mxu0 %v3507
  %3693 = vmatmul.mubr.bf16.gmra.mxu0 %v3506
  %v3694 = vpop.f32.mrf.mxu0
  %v3695 = vadd.f32 %v3373, %v3694
  %v3696 = vpop.f32.mrf.mxu0
  %v3697 = vpop.f32.mrf.mxu0
  %v3698 = vadd.f32 %v3378, %v3697
  %v3699 = vpop.f32.mrf.mxu0
  %3700 = vdwg.mxu0
  %vm3701 = vcmp.gt.f32.partialorder %v3575, 0.0
  %vm3702 = vcmp.gt.f32.partialorder %v3578, 0.0
  %vm3703 = vcmp.gt.f32.partialorder %v3583, 0.0
  %vm3704 = vcmp.gt.f32.partialorder %v3586, 0.0
  %vm3705 = vcmp.gt.f32.partialorder %v3591, 0.0
  %vm3706 = vcmp.gt.f32.partialorder %v3594, 0.0
  %vm3707 = vcmp.gt.f32.partialorder %v3599, 0.0
  %vm3708 = vcmp.gt.f32.partialorder %v3602, 0.0
  %vm3709 = vcmp.gt.f32.partialorder %v3607, 0.0
  %vm3710 = vcmp.gt.f32.partialorder %v3610, 0.0
  %vm3711 = vcmp.gt.f32.partialorder %v3615, 0.0
  %vm3712 = vcmp.gt.f32.partialorder %v3618, 0.0
  %vm3713 = vcmp.gt.f32.partialorder %v3623, 0.0
  %vm3714 = vcmp.gt.f32.partialorder %v3626, 0.0
  %vm3715 = vcmp.gt.f32.partialorder %v3631, 0.0
  %vm3716 = vcmp.gt.f32.partialorder %v3634, 0.0
  %vm3717 = vcmp.gt.f32.partialorder %v3639, 0.0
  %vm3718 = vcmp.gt.f32.partialorder %v3642, 0.0
  %vm3719 = vcmp.gt.f32.partialorder %v3647, 0.0
  %vm3720 = vcmp.gt.f32.partialorder %v3650, 0.0
  %vm3721 = vcmp.gt.f32.partialorder %v3655, 0.0
  %vm3722 = vcmp.gt.f32.partialorder %v3658, 0.0
  %vm3723 = vcmp.gt.f32.partialorder %v3663, 0.0
  %vm3724 = vcmp.gt.f32.partialorder %v3666, 0.0
  %vm3725 = vcmp.gt.f32.partialorder %v3671, 0.0
  %vm3726 = vcmp.gt.f32.partialorder %v3674, 0.0
  %vm3727 = vcmp.gt.f32.partialorder %v3679, 0.0
  %vm3728 = vcmp.gt.f32.partialorder %v3682, 0.0
  %vm3729 = vcmp.gt.f32.partialorder %v3687, 0.0
  %vm3730 = vcmp.gt.f32.partialorder %v3690, 0.0
  %vm3731 = vcmp.gt.f32.partialorder %v3695, 0.0
  %vm3732 = vcmp.gt.f32.partialorder %v3698, 0.0
  %v3733 = vmin.f32 %v3575, 0.0
  %v3734 = vmin.f32 %v3578, 0.0
  %v3735 = vmin.f32 %v3583, 0.0
  %v3736 = vmin.f32 %v3586, 0.0
  %v3737 = vmin.f32 %v3591, 0.0
  %v3738 = vmin.f32 %v3594, 0.0
  %v3739 = vmin.f32 %v3599, 0.0
  %v3740 = vmin.f32 %v3602, 0.0
  %v3741 = vmin.f32 %v3607, 0.0
  %v3742 = vmin.f32 %v3610, 0.0
  %v3743 = vmin.f32 %v3615, 0.0
  %v3744 = vmin.f32 %v3618, 0.0
  %v3745 = vmin.f32 %v3623, 0.0
  %v3746 = vmin.f32 %v3626, 0.0
  %v3747 = vmin.f32 %v3631, 0.0
  %v3748 = vmin.f32 %v3634, 0.0
  %v3749 = vmin.f32 %v3639, 0.0
  %v3750 = vmin.f32 %v3642, 0.0
  %v3751 = vmin.f32 %v3647, 0.0
  %v3752 = vmin.f32 %v3650, 0.0
  %v3753 = vmin.f32 %v3655, 0.0
  %v3754 = vmin.f32 %v3658, 0.0
  %v3755 = vmin.f32 %v3663, 0.0
  %v3756 = vmin.f32 %v3666, 0.0
  %v3757 = vmin.f32 %v3671, 0.0
  %v3758 = vmin.f32 %v3674, 0.0
  %v3759 = vmin.f32 %v3679, 0.0
  %v3760 = vmin.f32 %v3682, 0.0
  %v3761 = vmin.f32 %v3687, 0.0
  %v3762 = vmin.f32 %v3690, 0.0
  %v3763 = vmin.f32 %v3695, 0.0
  %v3764 = vmin.f32 %v3698, 0.0
  %v3765 = vmul.f32 %v3733, 1.442695
  %v3766 = vpow.pop %v3765
  %v3767 = vmul.f32 %v3734, 1.442695
  %v3768 = vpow.pop %v3767
  %v3769 = vmul.f32 %v3735, 1.442695
  %v3770 = vpow.pop %v3769
  %v3771 = vmul.f32 %v3736, 1.442695
  %v3772 = vpow.pop %v3771
  %v3773 = vmul.f32 %v3737, 1.442695
  %v3774 = vpow.pop %v3773
  %v3775 = vmul.f32 %v3738, 1.442695
  %v3776 = vpow.pop %v3775
  %v3777 = vmul.f32 %v3739, 1.442695
  %v3778 = vpow.pop %v3777
  %v3779 = vmul.f32 %v3740, 1.442695
  %v3780 = vpow.pop %v3779
  %v3781 = vmul.f32 %v3741, 1.442695
  %v3782 = vpow.pop %v3781
  %v3783 = vmul.f32 %v3742, 1.442695
  %v3784 = vpow.pop %v3783
  %v3785 = vmul.f32 %v3743, 1.442695
  %v3786 = vpow.pop %v3785
  %v3787 = vmul.f32 %v3744, 1.442695
  %v3788 = vpow.pop %v3787
  %v3789 = vmul.f32 %v3745, 1.442695
  %v3790 = vpow.pop %v3789
  %v3791 = vmul.f32 %v3746, 1.442695
  %v3792 = vpow.pop %v3791
  %v3793 = vmul.f32 %v3747, 1.442695
  %v3794 = vpow.pop %v3793
  %v3795 = vmul.f32 %v3748, 1.442695
  %v3796 = vpow.pop %v3795
  %v3797 = vmul.f32 %v3749, 1.442695
  %v3798 = vpow.pop %v3797
  %v3799 = vmul.f32 %v3750, 1.442695
  %v3800 = vpow.pop %v3799
  %v3801 = vmul.f32 %v3751, 1.442695
  %v3802 = vpow.pop %v3801
  %v3803 = vmul.f32 %v3752, 1.442695
  %v3804 = vpow.pop %v3803
  %v3805 = vmul.f32 %v3753, 1.442695
  %v3806 = vpow.pop %v3805
  %v3807 = vmul.f32 %v3754, 1.442695
  %v3808 = vpow.pop %v3807
  %v3809 = vmul.f32 %v3755, 1.442695
  %v3810 = vpow.pop %v3809
  %v3811 = vmul.f32 %v3756, 1.442695
  %v3812 = vpow.pop %v3811
  %v3813 = vmul.f32 %v3757, 1.442695
  %v3814 = vpow.pop %v3813
  %v3815 = vmul.f32 %v3758, 1.442695
  %v3816 = vpow.pop %v3815
  %v3817 = vmul.f32 %v3759, 1.442695
  %v3818 = vpow.pop %v3817
  %v3819 = vmul.f32 %v3760, 1.442695
  %v3820 = vpow.pop %v3819
  %v3821 = vmul.f32 %v3761, 1.442695
  %v3822 = vpow.pop %v3821
  %v3823 = vmul.f32 %v3762, 1.442695
  %v3824 = vpow.pop %v3823
  %v3825 = vmul.f32 %v3763, 1.442695
  %v3826 = vpow.pop %v3825
  %v3827 = vmul.f32 %v3764, 1.442695
  %v3828 = vpow.pop %v3827
  %v3829 = vsub.f32 %v3766, 1.0
  %v3830 = vsub.f32 %v3768, 1.0
  %v3831 = vsub.f32 %v3770, 1.0
  %v3832 = vsub.f32 %v3772, 1.0
  %v3833 = vsub.f32 %v3774, 1.0
  %v3834 = vsub.f32 %v3776, 1.0
  %v3835 = vsub.f32 %v3778, 1.0
  %v3836 = vsub.f32 %v3780, 1.0
  %v3837 = vsub.f32 %v3782, 1.0
  %v3838 = vsub.f32 %v3784, 1.0
  %v3839 = vsub.f32 %v3786, 1.0
  %v3840 = vsub.f32 %v3788, 1.0
  %v3841 = vsub.f32 %v3790, 1.0
  %v3842 = vsub.f32 %v3792, 1.0
  %v3843 = vsub.f32 %v3794, 1.0
  %v3844 = vsub.f32 %v3796, 1.0
  %v3845 = vsub.f32 %v3798, 1.0
  %v3846 = vsub.f32 %v3800, 1.0
  %v3847 = vsub.f32 %v3802, 1.0
  %v3848 = vsub.f32 %v3804, 1.0
  %v3849 = vsub.f32 %v3806, 1.0
  %v3850 = vsub.f32 %v3808, 1.0
  %v3851 = vsub.f32 %v3810, 1.0
  %v3852 = vsub.f32 %v3812, 1.0
  %v3853 = vsub.f32 %v3814, 1.0
  %v3854 = vsub.f32 %v3816, 1.0
  %v3855 = vsub.f32 %v3818, 1.0
  %v3856 = vsub.f32 %v3820, 1.0
  %v3857 = vsub.f32 %v3822, 1.0
  %v3858 = vsub.f32 %v3824, 1.0
  %v3859 = vsub.f32 %v3826, 1.0
  %v3860 = vsub.f32 %v3828, 1.0
  %v3861 = vsel %vm3701, %v3575, %v3829
  %v3862 = vsel %vm3702, %v3578, %v3830
  %v3863 = vsel %vm3703, %v3583, %v3831
  %v3864 = vsel %vm3704, %v3586, %v3832
  %v3865 = vsel %vm3705, %v3591, %v3833
  %v3866 = vsel %vm3706, %v3594, %v3834
  %v3867 = vsel %vm3707, %v3599, %v3835
  %v3868 = vsel %vm3708, %v3602, %v3836
  %v3869 = vsel %vm3709, %v3607, %v3837
  %v3870 = vsel %vm3710, %v3610, %v3838
  %v3871 = vsel %vm3711, %v3615, %v3839
  %v3872 = vsel %vm3712, %v3618, %v3840
  %v3873 = vsel %vm3713, %v3623, %v3841
  %v3874 = vsel %vm3714, %v3626, %v3842
  %v3875 = vsel %vm3715, %v3631, %v3843
  %v3876 = vsel %vm3716, %v3634, %v3844
  %v3877 = vsel %vm3717, %v3639, %v3845
  %v3878 = vsel %vm3718, %v3642, %v3846
  %v3879 = vsel %vm3719, %v3647, %v3847
  %v3880 = vsel %vm3720, %v3650, %v3848
  %v3881 = vsel %vm3721, %v3655, %v3849
  %v3882 = vsel %vm3722, %v3658, %v3850
  %v3883 = vsel %vm3723, %v3663, %v3851
  %v3884 = vsel %vm3724, %v3666, %v3852
  %v3885 = vsel %vm3725, %v3671, %v3853
  %v3886 = vsel %vm3726, %v3674, %v3854
  %v3887 = vsel %vm3727, %v3679, %v3855
  %v3888 = vsel %vm3728, %v3682, %v3856
  %v3889 = vsel %vm3729, %v3687, %v3857
  %v3890 = vsel %vm3730, %v3690, %v3858
  %v3891 = vsel %vm3731, %v3695, %v3859
  %v3892 = vsel %vm3732, %v3698, %v3860
  %v3893 = vld [vmem:[%s5] sm:$0xff]
  %v3894 = vpack.c.bf16 %v3862, %v3861
  %v3895 = vpack.c.bf16 %v3864, %v3863
  %v3896 = vpack.c.bf16 %v3866, %v3865
  %v3897 = vpack.c.bf16 %v3868, %v3867
  %v3898 = vpack.c.bf16 %v3870, %v3869
  %v3899 = vpack.c.bf16 %v3872, %v3871
  %v3900 = vpack.c.bf16 %v3874, %v3873
  %v3901 = vpack.c.bf16 %v3876, %v3875
  %v3902 = vpack.c.bf16 %v3878, %v3877
  %v3903 = vpack.c.bf16 %v3880, %v3879
  %v3904 = vpack.c.bf16 %v3882, %v3881
  %v3905 = vpack.c.bf16 %v3884, %v3883
  %v3906 = vpack.c.bf16 %v3886, %v3885
  %v3907 = vpack.c.bf16 %v3888, %v3887
  %v3908 = vpack.c.bf16 %v3890, %v3889
  %v3909 = vpack.c.bf16 %v3892, %v3891
  %v3910 = vld [vmem:[%s6] sm:$0xff]
  %3912 = vset.pattern.permute.xlu0 0
  %3913 = vperm.xlu0 %3912, %v3910
  %v3914 = vpop.permute.xlu0 %3913
  %v3917 = vunpack.c.l.b16 %v3893
  %v3918 = vunpack.c.h.b16 %v3893
  %v3919 = vpack.c.b16 %v3917, %v3917
  %v3920 = vpack.c.b16 %v3918, %v3918
  %3923 = vmatprep.subr.bf16.mxu0 0
  %3924 = vmatpush1.bf16.msra.mxu0 %v3901
  %3925 = vmatprep.subr.bf16.mxu0 0
  %3926 = vmatpush1.bf16.msra.mxu0 %v3900
  %3927 = vmatprep.subr.bf16.mxu0 0
  %3928 = vmatpush1.bf16.msra.mxu0 %v3899
  %3929 = vmatprep.subr.bf16.mxu0 0
  %3930 = vmatpush1.bf16.msra.mxu0 %v3898
  %3931 = vmatprep.subr.bf16.mxu0 0
  %3932 = vmatpush1.bf16.msra.mxu0 %v3897
  %3933 = vmatprep.subr.bf16.mxu0 0
  %3934 = vmatpush1.bf16.msra.mxu0 %v3896
  %3935 = vmatprep.subr.bf16.mxu0 0
  %3936 = vmatpush1.bf16.msra.mxu0 %v3895
  %3937 = vmatprep.subr.bf16.mxu0 0
  %3938 = vmatpush1.bf16.msra.mxu0 %v3894
  %3939 = vmatprep.subr.bf16.mxu0 0
  %3940 = vmatpush2.bf16.msra.mxu0 %v3909
  %3941 = vmatprep.subr.bf16.mxu0 0
  %3942 = vmatpush2.bf16.msra.mxu0 %v3908
  %3943 = vmatprep.subr.bf16.mxu0 0
  %3944 = vmatpush2.bf16.msra.mxu0 %v3907
  %3945 = vmatprep.subr.bf16.mxu0 0
  %3946 = vmatpush2.bf16.msra.mxu0 %v3906
  %3947 = vmatprep.subr.bf16.mxu0 0
  %3948 = vmatpush2.bf16.msra.mxu0 %v3905
  %3949 = vmatprep.subr.bf16.mxu0 0
  %3950 = vmatpush2.bf16.msra.mxu0 %v3904
  %3951 = vmatprep.subr.bf16.mxu0 0
  %3952 = vmatpush2.bf16.msra.mxu0 %v3903
  %3953 = vmatprep.subr.bf16.mxu0 0
  %3954 = vmatpush2.bf16.msra.mxu0 %v3902
  %3955 = vmatprep.mubr.bf16.mxu0 %v3920
  %3956 = vmatmul.mubr.bf16.gmra.mxu0 %v3919
  %v3957 = vpop.f32.mrf.mxu0
  %v3958 = vadd.f32 %v3914, %v3957
  %v3959 = vpop.f32.mrf.mxu0
  %v3960 = vpop.f32.mrf.mxu0
  %v3961 = vpop.f32.mrf.mxu0
  %3962 = vdwg.mxu0
  %v3963 = vlaneseq
  %v3964 = vshrl.u32 %v3963, 7
  %vm3965 = vcmp.lt.s32.totalorder %v3964, 3
  %v3966 = vsel %vm3965, 0.0, -1e+30
  %v3967 = vadd.f32 %v3958, %v3966
  %vm3968 = vcmask 64512
  %v3969 = vsel %vm3968, %v3967, -inf
  %v3970 = vrot.slane %v3969, 4
  %v3971 = vmax.f32 %v3969, %v3970
  %v3972 = vrot.slane %v3971, 2
  %v3973 = vmax.f32 %v3971, %v3972
  %v3974 = vrot.slane %v3973, 1
  %v3975 = vmax.f32 %v3973, %v3974
  %v3976 = vsub.f32 %v3967, %v3975
  %v3977 = vmul.f32 %v3976, 1.442695
  %v3978 = vpow.pop %v3977
  %v3979 = vsel %vm3968, %v3978, 0.0
  %v3980 = vrot.slane %v3979, 4
  %v3981 = vadd.f32 %v3979, %v3980
  %v3982 = vrot.slane %v3981, 2
  %v3983 = vadd.f32 %v3981, %v3982
  %v3984 = vrot.slane %v3983, 1
  %v3985 = vadd.f32 %v3983, %v3984
  %v3986 = vrcp.pop %v3985
  %v3987 = vmul.f32 %v3978, %v3986
  %3988 = vst.msk [vmem:[%s9] sm:$0xff] %vm3968, %v3987
  %v3989 = vadd.f32 %v3987, %v3966
  %v3990 = vsel %vm3968, %v3989, -inf
  %v3991 = vrot.slane %v3990, 4
  %v3992 = vmax.f32 %v3990, %v3991
  %v3993 = vrot.slane %v3992, 2
  %v3994 = vmax.f32 %v3992, %v3993
  %v3995 = vrot.slane %v3994, 1
  %v3996 = vmax.f32 %v3994, %v3995
  %v3997 = vsub.f32 %v3989, %v3996
  %v3998 = vmul.f32 %v3997, 1.442695
  %v3999 = vpow.pop %v3998
  %v4000 = vsel %vm3968, %v3999, 0.0
  %v4001 = vrot.slane %v4000, 4
  %v4002 = vadd.f32 %v4000, %v4001
  %v4003 = vrot.slane %v4002, 2
  %v4004 = vadd.f32 %v4002, %v4003
  %v4005 = vrot.slane %v4004, 1
  %v4006 = vadd.f32 %v4004, %v4005
  %v4007 = vlog2.pop %v4006
  %v4008 = vmul.f32 %v4007, 0.6931472
  %v4009 = vadd.f32 %v4008, %v3996
  %v4010 = vsub.f32 %v3989, %v4009
  %v4011 = vld [vmem:[%s8] sm:$0x1]
  %v4012 = vlaneseq
  %v4013 = vshrl.u32 %v4012, 7
  %v4014 = vsub.s32 0, %v4013
  %v4015 = vrot.slane %v4011, %v4014
  %vm4016 = vcmp.eq.s32.totalorder %v3964, %v4015
  %v4017 = vsel %vm4016, 1, 0
  %v4018 = vcvt.s32.f32 %v4017
  %v4019 = vld [vmem:[%s7] sm:$0xff]
  %4021 = vset.pattern.permute.xlu0 0
  %4022 = vperm.xlu0 %4021, %v4019
  %v4023 = vpop.permute.xlu0 %4022
  %v4025 = vmul.f32 %v4018, %v4023
  %v4026 = vsel %vm3968, %v4025, 0.0
  %v4027 = vrot.slane %v4026, 4
  %v4028 = vadd.f32 %v4026, %v4027
  %v4029 = vrot.slane %v4028, 2
  %v4030 = vadd.f32 %v4028, %v4029
  %v4031 = vrot.slane %v4030, 1
  %v4032 = vadd.f32 %v4030, %v4031
  %v4033 = vmul.f32 %v4018, %v4010
  %v4034 = vsel %vm3968, %v4033, 0.0
  %v4035 = vrot.slane %v4034, 4
  %v4036 = vadd.f32 %v4034, %v4035
  %v4037 = vrot.slane %v4036, 2
  %v4038 = vadd.f32 %v4036, %v4037
  %v4039 = vrot.slane %v4038, 1
  %v4040 = vadd.f32 %v4038, %v4039
  %v4041 = vsub.f32 0.0, %v4040
  %v4042 = vsel %vm3965, %v4010, 0.0
  %v4043 = vsel %vm3968, %v4042, 0.0
  %v4044 = vrot.slane %v4043, 4
  %v4045 = vadd.f32 %v4043, %v4044
  %v4046 = vrot.slane %v4045, 2
  %v4047 = vadd.f32 %v4045, %v4046
  %v4048 = vrot.slane %v4047, 1
  %v4049 = vadd.f32 %v4047, %v4048
  %v4050 = vsub.f32 0.0, %v4049
  %v4051 = vrcp.pop 3.0
  %v4052 = vmul.f32 %v4050, %v4051
  %v4053 = vmul.f32 %v4052, 0.0
  %v4054 = vadd.f32 %v4041, %v4053
  %v4055 = vmul.f32 %v4032, %v4054
  %vm4056 = vcmask 57344
  %v4057 = vsel %vm4056, %v4055, 0.0
  %4058 = vadd.xlane.f32.xlu0 %v4057
  %v4059 = vpop.xlane.xlu0 %4058
  %v4060 = vrot.slane %v4059, 4
  %v4061 = vadd.f32 %v4059, %v4060
  %v4062 = vrot.slane %v4061, 2
  %v4063 = vadd.f32 %v4061, %v4062
  %v4064 = vrot.slane %v4063, 1
  %v4065 = vadd.f32 %v4063, %v4064
  %s4066 = vtos %v4065
  %v4067 = vsel %vm4056, %v4032, 0.0
  %4068 = vadd.xlane.f32.xlu0 %v4067
  %v4069 = vpop.xlane.xlu0 %4068
  %v4070 = vrot.slane %v4069, 4
  %v4071 = vadd.f32 %v4069, %v4070
  %v4072 = vrot.slane %v4071, 2
  %v4073 = vadd.f32 %v4071, %v4072
  %v4074 = vrot.slane %v4073, 1
  %v4075 = vadd.f32 %v4073, %v4074
  %s4076 = vtos %v4075
  %v4077 = vlaneseq
  %v4078 = vand.u32 %v4077, 127
  %vm4079 = vcmp.eq.s32.totalorder %v3964, 0
  %vm4080 = vcmp.eq.s32.totalorder %v4078, 0
  %vm4081 = vmand %vm4079, %vm4080
  %v4082 = vstv %s4066
  %v4083 = vsel %vm4081, %v4082, 0.0
  %vm4084 = vcmp.eq.s32.totalorder %v4078, 1
  %vm4085 = vmand %vm4079, %vm4084
  %v4086 = vstv %s4076
  %v4087 = vsel %vm4085, %v4086, 0.0
  %v4088 = vadd.f32 %v4083, %v4087
  %4089 = vst [vmem:[%s10] sm:$0xff] %v4088
  // Predicated region
  $region38: #{_lambda_.1} parent=0 // pred_check
    _
  $region39: #{_lambda_.1} parent=0 // pred_check_branch
    %4091 = sbr.rel (0) target = $region41
  $region40: #{_lambda_.1} parent=0 // pred_region
    _
  $region41: #{_lambda_.1} parent=0 // pred_fallthru
    _
  // Predicated region
  $region42: #{_lambda_.1} parent=0 // pred_check
    _
  $region43: #{_lambda_.1} parent=0 // pred_check_branch
    %4093 = sbr.rel (0) target = $region45
  $region44: #{_lambda_.1} parent=0 // pred_region
    _
  $region45: #{_lambda_.1} parent=0 // pred_fallthru
    _
  // Predicated region
  $region46: #{_lambda_.1} parent=0 // pred_check
    _
  $region47: #{_lambda_.1} parent=0 // pred_check_branch
    %4095 = sbr.rel (0) target = $region49
  $region48: #{_lambda_.1} parent=0 // pred_region
    _
  $region49: #{_lambda_.1} parent=0 // pred_fallthru
    _
  // Predicated region
  $region50: #{_lambda_.1} parent=0 // pred_check
    _
  $region51: #{_lambda_.1} parent=0 // pred_check_branch
    %4097 = sbr.rel (0) target = $region53
  $region52: #{_lambda_.1} parent=0 // pred_region
    _
  $region53: #{_lambda_.1} parent=0 // pred_fallthru
    _

</llo_original>
